<compile_context>
chip_gen: v7x
topology: tpu7x:2x2x1
jax: 0.10.0
libtpu: 0.0.40
codegen_flags: <defaults>
</compile_context>

<pallas_src>
import jax
import jax.numpy as jnp
from jax.experimental import pallas as pl
from jax.experimental.pallas import tpu as pltpu


def stacked_lstm_kernel(x_ref,                         # (T, Bb, D) time-major block
                        wih0_ref, whh0_ref, b0_ref,    # (D,4H), (H,4H), (1,4H)
                        wih1_ref, whh1_ref, b1_ref,    # (H,4H), (H,4H), (1,4H)
                        h1_ref):                       # (Bb, H) last-step layer-1 hidden
    T, Bb, D = x_ref.shape
    H = whh0_ref.shape[0]

    whh0 = whh0_ref[...]
    wih1 = wih1_ref[...]
    whh1 = whh1_ref[...]

    # ---- hoisted: all T layer-0 input projections in ONE MXU matmul, b0 folded in.
    # row t*Bb + b of x2d is x[t, b].
    x2d = x_ref[...].reshape(T * Bb, D)
    gih0 = (jnp.dot(x2d, wih0_ref[...], preferred_element_type=jnp.float32)
            + b0_ref[...])                             # (T*Bb, 4H)

    # ---- hoisted: bias broadcast for layer 1 (emitted once, not per timestep)
    b1b = jnp.broadcast_to(b1_ref[...], (Bb, 4 * H))

    def gates_to_hc(gates, c):
        # Merged transcendentals: ONE sigmoid + ONE tanh over the full (Bb, 4H)
        # tile (3 EUP pushes per cell incl. tanh(c) instead of 5); PyTorch gate
        # order [i, f, g, o] sliced afterwards.  With H = 128 these slices are
        # lane-tile-aligned static views.
        s = jax.nn.sigmoid(gates)
        tg = jnp.tanh(gates)
        i = s[:, 0 * H:1 * H]
        f = s[:, 1 * H:2 * H]
        o = s[:, 3 * H:4 * H]
        g = tg[:, 2 * H:3 * H]
        c_new = f * c + i * g
        h_new = o * jnp.tanh(c_new)
        return h_new, c_new

    zeros = jnp.zeros((Bb, H), jnp.float32)
    h0, c0, h1, c1 = zeros, zeros, zeros, zeros

    # ---- fully unrolled recurrence (T small & static).
    for t in range(T):
        # Layer-1 recurrent matmul depends only on h1(t-1): issuing it here lets
        # the scheduler overlap it with layer-0's gate math for this step.
        r1 = jnp.dot(h1, whh1, preferred_element_type=jnp.float32) + b1b

        # Layer 0: only the recurrent matmul is on the serial chain.
        g0 = gih0[t * Bb:(t + 1) * Bb, :] + jnp.dot(
            h0, whh0, preferred_element_type=jnp.float32)
        h0, c0 = gates_to_hc(g0, c0)

        # Layer 1: un-fused input projection of the fresh h0.
        g1 = r1 + jnp.dot(h0, wih1, preferred_element_type=jnp.float32)
        h1, c1 = gates_to_hc(g1, c1)

    # ---- lane-dense output store: (Bb, H) unmasked vst's (no last-dim-1 column).
    h1_ref[...] = h1.astype(h1_ref.dtype)


def stacked_lstm_forward(x, params):
    """x: (B, T, D) batch-first float32.  Returns (B, 1)."""
    B, T, D = x.shape
    H = params["whh0"].shape[0]

    # Fill the MXU M dimension: a single batch block of up to 128 rows; only
    # batches larger than that produce a multi-block grid (marked "parallel"
    # so v7x's two TensorCores each take a shard).
    B_BLK = min(128, ((B + 7) // 8) * 8)
    n_blk = pl.cdiv(B, B_BLK)
    B_pad = n_blk * B_BLK
    if B_pad != B:
        # Zero-padded batch rows are self-consistent for an LSTM (rows never
        # mix) and are sliced off below.
        x = jnp.pad(x, ((0, B_pad - B), (0, 0), (0, 0)))

    x_tm = jnp.transpose(x, (1, 0, 2))          # (T, B_pad, D) time-major

    def full(shape):
        # Grid-invariant operand (weights / biases).  At realistic H on v7x,
        # add pipeline_mode=pl.Buffered(1) here to single-buffer these.
        return pl.BlockSpec(shape, lambda i: (0,) * len(shape))

    h1_last = pl.pallas_call(
        stacked_lstm_kernel,
        out_shape=jax.ShapeDtypeStruct((B_pad, H), jnp.float32),
        grid_spec=pltpu.PrefetchScalarGridSpec(
            num_scalar_prefetch=0,
            grid=(n_blk,),
            in_specs=[
                pl.BlockSpec((T, B_BLK, D), lambda i: (0, i, 0)),
                full((D, 4 * H)),
                full((H, 4 * H)),
                full((1, 4 * H)),
                full((H, 4 * H)),
                full((H, 4 * H)),
                full((1, 4 * H)),
            ],
            out_specs=pl.BlockSpec((B_BLK, H), lambda i: (i, 0)),
        ),
        compiler_params=pltpu.CompilerParams(
            dimension_semantics=("parallel",),
            vmem_limit_bytes=64 * 1024 * 1024),
    )(x_tm,
      params["wih0"], params["whh0"], params["b0"],
      params["wih1"], params["whh1"], params["b1"])

    # Tiny Linear(H, 1) epilogue in the wrapper: keeps the kernel's output
    # store lane-dense instead of a masked last-dim-1 column (perf review).
    y = h1_last[:B] @ params["fcw"].T + params["fcb"]
    return y


def init_params(key, input_dim, hidden_dim):
    """Deterministic parameter init (PyTorch-style U(-1/sqrt(H), 1/sqrt(H)))."""
    H = hidden_dim
    bound = 1.0 / jnp.sqrt(jnp.float32(H))
    ks = jax.random.split(key, 12)

    def u(k, shape):
        return jax.random.uniform(k, shape, jnp.float32, -bound, bound)

    # Stored pre-transposed: PyTorch weight_ih_l0 is (4H, D) -> here (D, 4H).
    params = {
        "wih0": u(ks[0], (input_dim, 4 * H)),
        "whh0": u(ks[1], (H, 4 * H)),
        # combined bias = b_ih + b_hh, kept 2D (1, 4H)
        "b0": u(ks[2], (1, 4 * H)) + u(ks[3], (1, 4 * H)),
        "wih1": u(ks[4], (H, 4 * H)),
        "whh1": u(ks[5], (H, 4 * H)),
        "b1": u(ks[6], (1, 4 * H)) + u(ks[7], (1, 4 * H)),
        "fcw": u(ks[8], (1, H)),      # PyTorch fc.weight is (1, H); kept (1, H)
        "fcb": u(ks[9], (1, 1)),
    }
    return params


def reference_forward(x, params):
    """Pure-JAX reference (same math) for correctness check."""
    H = params["whh0"].shape[0]

    def cell(x_t, h, c, wih, whh, b):
        gates = x_t @ wih + h @ whh + b
        i = jax.nn.sigmoid(gates[:, 0 * H:1 * H])
        f = jax.nn.sigmoid(gates[:, 1 * H:2 * H])
        g = jnp.tanh(gates[:, 2 * H:3 * H])
        o = jax.nn.sigmoid(gates[:, 3 * H:4 * H])
        c = f * c + i * g
        return o * jnp.tanh(c), c

    B, T, _ = x.shape
    h0 = c0 = h1 = c1 = jnp.zeros((B, H), jnp.float32)
    for t in range(T):
        h0, c0 = cell(x[:, t, :], h0, c0, params["wih0"], params["whh0"], params["b0"])
        h1, c1 = cell(h0, h1, c1, params["wih1"], params["whh1"], params["b1"])
    return h1 @ params["fcw"].T + params["fcb"]


if __name__ == "__main__":
    # batch, seq, input_dim, hidden_dim (module default hidden_dim=128, 2 layers)
    B, T, D, H = 2, 8, 16, 128

    key = jax.random.PRNGKey(0)
    k_x, k_p = jax.random.split(key)
    x = jax.random.normal(k_x, (B, T, D), jnp.float32)
    params = init_params(k_p, D, H)

    y = stacked_lstm_forward(x, params)
    y = jax.block_until_ready(y)

    y_ref = reference_forward(x, params)
    assert y.shape == (B, 1)
    assert jnp.allclose(y, y_ref, rtol=1e-4, atol=1e-4), (y, y_ref)

    print("KERNEL_OK")
</pallas_src>

<mosaic_0001>
module attributes {stable_mosaic.version = 11 : i64} {
  func.func @stacked_lstm_kernel(%arg0: i32, %arg1: memref<8x8x16xf32, #tpu.memory_space<vmem>>, %arg2: memref<16x512xf32, #tpu.memory_space<vmem>>, %arg3: memref<128x512xf32, #tpu.memory_space<vmem>>, %arg4: memref<1x512xf32, #tpu.memory_space<vmem>>, %arg5: memref<128x512xf32, #tpu.memory_space<vmem>>, %arg6: memref<128x512xf32, #tpu.memory_space<vmem>>, %arg7: memref<1x512xf32, #tpu.memory_space<vmem>>, %arg8: memref<8x128xf32, #tpu.memory_space<vmem>>) attributes {dimension_semantics = [#tpu.dimension_semantics<parallel>], iteration_bounds = array<i64: 1>, scalar_prefetch = 0 : i64, scratch_operands = 0 : i64, tpu.core_type = #tpu.core_type<tc>, window_params = [{transform_indices = @transform_0, window_bounds = array<i64: 8, 8, 16>}, {pipeline_mode = #tpu.pipeline_mode<synchronous>, transform_indices = @transform_1, window_bounds = array<i64: 16, 512>}, {pipeline_mode = #tpu.pipeline_mode<synchronous>, transform_indices = @transform_2, window_bounds = array<i64: 128, 512>}, {pipeline_mode = #tpu.pipeline_mode<synchronous>, transform_indices = @transform_3, window_bounds = array<i64: 1, 512>}, {pipeline_mode = #tpu.pipeline_mode<synchronous>, transform_indices = @transform_4, window_bounds = array<i64: 128, 512>}, {pipeline_mode = #tpu.pipeline_mode<synchronous>, transform_indices = @transform_5, window_bounds = array<i64: 128, 512>}, {pipeline_mode = #tpu.pipeline_mode<synchronous>, transform_indices = @transform_6, window_bounds = array<i64: 1, 512>}, {transform_indices = @transform_7, window_bounds = array<i64: 8, 128>}]} {
    %c0 = arith.constant 0 : index
    %c0_0 = arith.constant 0 : index
    %0 = vector.load %arg3[%c0, %c0_0] : memref<128x512xf32, #tpu.memory_space<vmem>>, vector<128x512xf32>
    %c0_1 = arith.constant 0 : index
    %c0_2 = arith.constant 0 : index
    %1 = vector.load %arg5[%c0_1, %c0_2] : memref<128x512xf32, #tpu.memory_space<vmem>>, vector<128x512xf32>
    %c0_3 = arith.constant 0 : index
    %c0_4 = arith.constant 0 : index
    %2 = vector.load %arg6[%c0_3, %c0_4] : memref<128x512xf32, #tpu.memory_space<vmem>>, vector<128x512xf32>
    %c0_5 = arith.constant 0 : index
    %c0_6 = arith.constant 0 : index
    %c0_7 = arith.constant 0 : index
    %3 = vector.load %arg1[%c0_5, %c0_6, %c0_7] : memref<8x8x16xf32, #tpu.memory_space<vmem>>, vector<8x8x16xf32>
    %4 = vector.shape_cast %3 : vector<8x8x16xf32> to vector<64x16xf32>
    %c0_8 = arith.constant 0 : index
    %c0_9 = arith.constant 0 : index
    %5 = vector.load %arg2[%c0_8, %c0_9] : memref<16x512xf32, #tpu.memory_space<vmem>>, vector<16x512xf32>
    %cst = arith.constant dense<0.000000e+00> : vector<64x512xf32>
    %6 = tpu.matmul %4, %5, %cst {dimension_numbers = #tpu.dot_dimension_numbers<[1], [0], [0], [1], [0, 0, 1, 1], [], []>} : vector<64x16xf32>, vector<16x512xf32>, vector<64x512xf32> -> vector<64x512xf32>
    %c0_10 = arith.constant 0 : index
    %c0_11 = arith.constant 0 : index
    %7 = vector.load %arg4[%c0_10, %c0_11] : memref<1x512xf32, #tpu.memory_space<vmem>>, vector<1x512xf32>
    %8 = vector.broadcast %7 : vector<1x512xf32> to vector<64x512xf32>
    %9 = arith.addf %6, %8 : vector<64x512xf32>
    %c0_12 = arith.constant 0 : index
    %c0_13 = arith.constant 0 : index
    %10 = vector.load %arg7[%c0_12, %c0_13] : memref<1x512xf32, #tpu.memory_space<vmem>>, vector<1x512xf32>
    %11 = vector.shape_cast %10 : vector<1x512xf32> to vector<1x512xf32>
    %12 = vector.broadcast %11 : vector<1x512xf32> to vector<8x512xf32>
    %cst_14 = arith.constant 0.000000e+00 : f32
    %13 = vector.broadcast %cst_14 : f32 to vector<8x128xf32>
    %cst_15 = arith.constant dense<0.000000e+00> : vector<8x512xf32>
    %14 = tpu.matmul %13, %2, %cst_15 {dimension_numbers = #tpu.dot_dimension_numbers<[1], [0], [0], [1], [0, 0, 1, 1], [], []>} : vector<8x128xf32>, vector<128x512xf32>, vector<8x512xf32> -> vector<8x512xf32>
    %15 = arith.addf %14, %12 : vector<8x512xf32>
    %16 = vector.extract_strided_slice %9 {offsets = [0, 0], sizes = [8, 512], strides = [1, 1]} : vector<64x512xf32> to vector<8x512xf32>
    %cst_16 = arith.constant dense<0.000000e+00> : vector<8x512xf32>
    %17 = tpu.matmul %13, %0, %cst_16 {dimension_numbers = #tpu.dot_dimension_numbers<[1], [0], [0], [1], [0, 0, 1, 1], [], []>} : vector<8x128xf32>, vector<128x512xf32>, vector<8x512xf32> -> vector<8x512xf32>
    %18 = arith.addf %16, %17 : vector<8x512xf32>
    %19 = arith.negf %18 : vector<8x512xf32>
    %20 = math.exp %19 : vector<8x512xf32>
    %cst_17 = arith.constant 1.000000e+00 : f32
    %21 = vector.broadcast %cst_17 : f32 to vector<8x512xf32>
    %22 = arith.addf %21, %20 : vector<8x512xf32>
    %23 = arith.divf %21, %22 : vector<8x512xf32>
    %24 = math.tanh %18 : vector<8x512xf32>
    %25 = vector.extract_strided_slice %23 {offsets = [0, 0], sizes = [8, 128], strides = [1, 1]} : vector<8x512xf32> to vector<8x128xf32>
    %26 = vector.extract_strided_slice %23 {offsets = [0, 128], sizes = [8, 128], strides = [1, 1]} : vector<8x512xf32> to vector<8x128xf32>
    %27 = vector.extract_strided_slice %23 {offsets = [0, 384], sizes = [8, 128], strides = [1, 1]} : vector<8x512xf32> to vector<8x128xf32>
    %28 = vector.extract_strided_slice %24 {offsets = [0, 256], sizes = [8, 128], strides = [1, 1]} : vector<8x512xf32> to vector<8x128xf32>
    %29 = arith.mulf %26, %13 : vector<8x128xf32>
    %30 = arith.mulf %25, %28 : vector<8x128xf32>
    %31 = arith.addf %29, %30 : vector<8x128xf32>
    %32 = math.tanh %31 : vector<8x128xf32>
    %33 = arith.mulf %27, %32 : vector<8x128xf32>
    %cst_18 = arith.constant dense<0.000000e+00> : vector<8x512xf32>
    %34 = tpu.matmul %33, %1, %cst_18 {dimension_numbers = #tpu.dot_dimension_numbers<[1], [0], [0], [1], [0, 0, 1, 1], [], []>} : vector<8x128xf32>, vector<128x512xf32>, vector<8x512xf32> -> vector<8x512xf32>
    %35 = arith.addf %15, %34 : vector<8x512xf32>
    %36 = arith.negf %35 : vector<8x512xf32>
    %37 = math.exp %36 : vector<8x512xf32>
    %cst_19 = arith.constant 1.000000e+00 : f32
    %38 = vector.broadcast %cst_19 : f32 to vector<8x512xf32>
    %39 = arith.addf %38, %37 : vector<8x512xf32>
    %40 = arith.divf %38, %39 : vector<8x512xf32>
    %41 = math.tanh %35 : vector<8x512xf32>
    %42 = vector.extract_strided_slice %40 {offsets = [0, 0], sizes = [8, 128], strides = [1, 1]} : vector<8x512xf32> to vector<8x128xf32>
    %43 = vector.extract_strided_slice %40 {offsets = [0, 128], sizes = [8, 128], strides = [1, 1]} : vector<8x512xf32> to vector<8x128xf32>
    %44 = vector.extract_strided_slice %40 {offsets = [0, 384], sizes = [8, 128], strides = [1, 1]} : vector<8x512xf32> to vector<8x128xf32>
    %45 = vector.extract_strided_slice %41 {offsets = [0, 256], sizes = [8, 128], strides = [1, 1]} : vector<8x512xf32> to vector<8x128xf32>
    %46 = arith.mulf %43, %13 : vector<8x128xf32>
    %47 = arith.mulf %42, %45 : vector<8x128xf32>
    %48 = arith.addf %46, %47 : vector<8x128xf32>
    %49 = math.tanh %48 : vector<8x128xf32>
    %50 = arith.mulf %44, %49 : vector<8x128xf32>
    %cst_20 = arith.constant dense<0.000000e+00> : vector<8x512xf32>
    %51 = tpu.matmul %50, %2, %cst_20 {dimension_numbers = #tpu.dot_dimension_numbers<[1], [0], [0], [1], [0, 0, 1, 1], [], []>} : vector<8x128xf32>, vector<128x512xf32>, vector<8x512xf32> -> vector<8x512xf32>
    %52 = arith.addf %51, %12 : vector<8x512xf32>
    %53 = vector.extract_strided_slice %9 {offsets = [8, 0], sizes = [8, 512], strides = [1, 1]} : vector<64x512xf32> to vector<8x512xf32>
    %cst_21 = arith.constant dense<0.000000e+00> : vector<8x512xf32>
    %54 = tpu.matmul %33, %0, %cst_21 {dimension_numbers = #tpu.dot_dimension_numbers<[1], [0], [0], [1], [0, 0, 1, 1], [], []>} : vector<8x128xf32>, vector<128x512xf32>, vector<8x512xf32> -> vector<8x512xf32>
    %55 = arith.addf %53, %54 : vector<8x512xf32>
    %56 = arith.negf %55 : vector<8x512xf32>
    %57 = math.exp %56 : vector<8x512xf32>
    %cst_22 = arith.constant 1.000000e+00 : f32
    %58 = vector.broadcast %cst_22 : f32 to vector<8x512xf32>
    %59 = arith.addf %58, %57 : vector<8x512xf32>
    %60 = arith.divf %58, %59 : vector<8x512xf32>
    %61 = math.tanh %55 : vector<8x512xf32>
    %62 = vector.extract_strided_slice %60 {offsets = [0, 0], sizes = [8, 128], strides = [1, 1]} : vector<8x512xf32> to vector<8x128xf32>
    %63 = vector.extract_strided_slice %60 {offsets = [0, 128], sizes = [8, 128], strides = [1, 1]} : vector<8x512xf32> to vector<8x128xf32>
    %64 = vector.extract_strided_slice %60 {offsets = [0, 384], sizes = [8, 128], strides = [1, 1]} : vector<8x512xf32> to vector<8x128xf32>
    %65 = vector.extract_strided_slice %61 {offsets = [0, 256], sizes = [8, 128], strides = [1, 1]} : vector<8x512xf32> to vector<8x128xf32>
    %66 = arith.mulf %63, %31 : vector<8x128xf32>
    %67 = arith.mulf %62, %65 : vector<8x128xf32>
    %68 = arith.addf %66, %67 : vector<8x128xf32>
    %69 = math.tanh %68 : vector<8x128xf32>
    %70 = arith.mulf %64, %69 : vector<8x128xf32>
    %cst_23 = arith.constant dense<0.000000e+00> : vector<8x512xf32>
    %71 = tpu.matmul %70, %1, %cst_23 {dimension_numbers = #tpu.dot_dimension_numbers<[1], [0], [0], [1], [0, 0, 1, 1], [], []>} : vector<8x128xf32>, vector<128x512xf32>, vector<8x512xf32> -> vector<8x512xf32>
    %72 = arith.addf %52, %71 : vector<8x512xf32>
    %73 = arith.negf %72 : vector<8x512xf32>
    %74 = math.exp %73 : vector<8x512xf32>
    %cst_24 = arith.constant 1.000000e+00 : f32
    %75 = vector.broadcast %cst_24 : f32 to vector<8x512xf32>
    %76 = arith.addf %75, %74 : vector<8x512xf32>
    %77 = arith.divf %75, %76 : vector<8x512xf32>
    %78 = math.tanh %72 : vector<8x512xf32>
    %79 = vector.extract_strided_slice %77 {offsets = [0, 0], sizes = [8, 128], strides = [1, 1]} : vector<8x512xf32> to vector<8x128xf32>
    %80 = vector.extract_strided_slice %77 {offsets = [0, 128], sizes = [8, 128], strides = [1, 1]} : vector<8x512xf32> to vector<8x128xf32>
    %81 = vector.extract_strided_slice %77 {offsets = [0, 384], sizes = [8, 128], strides = [1, 1]} : vector<8x512xf32> to vector<8x128xf32>
    %82 = vector.extract_strided_slice %78 {offsets = [0, 256], sizes = [8, 128], strides = [1, 1]} : vector<8x512xf32> to vector<8x128xf32>
    %83 = arith.mulf %80, %48 : vector<8x128xf32>
    %84 = arith.mulf %79, %82 : vector<8x128xf32>
    %85 = arith.addf %83, %84 : vector<8x128xf32>
    %86 = math.tanh %85 : vector<8x128xf32>
    %87 = arith.mulf %81, %86 : vector<8x128xf32>
    %cst_25 = arith.constant dense<0.000000e+00> : vector<8x512xf32>
    %88 = tpu.matmul %87, %2, %cst_25 {dimension_numbers = #tpu.dot_dimension_numbers<[1], [0], [0], [1], [0, 0, 1, 1], [], []>} : vector<8x128xf32>, vector<128x512xf32>, vector<8x512xf32> -> vector<8x512xf32>
    %89 = arith.addf %88, %12 : vector<8x512xf32>
    %90 = vector.extract_strided_slice %9 {offsets = [16, 0], sizes = [8, 512], strides = [1, 1]} : vector<64x512xf32> to vector<8x512xf32>
    %cst_26 = arith.constant dense<0.000000e+00> : vector<8x512xf32>
    %91 = tpu.matmul %70, %0, %cst_26 {dimension_numbers = #tpu.dot_dimension_numbers<[1], [0], [0], [1], [0, 0, 1, 1], [], []>} : vector<8x128xf32>, vector<128x512xf32>, vector<8x512xf32> -> vector<8x512xf32>
    %92 = arith.addf %90, %91 : vector<8x512xf32>
    %93 = arith.negf %92 : vector<8x512xf32>
    %94 = math.exp %93 : vector<8x512xf32>
    %cst_27 = arith.constant 1.000000e+00 : f32
    %95 = vector.broadcast %cst_27 : f32 to vector<8x512xf32>
    %96 = arith.addf %95, %94 : vector<8x512xf32>
    %97 = arith.divf %95, %96 : vector<8x512xf32>
    %98 = math.tanh %92 : vector<8x512xf32>
    %99 = vector.extract_strided_slice %97 {offsets = [0, 0], sizes = [8, 128], strides = [1, 1]} : vector<8x512xf32> to vector<8x128xf32>
    %100 = vector.extract_strided_slice %97 {offsets = [0, 128], sizes = [8, 128], strides = [1, 1]} : vector<8x512xf32> to vector<8x128xf32>
    %101 = vector.extract_strided_slice %97 {offsets = [0, 384], sizes = [8, 128], strides = [1, 1]} : vector<8x512xf32> to vector<8x128xf32>
    %102 = vector.extract_strided_slice %98 {offsets = [0, 256], sizes = [8, 128], strides = [1, 1]} : vector<8x512xf32> to vector<8x128xf32>
    %103 = arith.mulf %100, %68 : vector<8x128xf32>
    %104 = arith.mulf %99, %102 : vector<8x128xf32>
    %105 = arith.addf %103, %104 : vector<8x128xf32>
    %106 = math.tanh %105 : vector<8x128xf32>
    %107 = arith.mulf %101, %106 : vector<8x128xf32>
    %cst_28 = arith.constant dense<0.000000e+00> : vector<8x512xf32>
    %108 = tpu.matmul %107, %1, %cst_28 {dimension_numbers = #tpu.dot_dimension_numbers<[1], [0], [0], [1], [0, 0, 1, 1], [], []>} : vector<8x128xf32>, vector<128x512xf32>, vector<8x512xf32> -> vector<8x512xf32>
    %109 = arith.addf %89, %108 : vector<8x512xf32>
    %110 = arith.negf %109 : vector<8x512xf32>
    %111 = math.exp %110 : vector<8x512xf32>
    %cst_29 = arith.constant 1.000000e+00 : f32
    %112 = vector.broadcast %cst_29 : f32 to vector<8x512xf32>
    %113 = arith.addf %112, %111 : vector<8x512xf32>
    %114 = arith.divf %112, %113 : vector<8x512xf32>
    %115 = math.tanh %109 : vector<8x512xf32>
    %116 = vector.extract_strided_slice %114 {offsets = [0, 0], sizes = [8, 128], strides = [1, 1]} : vector<8x512xf32> to vector<8x128xf32>
    %117 = vector.extract_strided_slice %114 {offsets = [0, 128], sizes = [8, 128], strides = [1, 1]} : vector<8x512xf32> to vector<8x128xf32>
    %118 = vector.extract_strided_slice %114 {offsets = [0, 384], sizes = [8, 128], strides = [1, 1]} : vector<8x512xf32> to vector<8x128xf32>
    %119 = vector.extract_strided_slice %115 {offsets = [0, 256], sizes = [8, 128], strides = [1, 1]} : vector<8x512xf32> to vector<8x128xf32>
    %120 = arith.mulf %117, %85 : vector<8x128xf32>
    %121 = arith.mulf %116, %119 : vector<8x128xf32>
    %122 = arith.addf %120, %121 : vector<8x128xf32>
    %123 = math.tanh %122 : vector<8x128xf32>
    %124 = arith.mulf %118, %123 : vector<8x128xf32>
    %cst_30 = arith.constant dense<0.000000e+00> : vector<8x512xf32>
    %125 = tpu.matmul %124, %2, %cst_30 {dimension_numbers = #tpu.dot_dimension_numbers<[1], [0], [0], [1], [0, 0, 1, 1], [], []>} : vector<8x128xf32>, vector<128x512xf32>, vector<8x512xf32> -> vector<8x512xf32>
    %126 = arith.addf %125, %12 : vector<8x512xf32>
    %127 = vector.extract_strided_slice %9 {offsets = [24, 0], sizes = [8, 512], strides = [1, 1]} : vector<64x512xf32> to vector<8x512xf32>
    %cst_31 = arith.constant dense<0.000000e+00> : vector<8x512xf32>
    %128 = tpu.matmul %107, %0, %cst_31 {dimension_numbers = #tpu.dot_dimension_numbers<[1], [0], [0], [1], [0, 0, 1, 1], [], []>} : vector<8x128xf32>, vector<128x512xf32>, vector<8x512xf32> -> vector<8x512xf32>
    %129 = arith.addf %127, %128 : vector<8x512xf32>
    %130 = arith.negf %129 : vector<8x512xf32>
    %131 = math.exp %130 : vector<8x512xf32>
    %cst_32 = arith.constant 1.000000e+00 : f32
    %132 = vector.broadcast %cst_32 : f32 to vector<8x512xf32>
    %133 = arith.addf %132, %131 : vector<8x512xf32>
    %134 = arith.divf %132, %133 : vector<8x512xf32>
    %135 = math.tanh %129 : vector<8x512xf32>
    %136 = vector.extract_strided_slice %134 {offsets = [0, 0], sizes = [8, 128], strides = [1, 1]} : vector<8x512xf32> to vector<8x128xf32>
    %137 = vector.extract_strided_slice %134 {offsets = [0, 128], sizes = [8, 128], strides = [1, 1]} : vector<8x512xf32> to vector<8x128xf32>
    %138 = vector.extract_strided_slice %134 {offsets = [0, 384], sizes = [8, 128], strides = [1, 1]} : vector<8x512xf32> to vector<8x128xf32>
    %139 = vector.extract_strided_slice %135 {offsets = [0, 256], sizes = [8, 128], strides = [1, 1]} : vector<8x512xf32> to vector<8x128xf32>
    %140 = arith.mulf %137, %105 : vector<8x128xf32>
    %141 = arith.mulf %136, %139 : vector<8x128xf32>
    %142 = arith.addf %140, %141 : vector<8x128xf32>
    %143 = math.tanh %142 : vector<8x128xf32>
    %144 = arith.mulf %138, %143 : vector<8x128xf32>
    %cst_33 = arith.constant dense<0.000000e+00> : vector<8x512xf32>
    %145 = tpu.matmul %144, %1, %cst_33 {dimension_numbers = #tpu.dot_dimension_numbers<[1], [0], [0], [1], [0, 0, 1, 1], [], []>} : vector<8x128xf32>, vector<128x512xf32>, vector<8x512xf32> -> vector<8x512xf32>
    %146 = arith.addf %126, %145 : vector<8x512xf32>
    %147 = arith.negf %146 : vector<8x512xf32>
    %148 = math.exp %147 : vector<8x512xf32>
    %cst_34 = arith.constant 1.000000e+00 : f32
    %149 = vector.broadcast %cst_34 : f32 to vector<8x512xf32>
    %150 = arith.addf %149, %148 : vector<8x512xf32>
    %151 = arith.divf %149, %150 : vector<8x512xf32>
    %152 = math.tanh %146 : vector<8x512xf32>
    %153 = vector.extract_strided_slice %151 {offsets = [0, 0], sizes = [8, 128], strides = [1, 1]} : vector<8x512xf32> to vector<8x128xf32>
    %154 = vector.extract_strided_slice %151 {offsets = [0, 128], sizes = [8, 128], strides = [1, 1]} : vector<8x512xf32> to vector<8x128xf32>
    %155 = vector.extract_strided_slice %151 {offsets = [0, 384], sizes = [8, 128], strides = [1, 1]} : vector<8x512xf32> to vector<8x128xf32>
    %156 = vector.extract_strided_slice %152 {offsets = [0, 256], sizes = [8, 128], strides = [1, 1]} : vector<8x512xf32> to vector<8x128xf32>
    %157 = arith.mulf %154, %122 : vector<8x128xf32>
    %158 = arith.mulf %153, %156 : vector<8x128xf32>
    %159 = arith.addf %157, %158 : vector<8x128xf32>
    %160 = math.tanh %159 : vector<8x128xf32>
    %161 = arith.mulf %155, %160 : vector<8x128xf32>
    %cst_35 = arith.constant dense<0.000000e+00> : vector<8x512xf32>
    %162 = tpu.matmul %161, %2, %cst_35 {dimension_numbers = #tpu.dot_dimension_numbers<[1], [0], [0], [1], [0, 0, 1, 1], [], []>} : vector<8x128xf32>, vector<128x512xf32>, vector<8x512xf32> -> vector<8x512xf32>
    %163 = arith.addf %162, %12 : vector<8x512xf32>
    %164 = vector.extract_strided_slice %9 {offsets = [32, 0], sizes = [8, 512], strides = [1, 1]} : vector<64x512xf32> to vector<8x512xf32>
    %cst_36 = arith.constant dense<0.000000e+00> : vector<8x512xf32>
    %165 = tpu.matmul %144, %0, %cst_36 {dimension_numbers = #tpu.dot_dimension_numbers<[1], [0], [0], [1], [0, 0, 1, 1], [], []>} : vector<8x128xf32>, vector<128x512xf32>, vector<8x512xf32> -> vector<8x512xf32>
    %166 = arith.addf %164, %165 : vector<8x512xf32>
    %167 = arith.negf %166 : vector<8x512xf32>
    %168 = math.exp %167 : vector<8x512xf32>
    %cst_37 = arith.constant 1.000000e+00 : f32
    %169 = vector.broadcast %cst_37 : f32 to vector<8x512xf32>
    %170 = arith.addf %169, %168 : vector<8x512xf32>
    %171 = arith.divf %169, %170 : vector<8x512xf32>
    %172 = math.tanh %166 : vector<8x512xf32>
    %173 = vector.extract_strided_slice %171 {offsets = [0, 0], sizes = [8, 128], strides = [1, 1]} : vector<8x512xf32> to vector<8x128xf32>
    %174 = vector.extract_strided_slice %171 {offsets = [0, 128], sizes = [8, 128], strides = [1, 1]} : vector<8x512xf32> to vector<8x128xf32>
    %175 = vector.extract_strided_slice %171 {offsets = [0, 384], sizes = [8, 128], strides = [1, 1]} : vector<8x512xf32> to vector<8x128xf32>
    %176 = vector.extract_strided_slice %172 {offsets = [0, 256], sizes = [8, 128], strides = [1, 1]} : vector<8x512xf32> to vector<8x128xf32>
    %177 = arith.mulf %174, %142 : vector<8x128xf32>
    %178 = arith.mulf %173, %176 : vector<8x128xf32>
    %179 = arith.addf %177, %178 : vector<8x128xf32>
    %180 = math.tanh %179 : vector<8x128xf32>
    %181 = arith.mulf %175, %180 : vector<8x128xf32>
    %cst_38 = arith.constant dense<0.000000e+00> : vector<8x512xf32>
    %182 = tpu.matmul %181, %1, %cst_38 {dimension_numbers = #tpu.dot_dimension_numbers<[1], [0], [0], [1], [0, 0, 1, 1], [], []>} : vector<8x128xf32>, vector<128x512xf32>, vector<8x512xf32> -> vector<8x512xf32>
    %183 = arith.addf %163, %182 : vector<8x512xf32>
    %184 = arith.negf %183 : vector<8x512xf32>
    %185 = math.exp %184 : vector<8x512xf32>
    %cst_39 = arith.constant 1.000000e+00 : f32
    %186 = vector.broadcast %cst_39 : f32 to vector<8x512xf32>
    %187 = arith.addf %186, %185 : vector<8x512xf32>
    %188 = arith.divf %186, %187 : vector<8x512xf32>
    %189 = math.tanh %183 : vector<8x512xf32>
    %190 = vector.extract_strided_slice %188 {offsets = [0, 0], sizes = [8, 128], strides = [1, 1]} : vector<8x512xf32> to vector<8x128xf32>
    %191 = vector.extract_strided_slice %188 {offsets = [0, 128], sizes = [8, 128], strides = [1, 1]} : vector<8x512xf32> to vector<8x128xf32>
    %192 = vector.extract_strided_slice %188 {offsets = [0, 384], sizes = [8, 128], strides = [1, 1]} : vector<8x512xf32> to vector<8x128xf32>
    %193 = vector.extract_strided_slice %189 {offsets = [0, 256], sizes = [8, 128], strides = [1, 1]} : vector<8x512xf32> to vector<8x128xf32>
    %194 = arith.mulf %191, %159 : vector<8x128xf32>
    %195 = arith.mulf %190, %193 : vector<8x128xf32>
    %196 = arith.addf %194, %195 : vector<8x128xf32>
    %197 = math.tanh %196 : vector<8x128xf32>
    %198 = arith.mulf %192, %197 : vector<8x128xf32>
    %cst_40 = arith.constant dense<0.000000e+00> : vector<8x512xf32>
    %199 = tpu.matmul %198, %2, %cst_40 {dimension_numbers = #tpu.dot_dimension_numbers<[1], [0], [0], [1], [0, 0, 1, 1], [], []>} : vector<8x128xf32>, vector<128x512xf32>, vector<8x512xf32> -> vector<8x512xf32>
    %200 = arith.addf %199, %12 : vector<8x512xf32>
    %201 = vector.extract_strided_slice %9 {offsets = [40, 0], sizes = [8, 512], strides = [1, 1]} : vector<64x512xf32> to vector<8x512xf32>
    %cst_41 = arith.constant dense<0.000000e+00> : vector<8x512xf32>
    %202 = tpu.matmul %181, %0, %cst_41 {dimension_numbers = #tpu.dot_dimension_numbers<[1], [0], [0], [1], [0, 0, 1, 1], [], []>} : vector<8x128xf32>, vector<128x512xf32>, vector<8x512xf32> -> vector<8x512xf32>
    %203 = arith.addf %201, %202 : vector<8x512xf32>
    %204 = arith.negf %203 : vector<8x512xf32>
    %205 = math.exp %204 : vector<8x512xf32>
    %cst_42 = arith.constant 1.000000e+00 : f32
    %206 = vector.broadcast %cst_42 : f32 to vector<8x512xf32>
    %207 = arith.addf %206, %205 : vector<8x512xf32>
    %208 = arith.divf %206, %207 : vector<8x512xf32>
    %209 = math.tanh %203 : vector<8x512xf32>
    %210 = vector.extract_strided_slice %208 {offsets = [0, 0], sizes = [8, 128], strides = [1, 1]} : vector<8x512xf32> to vector<8x128xf32>
    %211 = vector.extract_strided_slice %208 {offsets = [0, 128], sizes = [8, 128], strides = [1, 1]} : vector<8x512xf32> to vector<8x128xf32>
    %212 = vector.extract_strided_slice %208 {offsets = [0, 384], sizes = [8, 128], strides = [1, 1]} : vector<8x512xf32> to vector<8x128xf32>
    %213 = vector.extract_strided_slice %209 {offsets = [0, 256], sizes = [8, 128], strides = [1, 1]} : vector<8x512xf32> to vector<8x128xf32>
    %214 = arith.mulf %211, %179 : vector<8x128xf32>
    %215 = arith.mulf %210, %213 : vector<8x128xf32>
    %216 = arith.addf %214, %215 : vector<8x128xf32>
    %217 = math.tanh %216 : vector<8x128xf32>
    %218 = arith.mulf %212, %217 : vector<8x128xf32>
    %cst_43 = arith.constant dense<0.000000e+00> : vector<8x512xf32>
    %219 = tpu.matmul %218, %1, %cst_43 {dimension_numbers = #tpu.dot_dimension_numbers<[1], [0], [0], [1], [0, 0, 1, 1], [], []>} : vector<8x128xf32>, vector<128x512xf32>, vector<8x512xf32> -> vector<8x512xf32>
    %220 = arith.addf %200, %219 : vector<8x512xf32>
    %221 = arith.negf %220 : vector<8x512xf32>
    %222 = math.exp %221 : vector<8x512xf32>
    %cst_44 = arith.constant 1.000000e+00 : f32
    %223 = vector.broadcast %cst_44 : f32 to vector<8x512xf32>
    %224 = arith.addf %223, %222 : vector<8x512xf32>
    %225 = arith.divf %223, %224 : vector<8x512xf32>
    %226 = math.tanh %220 : vector<8x512xf32>
    %227 = vector.extract_strided_slice %225 {offsets = [0, 0], sizes = [8, 128], strides = [1, 1]} : vector<8x512xf32> to vector<8x128xf32>
    %228 = vector.extract_strided_slice %225 {offsets = [0, 128], sizes = [8, 128], strides = [1, 1]} : vector<8x512xf32> to vector<8x128xf32>
    %229 = vector.extract_strided_slice %225 {offsets = [0, 384], sizes = [8, 128], strides = [1, 1]} : vector<8x512xf32> to vector<8x128xf32>
    %230 = vector.extract_strided_slice %226 {offsets = [0, 256], sizes = [8, 128], strides = [1, 1]} : vector<8x512xf32> to vector<8x128xf32>
    %231 = arith.mulf %228, %196 : vector<8x128xf32>
    %232 = arith.mulf %227, %230 : vector<8x128xf32>
    %233 = arith.addf %231, %232 : vector<8x128xf32>
    %234 = math.tanh %233 : vector<8x128xf32>
    %235 = arith.mulf %229, %234 : vector<8x128xf32>
    %cst_45 = arith.constant dense<0.000000e+00> : vector<8x512xf32>
    %236 = tpu.matmul %235, %2, %cst_45 {dimension_numbers = #tpu.dot_dimension_numbers<[1], [0], [0], [1], [0, 0, 1, 1], [], []>} : vector<8x128xf32>, vector<128x512xf32>, vector<8x512xf32> -> vector<8x512xf32>
    %237 = arith.addf %236, %12 : vector<8x512xf32>
    %238 = vector.extract_strided_slice %9 {offsets = [48, 0], sizes = [8, 512], strides = [1, 1]} : vector<64x512xf32> to vector<8x512xf32>
    %cst_46 = arith.constant dense<0.000000e+00> : vector<8x512xf32>
    %239 = tpu.matmul %218, %0, %cst_46 {dimension_numbers = #tpu.dot_dimension_numbers<[1], [0], [0], [1], [0, 0, 1, 1], [], []>} : vector<8x128xf32>, vector<128x512xf32>, vector<8x512xf32> -> vector<8x512xf32>
    %240 = arith.addf %238, %239 : vector<8x512xf32>
    %241 = arith.negf %240 : vector<8x512xf32>
    %242 = math.exp %241 : vector<8x512xf32>
    %cst_47 = arith.constant 1.000000e+00 : f32
    %243 = vector.broadcast %cst_47 : f32 to vector<8x512xf32>
    %244 = arith.addf %243, %242 : vector<8x512xf32>
    %245 = arith.divf %243, %244 : vector<8x512xf32>
    %246 = math.tanh %240 : vector<8x512xf32>
    %247 = vector.extract_strided_slice %245 {offsets = [0, 0], sizes = [8, 128], strides = [1, 1]} : vector<8x512xf32> to vector<8x128xf32>
    %248 = vector.extract_strided_slice %245 {offsets = [0, 128], sizes = [8, 128], strides = [1, 1]} : vector<8x512xf32> to vector<8x128xf32>
    %249 = vector.extract_strided_slice %245 {offsets = [0, 384], sizes = [8, 128], strides = [1, 1]} : vector<8x512xf32> to vector<8x128xf32>
    %250 = vector.extract_strided_slice %246 {offsets = [0, 256], sizes = [8, 128], strides = [1, 1]} : vector<8x512xf32> to vector<8x128xf32>
    %251 = arith.mulf %248, %216 : vector<8x128xf32>
    %252 = arith.mulf %247, %250 : vector<8x128xf32>
    %253 = arith.addf %251, %252 : vector<8x128xf32>
    %254 = math.tanh %253 : vector<8x128xf32>
    %255 = arith.mulf %249, %254 : vector<8x128xf32>
    %cst_48 = arith.constant dense<0.000000e+00> : vector<8x512xf32>
    %256 = tpu.matmul %255, %1, %cst_48 {dimension_numbers = #tpu.dot_dimension_numbers<[1], [0], [0], [1], [0, 0, 1, 1], [], []>} : vector<8x128xf32>, vector<128x512xf32>, vector<8x512xf32> -> vector<8x512xf32>
    %257 = arith.addf %237, %256 : vector<8x512xf32>
    %258 = arith.negf %257 : vector<8x512xf32>
    %259 = math.exp %258 : vector<8x512xf32>
    %cst_49 = arith.constant 1.000000e+00 : f32
    %260 = vector.broadcast %cst_49 : f32 to vector<8x512xf32>
    %261 = arith.addf %260, %259 : vector<8x512xf32>
    %262 = arith.divf %260, %261 : vector<8x512xf32>
    %263 = math.tanh %257 : vector<8x512xf32>
    %264 = vector.extract_strided_slice %262 {offsets = [0, 0], sizes = [8, 128], strides = [1, 1]} : vector<8x512xf32> to vector<8x128xf32>
    %265 = vector.extract_strided_slice %262 {offsets = [0, 128], sizes = [8, 128], strides = [1, 1]} : vector<8x512xf32> to vector<8x128xf32>
    %266 = vector.extract_strided_slice %262 {offsets = [0, 384], sizes = [8, 128], strides = [1, 1]} : vector<8x512xf32> to vector<8x128xf32>
    %267 = vector.extract_strided_slice %263 {offsets = [0, 256], sizes = [8, 128], strides = [1, 1]} : vector<8x512xf32> to vector<8x128xf32>
    %268 = arith.mulf %265, %233 : vector<8x128xf32>
    %269 = arith.mulf %264, %267 : vector<8x128xf32>
    %270 = arith.addf %268, %269 : vector<8x128xf32>
    %271 = math.tanh %270 : vector<8x128xf32>
    %272 = arith.mulf %266, %271 : vector<8x128xf32>
    %cst_50 = arith.constant dense<0.000000e+00> : vector<8x512xf32>
    %273 = tpu.matmul %272, %2, %cst_50 {dimension_numbers = #tpu.dot_dimension_numbers<[1], [0], [0], [1], [0, 0, 1, 1], [], []>} : vector<8x128xf32>, vector<128x512xf32>, vector<8x512xf32> -> vector<8x512xf32>
    %274 = arith.addf %273, %12 : vector<8x512xf32>
    %275 = vector.extract_strided_slice %9 {offsets = [56, 0], sizes = [8, 512], strides = [1, 1]} : vector<64x512xf32> to vector<8x512xf32>
    %cst_51 = arith.constant dense<0.000000e+00> : vector<8x512xf32>
    %276 = tpu.matmul %255, %0, %cst_51 {dimension_numbers = #tpu.dot_dimension_numbers<[1], [0], [0], [1], [0, 0, 1, 1], [], []>} : vector<8x128xf32>, vector<128x512xf32>, vector<8x512xf32> -> vector<8x512xf32>
    %277 = arith.addf %275, %276 : vector<8x512xf32>
    %278 = arith.negf %277 : vector<8x512xf32>
    %279 = math.exp %278 : vector<8x512xf32>
    %cst_52 = arith.constant 1.000000e+00 : f32
    %280 = vector.broadcast %cst_52 : f32 to vector<8x512xf32>
    %281 = arith.addf %280, %279 : vector<8x512xf32>
    %282 = arith.divf %280, %281 : vector<8x512xf32>
    %283 = math.tanh %277 : vector<8x512xf32>
    %284 = vector.extract_strided_slice %282 {offsets = [0, 0], sizes = [8, 128], strides = [1, 1]} : vector<8x512xf32> to vector<8x128xf32>
    %285 = vector.extract_strided_slice %282 {offsets = [0, 128], sizes = [8, 128], strides = [1, 1]} : vector<8x512xf32> to vector<8x128xf32>
    %286 = vector.extract_strided_slice %282 {offsets = [0, 384], sizes = [8, 128], strides = [1, 1]} : vector<8x512xf32> to vector<8x128xf32>
    %287 = vector.extract_strided_slice %283 {offsets = [0, 256], sizes = [8, 128], strides = [1, 1]} : vector<8x512xf32> to vector<8x128xf32>
    %288 = arith.mulf %285, %253 : vector<8x128xf32>
    %289 = arith.mulf %284, %287 : vector<8x128xf32>
    %290 = arith.addf %288, %289 : vector<8x128xf32>
    %291 = math.tanh %290 : vector<8x128xf32>
    %292 = arith.mulf %286, %291 : vector<8x128xf32>
    %cst_53 = arith.constant dense<0.000000e+00> : vector<8x512xf32>
    %293 = tpu.matmul %292, %1, %cst_53 {dimension_numbers = #tpu.dot_dimension_numbers<[1], [0], [0], [1], [0, 0, 1, 1], [], []>} : vector<8x128xf32>, vector<128x512xf32>, vector<8x512xf32> -> vector<8x512xf32>
    %294 = arith.addf %274, %293 : vector<8x512xf32>
    %295 = arith.negf %294 : vector<8x512xf32>
    %296 = math.exp %295 : vector<8x512xf32>
    %cst_54 = arith.constant 1.000000e+00 : f32
    %297 = vector.broadcast %cst_54 : f32 to vector<8x512xf32>
    %298 = arith.addf %297, %296 : vector<8x512xf32>
    %299 = arith.divf %297, %298 : vector<8x512xf32>
    %300 = math.tanh %294 : vector<8x512xf32>
    %301 = vector.extract_strided_slice %299 {offsets = [0, 0], sizes = [8, 128], strides = [1, 1]} : vector<8x512xf32> to vector<8x128xf32>
    %302 = vector.extract_strided_slice %299 {offsets = [0, 128], sizes = [8, 128], strides = [1, 1]} : vector<8x512xf32> to vector<8x128xf32>
    %303 = vector.extract_strided_slice %299 {offsets = [0, 384], sizes = [8, 128], strides = [1, 1]} : vector<8x512xf32> to vector<8x128xf32>
    %304 = vector.extract_strided_slice %300 {offsets = [0, 256], sizes = [8, 128], strides = [1, 1]} : vector<8x512xf32> to vector<8x128xf32>
    %305 = arith.mulf %302, %270 : vector<8x128xf32>
    %306 = arith.mulf %301, %304 : vector<8x128xf32>
    %307 = arith.addf %305, %306 : vector<8x128xf32>
    %308 = math.tanh %307 : vector<8x128xf32>
    %309 = arith.mulf %303, %308 : vector<8x128xf32>
    %c0_55 = arith.constant 0 : index
    %c0_56 = arith.constant 0 : index
    %310 = vector.load %arg8[%c0_55, %c0_56] : memref<8x128xf32, #tpu.memory_space<vmem>>, vector<8x128xf32>
    tpu.vector_store %arg8[%c0_55, %c0_56], %309 {strides = array<i32>} : memref<8x128xf32, #tpu.memory_space<vmem>>, vector<8x128xf32>,
    return
  }
  func.func @transform_0(%arg0: i32) -> (i32, i32, i32) {
    %c0_i32 = arith.constant 0 : i32
    %c0_i32_0 = arith.constant 0 : i32
    %c0_i32_1 = arith.constant 0 : i32
    return %c0_i32, %arg0, %c0_i32_0 : i32, i32, i32
  }
  func.func @transform_1(%arg0: i32) -> (i32, i32) {
    %c0_i32 = arith.constant 0 : i32
    %c0_i32_0 = arith.constant 0 : i32
    %c0_i32_1 = arith.constant 0 : i32
    return %c0_i32, %c0_i32_0 : i32, i32
  }
  func.func @transform_2(%arg0: i32) -> (i32, i32) {
    %c0_i32 = arith.constant 0 : i32
    %c0_i32_0 = arith.constant 0 : i32
    %c0_i32_1 = arith.constant 0 : i32
    return %c0_i32, %c0_i32_0 : i32, i32
  }
  func.func @transform_3(%arg0: i32) -> (i32, i32) {
    %c0_i32 = arith.constant 0 : i32
    %c0_i32_0 = arith.constant 0 : i32
    %c0_i32_1 = arith.constant 0 : i32
    return %c0_i32, %c0_i32_0 : i32, i32
  }
  func.func @transform_4(%arg0: i32) -> (i32, i32) {
    %c0_i32 = arith.constant 0 : i32
    %c0_i32_0 = arith.constant 0 : i32
    %c0_i32_1 = arith.constant 0 : i32
    return %c0_i32, %c0_i32_0 : i32, i32
  }
  func.func @transform_5(%arg0: i32) -> (i32, i32) {
    %c0_i32 = arith.constant 0 : i32
    %c0_i32_0 = arith.constant 0 : i32
    %c0_i32_1 = arith.constant 0 : i32
    return %c0_i32, %c0_i32_0 : i32, i32
  }
  func.func @transform_6(%arg0: i32) -> (i32, i32) {
    %c0_i32 = arith.constant 0 : i32
    %c0_i32_0 = arith.constant 0 : i32
    %c0_i32_1 = arith.constant 0 : i32
    return %c0_i32, %c0_i32_0 : i32, i32
  }
  func.func @transform_7(%arg0: i32) -> (i32, i32) {
    %c0_i32 = arith.constant 0 : i32
    %c0_i32_0 = arith.constant 0 : i32
    return %arg0, %c0_i32 : i32, i32
  }
}

</mosaic_0001>

<llo_original>
// kernel: tpu_custom_call.1
$region0: #{tpu_custom_call.1}
  #allocation0 [shape = 'u32[]', space=smem, size = 0x4, offset = 0x4, fixed_abs, tag = 'smem constant byte address 0x4 - core index']
  #allocation1 [shape = 'u32[144,128]{1,0:T(1,128)}', space=vmem, size = 0x12000, scoped, tag = 'internal scratch']
  %s0 = inlined_call_operand.hbm [shape: f32[8,8,16], index: 0, kind: input, shape index: {}]
  %s1 = inlined_call_operand.hbm [shape: f32[16,512], index: 1, kind: input, shape index: {}]
  %s2 = inlined_call_operand.hbm [shape: f32[128,512], index: 2, kind: input, shape index: {}]
  %s3 = inlined_call_operand.hbm [shape: f32[1,512], index: 3, kind: input, shape index: {}]
  %s4 = inlined_call_operand.hbm [shape: f32[128,512], index: 4, kind: input, shape index: {}]
  %s5 = inlined_call_operand.hbm [shape: f32[128,512], index: 5, kind: input, shape index: {}]
  %s6 = inlined_call_operand.hbm [shape: f32[1,512], index: 6, kind: input, shape index: {}]
  %s7 = inlined_call_operand.hbm [shape: f32[8,128], index: 7, kind: output, shape index: {}]
  %s8 = sld [smem:[#allocation0]]
  $region66: #{tpu_custom_call.1} parent=0
    _
  %s10 = ssub.s32 1, %s8
  %s11 = scalar_select 0, %s10, %s8
  $region1: #{tpu_custom_call.1} parent=0
    #allocation2 [shape = 'u8[32768]{0}', space=vmem, size = 0x8000, scoped, tag = 'input window, operand 0, single buffered']
    #allocation3 [shape = 's32[1]{0}', space=sflag, size = 0x4, scoped, tag = 'scoped memory for tpu_custom_call.1']
    #allocation4 [shape = 's32[1]{0}', space=sflag, size = 0x4, scoped, tag = 'scoped memory for tpu_custom_call.1']
    #allocation5 [shape = 'u8[32768]{0}', space=vmem, size = 0x8000, scoped, tag = 'input window, operand 1, single buffered']
    #allocation6 [shape = 's32[1]{0}', space=sflag, size = 0x4, scoped, tag = 'scoped memory for tpu_custom_call.1']
    #allocation7 [shape = 'u8[262144]{0}', space=vmem, size = 0x40000, scoped, tag = 'input window, operand 2, single buffered']
    #allocation8 [shape = 'u8[2048]{0}', space=vmem, size = 0x800, scoped, tag = 'input window, operand 3, single buffered']
    #allocation9 [shape = 's32[1]{0}', space=sflag, size = 0x4, scoped, tag = 'scoped memory for tpu_custom_call.1']
    #allocation10 [shape = 'u8[262144]{0}', space=vmem, size = 0x40000, scoped, tag = 'input window, operand 4, single buffered']
    #allocation11 [shape = 'u8[262144]{0}', space=vmem, size = 0x40000, scoped, tag = 'input window, operand 5, single buffered']
    #allocation12 [shape = 's32[1]{0}', space=sflag, size = 0x4, scoped, tag = 'scoped memory for tpu_custom_call.1']
    #allocation13 [shape = 'u8[2048]{0}', space=vmem, size = 0x800, scoped, tag = 'input window, operand 6, single buffered']
    #allocation14 [shape = 'u8[4096]{0}', space=vmem, size = 0x1000, scoped, tag = 'output window, operand 0, single buffered']
    %12 = vsyncpa [#allocation3], 0
    %13 = vsyncpa [#allocation6], 0
    %14 = vsyncpa [#allocation9], 0
    %15 = vsyncpa [#allocation12], 0
    %16 = vsyncpa [#allocation4], 0
    // Predicated region
    $region2: #{tpu_custom_call.1} parent=1 // pred_check
      _
    $region3: #{tpu_custom_call.1} parent=1 // pred_check_branch
      %18 = sbr.rel (0) target = $region5
    $region4: #{tpu_custom_call.1} parent=1 // pred_region
      %s20 = ssub.s32 1024, 1024
      %21 = vsyncadd [#allocation3], %s20
      %s22 = sshll.u32 [#allocation2], 4
      %s23 = int_to_ptr.vmem [resolvable:$true] %s22
      %28 = dma.hbm_to_vmem [thread:$0]  %s0, 1024, %s23, [#allocation3], 128, 128, 8
    $region5: #{tpu_custom_call.1} parent=1 // pred_fallthru
      _
    // Predicated region
    $region6: #{tpu_custom_call.1} parent=1 // pred_check
      _
    $region7: #{tpu_custom_call.1} parent=1 // pred_check_branch
      %30 = sbr.rel (0) target = $region9
    $region8: #{tpu_custom_call.1} parent=1 // pred_region
      %s32 = ssub.s32 1024, 1024
      %33 = vsyncadd [#allocation6], %s32
      %s34 = sshll.u32 [#allocation5], 4
      %s35 = int_to_ptr.vmem [resolvable:$true] %s34
      %40 = dma.hbm_to_vmem [thread:$0]  %s1, 1024, %s35, [#allocation6], 512, 512, 32
    $region9: #{tpu_custom_call.1} parent=1 // pred_fallthru
      _
    // Predicated region
    $region10: #{tpu_custom_call.1} parent=1 // pred_check
      _
    $region11: #{tpu_custom_call.1} parent=1 // pred_check_branch
      %42 = sbr.rel (0) target = $region13
    $region12: #{tpu_custom_call.1} parent=1 // pred_region
      %s44 = ssub.s32 8192, 8192
      %45 = vsyncadd [#allocation6], %s44
      %s46 = sshll.u32 [#allocation7], 4
      %s47 = int_to_ptr.vmem [resolvable:$true] %s46
      %52 = dma.hbm_to_vmem [thread:$0]  %s2, 8192, %s47, [#allocation6], 512, 512, 32
    $region13: #{tpu_custom_call.1} parent=1 // pred_fallthru
      _
    // Predicated region
    $region14: #{tpu_custom_call.1} parent=1 // pred_check
      _
    $region15: #{tpu_custom_call.1} parent=1 // pred_check_branch
      %54 = sbr.rel (0) target = $region17
    $region16: #{tpu_custom_call.1} parent=1 // pred_region
      %s56 = ssub.s32 64, 64
      %57 = vsyncadd [#allocation9], %s56
      %s59 = sshll.u32 [#allocation8], 4
      %s60 = int_to_ptr.vmem [resolvable:$true] %s59
      %62 = dma.hbm_to_vmem [thread:$0]  %s3, 64, %s60, [#allocation9]
    $region17: #{tpu_custom_call.1} parent=1 // pred_fallthru
      _
    // Predicated region
    $region18: #{tpu_custom_call.1} parent=1 // pred_check
      _
    $region19: #{tpu_custom_call.1} parent=1 // pred_check_branch
      %64 = sbr.rel (0) target = $region21
    $region20: #{tpu_custom_call.1} parent=1 // pred_region
      %s66 = ssub.s32 8192, 8192
      %67 = vsyncadd [#allocation9], %s66
      %s68 = sshll.u32 [#allocation10], 4
      %s69 = int_to_ptr.vmem [resolvable:$true] %s68
      %74 = dma.hbm_to_vmem [thread:$0]  %s4, 8192, %s69, [#allocation9], 512, 512, 32
    $region21: #{tpu_custom_call.1} parent=1 // pred_fallthru
      _
    // Predicated region
    $region22: #{tpu_custom_call.1} parent=1 // pred_check
      _
    $region23: #{tpu_custom_call.1} parent=1 // pred_check_branch
      %76 = sbr.rel (0) target = $region25
    $region24: #{tpu_custom_call.1} parent=1 // pred_region
      %s78 = ssub.s32 8192, 8192
      %79 = vsyncadd [#allocation12], %s78
      %s80 = sshll.u32 [#allocation11], 4
      %s81 = int_to_ptr.vmem [resolvable:$true] %s80
      %86 = dma.hbm_to_vmem [thread:$0]  %s5, 8192, %s81, [#allocation12], 512, 512, 32
    $region25: #{tpu_custom_call.1} parent=1 // pred_fallthru
      _
    // Predicated region
    $region26: #{tpu_custom_call.1} parent=1 // pred_check
      _
    $region27: #{tpu_custom_call.1} parent=1 // pred_check_branch
      %88 = sbr.rel (0) target = $region29
    $region28: #{tpu_custom_call.1} parent=1 // pred_region
      %s90 = ssub.s32 64, 64
      %91 = vsyncadd [#allocation12], %s90
      %s93 = sshll.u32 [#allocation13], 4
      %s94 = int_to_ptr.vmem [resolvable:$true] %s93
      %96 = dma.hbm_to_vmem [thread:$0]  %s6, 64, %s94, [#allocation12]
    $region29: #{tpu_custom_call.1} parent=1 // pred_fallthru
      _
    // Predicated region
    $region30: #{tpu_custom_call.1} parent=1 // pred_check
      _
    $region31: #{tpu_custom_call.1} parent=1 // pred_check_branch
      %98 = sbr.rel (0) target = $region33
    $region32: #{tpu_custom_call.1} parent=1 // pred_region
      %99 = dma.done [#allocation3], 1024
    $region33: #{tpu_custom_call.1} parent=1 // pred_fallthru
      _
    // Predicated region
    $region34: #{tpu_custom_call.1} parent=1 // pred_check
      _
    $region35: #{tpu_custom_call.1} parent=1 // pred_check_branch
      %101 = sbr.rel (0) target = $region37
    $region36: #{tpu_custom_call.1} parent=1 // pred_region
      %102 = dma.done [#allocation6], 1024
    $region37: #{tpu_custom_call.1} parent=1 // pred_fallthru
      _
    // Predicated region
    $region38: #{tpu_custom_call.1} parent=1 // pred_check
      _
    $region39: #{tpu_custom_call.1} parent=1 // pred_check_branch
      %104 = sbr.rel (0) target = $region41
    $region40: #{tpu_custom_call.1} parent=1 // pred_region
      %105 = dma.done [#allocation6], 8192
    $region41: #{tpu_custom_call.1} parent=1 // pred_fallthru
      _
    // Predicated region
    $region42: #{tpu_custom_call.1} parent=1 // pred_check
      _
    $region43: #{tpu_custom_call.1} parent=1 // pred_check_branch
      %107 = sbr.rel (0) target = $region45
    $region44: #{tpu_custom_call.1} parent=1 // pred_region
      %108 = dma.done [#allocation9], 64
    $region45: #{tpu_custom_call.1} parent=1 // pred_fallthru
      _
    // Predicated region
    $region46: #{tpu_custom_call.1} parent=1 // pred_check
      _
    $region47: #{tpu_custom_call.1} parent=1 // pred_check_branch
      %110 = sbr.rel (0) target = $region49
    $region48: #{tpu_custom_call.1} parent=1 // pred_region
      %111 = dma.done [#allocation9], 8192
    $region49: #{tpu_custom_call.1} parent=1 // pred_fallthru
      _
    // Predicated region
    $region50: #{tpu_custom_call.1} parent=1 // pred_check
      _
    $region51: #{tpu_custom_call.1} parent=1 // pred_check_branch
      %113 = sbr.rel (0) target = $region53
    $region52: #{tpu_custom_call.1} parent=1 // pred_region
      %114 = dma.done [#allocation12], 8192
    $region53: #{tpu_custom_call.1} parent=1 // pred_fallthru
      _
    // Predicated region
    $region54: #{tpu_custom_call.1} parent=1 // pred_check
      _
    $region55: #{tpu_custom_call.1} parent=1 // pred_check_branch
      %116 = sbr.rel (0) target = $region57
    $region56: #{tpu_custom_call.1} parent=1 // pred_region
      %117 = dma.done [#allocation12], 64
    $region57: #{tpu_custom_call.1} parent=1 // pred_fallthru
      _
    %v118 = vld [vmem:[#allocation7] sm:$0xff]
    %v119 = vld [vmem:[#allocation7 + $0x8] sm:$0xff]
    %v120 = vld [vmem:[#allocation7 + $0x10] sm:$0xff]
    %v121 = vld [vmem:[#allocation7 + $0x18] sm:$0xff]
    %v122 = vld [vmem:[#allocation7 + $0x20] sm:$0xff]
    %v123 = vld [vmem:[#allocation7 + $0x28] sm:$0xff]
    %v124 = vld [vmem:[#allocation7 + $0x30] sm:$0xff]
    %v125 = vld [vmem:[#allocation7 + $0x38] sm:$0xff]
    %v126 = vld [vmem:[#allocation7 + $0x40] sm:$0xff]
    %v127 = vld [vmem:[#allocation7 + $0x48] sm:$0xff]
    %v128 = vld [vmem:[#allocation7 + $0x50] sm:$0xff]
    %v129 = vld [vmem:[#allocation7 + $0x58] sm:$0xff]
    %v130 = vld [vmem:[#allocation7 + $0x60] sm:$0xff]
    %v131 = vld [vmem:[#allocation7 + $0x68] sm:$0xff]
    %v132 = vld [vmem:[#allocation7 + $0x70] sm:$0xff]
    %v133 = vld [vmem:[#allocation7 + $0x78] sm:$0xff]
    %v134 = vld [vmem:[#allocation7 + $0x80] sm:$0xff]
    %v135 = vld [vmem:[#allocation7 + $0x88] sm:$0xff]
    %v136 = vld [vmem:[#allocation7 + $0x90] sm:$0xff]
    %v137 = vld [vmem:[#allocation7 + $0x98] sm:$0xff]
    %v138 = vld [vmem:[#allocation7 + $0xa0] sm:$0xff]
    %v139 = vld [vmem:[#allocation7 + $0xa8] sm:$0xff]
    %v140 = vld [vmem:[#allocation7 + $0xb0] sm:$0xff]
    %v141 = vld [vmem:[#allocation7 + $0xb8] sm:$0xff]
    %v142 = vld [vmem:[#allocation7 + $0xc0] sm:$0xff]
    %v143 = vld [vmem:[#allocation7 + $0xc8] sm:$0xff]
    %v144 = vld [vmem:[#allocation7 + $0xd0] sm:$0xff]
    %v145 = vld [vmem:[#allocation7 + $0xd8] sm:$0xff]
    %v146 = vld [vmem:[#allocation7 + $0xe0] sm:$0xff]
    %v147 = vld [vmem:[#allocation7 + $0xe8] sm:$0xff]
    %v148 = vld [vmem:[#allocation7 + $0xf0] sm:$0xff]
    %v149 = vld [vmem:[#allocation7 + $0xf8] sm:$0xff]
    %v150 = vld [vmem:[#allocation7 + $0x100] sm:$0xff]
    %v151 = vld [vmem:[#allocation7 + $0x108] sm:$0xff]
    %v152 = vld [vmem:[#allocation7 + $0x110] sm:$0xff]
    %v153 = vld [vmem:[#allocation7 + $0x118] sm:$0xff]
    %v154 = vld [vmem:[#allocation7 + $0x120] sm:$0xff]
    %v155 = vld [vmem:[#allocation7 + $0x128] sm:$0xff]
    %v156 = vld [vmem:[#allocation7 + $0x130] sm:$0xff]
    %v157 = vld [vmem:[#allocation7 + $0x138] sm:$0xff]
    %v158 = vld [vmem:[#allocation7 + $0x140] sm:$0xff]
    %v159 = vld [vmem:[#allocation7 + $0x148] sm:$0xff]
    %v160 = vld [vmem:[#allocation7 + $0x150] sm:$0xff]
    %v161 = vld [vmem:[#allocation7 + $0x158] sm:$0xff]
    %v162 = vld [vmem:[#allocation7 + $0x160] sm:$0xff]
    %v163 = vld [vmem:[#allocation7 + $0x168] sm:$0xff]
    %v164 = vld [vmem:[#allocation7 + $0x170] sm:$0xff]
    %v165 = vld [vmem:[#allocation7 + $0x178] sm:$0xff]
    %v166 = vld [vmem:[#allocation7 + $0x180] sm:$0xff]
    %v167 = vld [vmem:[#allocation7 + $0x188] sm:$0xff]
    %v168 = vld [vmem:[#allocation7 + $0x190] sm:$0xff]
    %v169 = vld [vmem:[#allocation7 + $0x198] sm:$0xff]
    %v170 = vld [vmem:[#allocation7 + $0x1a0] sm:$0xff]
    %v171 = vld [vmem:[#allocation7 + $0x1a8] sm:$0xff]
    %v172 = vld [vmem:[#allocation7 + $0x1b0] sm:$0xff]
    %v173 = vld [vmem:[#allocation7 + $0x1b8] sm:$0xff]
    %v174 = vld [vmem:[#allocation7 + $0x1c0] sm:$0xff]
    %v175 = vld [vmem:[#allocation7 + $0x1c8] sm:$0xff]
    %v176 = vld [vmem:[#allocation7 + $0x1d0] sm:$0xff]
    %v177 = vld [vmem:[#allocation7 + $0x1d8] sm:$0xff]
    %v178 = vld [vmem:[#allocation7 + $0x1e0] sm:$0xff]
    %v179 = vld [vmem:[#allocation7 + $0x1e8] sm:$0xff]
    %v180 = vld [vmem:[#allocation7 + $0x1f0] sm:$0xff]
    %v181 = vld [vmem:[#allocation7 + $0x1f8] sm:$0xff]
    %v182 = vld [vmem:[#allocation10] sm:$0xff]
    %v183 = vld [vmem:[#allocation10 + $0x8] sm:$0xff]
    %v184 = vld [vmem:[#allocation10 + $0x10] sm:$0xff]
    %v185 = vld [vmem:[#allocation10 + $0x18] sm:$0xff]
    %v186 = vld [vmem:[#allocation10 + $0x20] sm:$0xff]
    %v187 = vld [vmem:[#allocation10 + $0x28] sm:$0xff]
    %v188 = vld [vmem:[#allocation10 + $0x30] sm:$0xff]
    %v189 = vld [vmem:[#allocation10 + $0x38] sm:$0xff]
    %v190 = vld [vmem:[#allocation10 + $0x40] sm:$0xff]
    %v191 = vld [vmem:[#allocation10 + $0x48] sm:$0xff]
    %v192 = vld [vmem:[#allocation10 + $0x50] sm:$0xff]
    %v193 = vld [vmem:[#allocation10 + $0x58] sm:$0xff]
    %v194 = vld [vmem:[#allocation10 + $0x60] sm:$0xff]
    %v195 = vld [vmem:[#allocation10 + $0x68] sm:$0xff]
    %v196 = vld [vmem:[#allocation10 + $0x70] sm:$0xff]
    %v197 = vld [vmem:[#allocation10 + $0x78] sm:$0xff]
    %v198 = vld [vmem:[#allocation10 + $0x80] sm:$0xff]
    %v199 = vld [vmem:[#allocation10 + $0x88] sm:$0xff]
    %v200 = vld [vmem:[#allocation10 + $0x90] sm:$0xff]
    %v201 = vld [vmem:[#allocation10 + $0x98] sm:$0xff]
    %v202 = vld [vmem:[#allocation10 + $0xa0] sm:$0xff]
    %v203 = vld [vmem:[#allocation10 + $0xa8] sm:$0xff]
    %v204 = vld [vmem:[#allocation10 + $0xb0] sm:$0xff]
    %v205 = vld [vmem:[#allocation10 + $0xb8] sm:$0xff]
    %v206 = vld [vmem:[#allocation10 + $0xc0] sm:$0xff]
    %v207 = vld [vmem:[#allocation10 + $0xc8] sm:$0xff]
    %v208 = vld [vmem:[#allocation10 + $0xd0] sm:$0xff]
    %v209 = vld [vmem:[#allocation10 + $0xd8] sm:$0xff]
    %v210 = vld [vmem:[#allocation10 + $0xe0] sm:$0xff]
    %v211 = vld [vmem:[#allocation10 + $0xe8] sm:$0xff]
    %v212 = vld [vmem:[#allocation10 + $0xf0] sm:$0xff]
    %v213 = vld [vmem:[#allocation10 + $0xf8] sm:$0xff]
    %v214 = vld [vmem:[#allocation10 + $0x100] sm:$0xff]
    %v215 = vld [vmem:[#allocation10 + $0x108] sm:$0xff]
    %v216 = vld [vmem:[#allocation10 + $0x110] sm:$0xff]
    %v217 = vld [vmem:[#allocation10 + $0x118] sm:$0xff]
    %v218 = vld [vmem:[#allocation10 + $0x120] sm:$0xff]
    %v219 = vld [vmem:[#allocation10 + $0x128] sm:$0xff]
    %v220 = vld [vmem:[#allocation10 + $0x130] sm:$0xff]
    %v221 = vld [vmem:[#allocation10 + $0x138] sm:$0xff]
    %v222 = vld [vmem:[#allocation10 + $0x140] sm:$0xff]
    %v223 = vld [vmem:[#allocation10 + $0x148] sm:$0xff]
    %v224 = vld [vmem:[#allocation10 + $0x150] sm:$0xff]
    %v225 = vld [vmem:[#allocation10 + $0x158] sm:$0xff]
    %v226 = vld [vmem:[#allocation10 + $0x160] sm:$0xff]
    %v227 = vld [vmem:[#allocation10 + $0x168] sm:$0xff]
    %v228 = vld [vmem:[#allocation10 + $0x170] sm:$0xff]
    %v229 = vld [vmem:[#allocation10 + $0x178] sm:$0xff]
    %v230 = vld [vmem:[#allocation10 + $0x180] sm:$0xff]
    %v231 = vld [vmem:[#allocation10 + $0x188] sm:$0xff]
    %v232 = vld [vmem:[#allocation10 + $0x190] sm:$0xff]
    %v233 = vld [vmem:[#allocation10 + $0x198] sm:$0xff]
    %v234 = vld [vmem:[#allocation10 + $0x1a0] sm:$0xff]
    %v235 = vld [vmem:[#allocation10 + $0x1a8] sm:$0xff]
    %v236 = vld [vmem:[#allocation10 + $0x1b0] sm:$0xff]
    %v237 = vld [vmem:[#allocation10 + $0x1b8] sm:$0xff]
    %v238 = vld [vmem:[#allocation10 + $0x1c0] sm:$0xff]
    %v239 = vld [vmem:[#allocation10 + $0x1c8] sm:$0xff]
    %v240 = vld [vmem:[#allocation10 + $0x1d0] sm:$0xff]
    %v241 = vld [vmem:[#allocation10 + $0x1d8] sm:$0xff]
    %v242 = vld [vmem:[#allocation10 + $0x1e0] sm:$0xff]
    %v243 = vld [vmem:[#allocation10 + $0x1e8] sm:$0xff]
    %v244 = vld [vmem:[#allocation10 + $0x1f0] sm:$0xff]
    %v245 = vld [vmem:[#allocation10 + $0x1f8] sm:$0xff]
    %v246 = vld [vmem:[#allocation11] sm:$0xff]
    %v247 = vld [vmem:[#allocation11 + $0x8] sm:$0xff]
    %v248 = vld [vmem:[#allocation11 + $0x10] sm:$0xff]
    %v249 = vld [vmem:[#allocation11 + $0x18] sm:$0xff]
    %v250 = vld [vmem:[#allocation11 + $0x20] sm:$0xff]
    %v251 = vld [vmem:[#allocation11 + $0x28] sm:$0xff]
    %v252 = vld [vmem:[#allocation11 + $0x30] sm:$0xff]
    %v253 = vld [vmem:[#allocation11 + $0x38] sm:$0xff]
    %v254 = vld [vmem:[#allocation11 + $0x40] sm:$0xff]
    %v255 = vld [vmem:[#allocation11 + $0x48] sm:$0xff]
    %v256 = vld [vmem:[#allocation11 + $0x50] sm:$0xff]
    %v257 = vld [vmem:[#allocation11 + $0x58] sm:$0xff]
    %v258 = vld [vmem:[#allocation11 + $0x60] sm:$0xff]
    %v259 = vld [vmem:[#allocation11 + $0x68] sm:$0xff]
    %v260 = vld [vmem:[#allocation11 + $0x70] sm:$0xff]
    %v261 = vld [vmem:[#allocation11 + $0x78] sm:$0xff]
    %v262 = vld [vmem:[#allocation11 + $0x80] sm:$0xff]
    %v263 = vld [vmem:[#allocation11 + $0x88] sm:$0xff]
    %v264 = vld [vmem:[#allocation11 + $0x90] sm:$0xff]
    %v265 = vld [vmem:[#allocation11 + $0x98] sm:$0xff]
    %v266 = vld [vmem:[#allocation11 + $0xa0] sm:$0xff]
    %v267 = vld [vmem:[#allocation11 + $0xa8] sm:$0xff]
    %v268 = vld [vmem:[#allocation11 + $0xb0] sm:$0xff]
    %v269 = vld [vmem:[#allocation11 + $0xb8] sm:$0xff]
    %v270 = vld [vmem:[#allocation11 + $0xc0] sm:$0xff]
    %v271 = vld [vmem:[#allocation11 + $0xc8] sm:$0xff]
    %v272 = vld [vmem:[#allocation11 + $0xd0] sm:$0xff]
    %v273 = vld [vmem:[#allocation11 + $0xd8] sm:$0xff]
    %v274 = vld [vmem:[#allocation11 + $0xe0] sm:$0xff]
    %v275 = vld [vmem:[#allocation11 + $0xe8] sm:$0xff]
    %v276 = vld [vmem:[#allocation11 + $0xf0] sm:$0xff]
    %v277 = vld [vmem:[#allocation11 + $0xf8] sm:$0xff]
    %v278 = vld [vmem:[#allocation11 + $0x100] sm:$0xff]
    %v279 = vld [vmem:[#allocation11 + $0x108] sm:$0xff]
    %v280 = vld [vmem:[#allocation11 + $0x110] sm:$0xff]
    %v281 = vld [vmem:[#allocation11 + $0x118] sm:$0xff]
    %v282 = vld [vmem:[#allocation11 + $0x120] sm:$0xff]
    %v283 = vld [vmem:[#allocation11 + $0x128] sm:$0xff]
    %v284 = vld [vmem:[#allocation11 + $0x130] sm:$0xff]
    %v285 = vld [vmem:[#allocation11 + $0x138] sm:$0xff]
    %v286 = vld [vmem:[#allocation11 + $0x140] sm:$0xff]
    %v287 = vld [vmem:[#allocation11 + $0x148] sm:$0xff]
    %v288 = vld [vmem:[#allocation11 + $0x150] sm:$0xff]
    %v289 = vld [vmem:[#allocation11 + $0x158] sm:$0xff]
    %v290 = vld [vmem:[#allocation11 + $0x160] sm:$0xff]
    %v291 = vld [vmem:[#allocation11 + $0x168] sm:$0xff]
    %v292 = vld [vmem:[#allocation11 + $0x170] sm:$0xff]
    %v293 = vld [vmem:[#allocation11 + $0x178] sm:$0xff]
    %v294 = vld [vmem:[#allocation11 + $0x180] sm:$0xff]
    %v295 = vld [vmem:[#allocation11 + $0x188] sm:$0xff]
    %v296 = vld [vmem:[#allocation11 + $0x190] sm:$0xff]
    %v297 = vld [vmem:[#allocation11 + $0x198] sm:$0xff]
    %v298 = vld [vmem:[#allocation11 + $0x1a0] sm:$0xff]
    %v299 = vld [vmem:[#allocation11 + $0x1a8] sm:$0xff]
    %v300 = vld [vmem:[#allocation11 + $0x1b0] sm:$0xff]
    %v301 = vld [vmem:[#allocation11 + $0x1b8] sm:$0xff]
    %v302 = vld [vmem:[#allocation11 + $0x1c0] sm:$0xff]
    %v303 = vld [vmem:[#allocation11 + $0x1c8] sm:$0xff]
    %v304 = vld [vmem:[#allocation11 + $0x1d0] sm:$0xff]
    %v305 = vld [vmem:[#allocation11 + $0x1d8] sm:$0xff]
    %v306 = vld [vmem:[#allocation11 + $0x1e0] sm:$0xff]
    %v307 = vld [vmem:[#allocation11 + $0x1e8] sm:$0xff]
    %v308 = vld [vmem:[#allocation11 + $0x1f0] sm:$0xff]
    %v309 = vld [vmem:[#allocation11 + $0x1f8] sm:$0xff]
    %v310 = vld [vmem:[#allocation2] sm:$0xff]
    %v311 = vld [vmem:[#allocation2 + $0x8] sm:$0xff]
    %v312 = vld [vmem:[#allocation2 + $0x10] sm:$0xff]
    %v313 = vld [vmem:[#allocation2 + $0x18] sm:$0xff]
    %v314 = vld [vmem:[#allocation2 + $0x20] sm:$0xff]
    %v315 = vld [vmem:[#allocation2 + $0x28] sm:$0xff]
    %v316 = vld [vmem:[#allocation2 + $0x30] sm:$0xff]
    %v317 = vld [vmem:[#allocation2 + $0x38] sm:$0xff]
    %v318 = vld [vmem:[#allocation5] sm:$0xff]
    %v319 = vld [vmem:[#allocation5 + $0x8] sm:$0xff]
    %v320 = vld [vmem:[#allocation5 + $0x10] sm:$0xff]
    %v321 = vld [vmem:[#allocation5 + $0x18] sm:$0xff]
    %v322 = vld [vmem:[#allocation5 + $0x20] sm:$0xff]
    %v323 = vld [vmem:[#allocation5 + $0x28] sm:$0xff]
    %v324 = vld [vmem:[#allocation5 + $0x30] sm:$0xff]
    %v325 = vld [vmem:[#allocation5 + $0x38] sm:$0xff]
    %v326 = vld [vmem:[#allocation8] sm:$0xf]
    %v328 = vlaneseq
    %v329 = vshrl.u32 %v328, 7
    %v330 = vsub.s32 0, %v329
    %v331 = vrot.slane %v326, %v330
    %v332 = vlaneseq
    %v333 = vshrl.u32 %v332, 7
    %v334 = vsub.s32 1, %v333
    %v335 = vrot.slane %v326, %v334
    %v336 = vlaneseq
    %v337 = vshrl.u32 %v336, 7
    %v338 = vsub.s32 2, %v337
    %v339 = vrot.slane %v326, %v338
    %v340 = vlaneseq
    %v341 = vshrl.u32 %v340, 7
    %v342 = vsub.s32 3, %v341
    %v343 = vrot.slane %v326, %v342
    %vm348 = vcmask 130048
    %v350 = vsel %vm348, %v310, 0
    %v353 = vsel %vm348, %v311, 0
    %v356 = vsel %vm348, %v312, 0
    %v359 = vsel %vm348, %v313, 0
    %v362 = vsel %vm348, %v314, 0
    %v365 = vsel %vm348, %v315, 0
    %v368 = vsel %vm348, %v316, 0
    %v371 = vsel %vm348, %v317, 0
    %373 = vmatprep.subr.mxu0 %v319
    %374 = vmatpush1.msra.mxu0 %v318
    %375 = vmatprep.subr.mxu0 %v323
    %376 = vmatpush1.msra.mxu0 %v322
    %377 = vmatprep.subr.mxu0 0.0
    %378 = vmatpush1.msra.mxu0 0.0
    %379 = vmatprep.subr.mxu0 0.0
    %380 = vmatpush1.msra.mxu0 0.0
    %381 = vmatprep.subr.mxu0 0.0
    %382 = vmatpush1.msra.mxu0 0.0
    %383 = vmatprep.subr.mxu0 0.0
    %384 = vmatpush1.msra.mxu0 0.0
    %385 = vmatprep.subr.mxu0 0.0
    %386 = vmatpush1.msra.mxu0 0.0
    %387 = vmatprep.subr.mxu0 0.0
    %388 = vmatpush1.msra.mxu0 0.0
    %389 = vmatprep.subr.mxu0 0.0
    %390 = vmatpush1.msra.mxu0 0.0
    %391 = vmatprep.subr.mxu0 0.0
    %392 = vmatpush1.msra.mxu0 0.0
    %393 = vmatprep.subr.mxu0 0.0
    %394 = vmatpush1.msra.mxu0 0.0
    %395 = vmatprep.subr.mxu0 0.0
    %396 = vmatpush1.msra.mxu0 0.0
    %397 = vmatprep.subr.mxu0 0.0
    %398 = vmatpush1.msra.mxu0 0.0
    %399 = vmatprep.subr.mxu0 0.0
    %400 = vmatpush1.msra.mxu0 0.0
    %401 = vmatprep.subr.mxu0 0.0
    %402 = vmatpush1.msra.mxu0 0.0
    %403 = vmatprep.subr.mxu0 0.0
    %404 = vmatpush1.msra.mxu0 0.0
    %405 = vmatprep.subr.mxu0 0.0
    %406 = vmatpush1.msra.mxu0 0.0
    %407 = vmatprep.subr.mxu0 0.0
    %408 = vmatpush1.msra.mxu0 0.0
    %409 = vmatprep.subr.mxu0 0.0
    %410 = vmatpush1.msra.mxu0 0.0
    %411 = vmatprep.subr.mxu0 0.0
    %412 = vmatpush1.msra.mxu0 0.0
    %413 = vmatprep.subr.mxu0 0.0
    %414 = vmatpush1.msra.mxu0 0.0
    %415 = vmatprep.subr.mxu0 0.0
    %416 = vmatpush1.msra.mxu0 0.0
    %417 = vmatprep.subr.mxu0 0.0
    %418 = vmatpush1.msra.mxu0 0.0
    %419 = vmatprep.subr.mxu0 0.0
    %420 = vmatpush1.msra.mxu0 0.0
    %421 = vmatprep.subr.mxu0 0.0
    %422 = vmatpush1.msra.mxu0 0.0
    %423 = vmatprep.subr.mxu0 0.0
    %424 = vmatpush1.msra.mxu0 0.0
    %425 = vmatprep.subr.mxu0 0.0
    %426 = vmatpush1.msra.mxu0 0.0
    %427 = vmatprep.subr.mxu0 0.0
    %428 = vmatpush1.msra.mxu0 0.0
    %429 = vmatprep.subr.mxu0 0.0
    %430 = vmatpush1.msra.mxu0 0.0
    %431 = vmatprep.subr.mxu0 0.0
    %432 = vmatpush1.msra.mxu0 0.0
    %433 = vmatprep.subr.mxu0 0.0
    %434 = vmatpush1.msra.mxu0 0.0
    %435 = vmatprep.subr.mxu0 0.0
    %436 = vmatpush1.msra.mxu0 0.0
    %437 = vmatprep.mubr.f32.mxu0 0.0
    %438 = vmatmul.mubr.f32.gmra.mrb[0].mxu0 %v350
    %v439 = vpop.f32.mrb[0].mxu0
    %v440 = vadd.f32 %v331, %v439
    %v441 = vpop.f32.mrb[0].mxu0
    %v442 = vadd.f32 %v335, %v441
    %443 = vmatprep.mubr.f32.mxu0 0.0
    %444 = vmatmul.mubr.f32.gmra.mrb[0].mxu0 %v353
    %v445 = vpop.f32.mrb[0].mxu0
    %v446 = vadd.f32 %v331, %v445
    %v447 = vpop.f32.mrb[0].mxu0
    %v448 = vadd.f32 %v335, %v447
    %449 = vmatprep.mubr.f32.mxu0 0.0
    %450 = vmatmul.mubr.f32.gmra.mrb[0].mxu0 %v356
    %v451 = vpop.f32.mrb[0].mxu0
    %v452 = vadd.f32 %v331, %v451
    %v453 = vpop.f32.mrb[0].mxu0
    %v454 = vadd.f32 %v335, %v453
    %455 = vmatprep.mubr.f32.mxu0 0.0
    %456 = vmatmul.mubr.f32.gmra.mrb[0].mxu0 %v359
    %v457 = vpop.f32.mrb[0].mxu0
    %v458 = vadd.f32 %v331, %v457
    %v459 = vpop.f32.mrb[0].mxu0
    %v460 = vadd.f32 %v335, %v459
    %461 = vmatprep.mubr.f32.mxu0 0.0
    %462 = vmatmul.mubr.f32.gmra.mrb[0].mxu0 %v362
    %v463 = vpop.f32.mrb[0].mxu0
    %v464 = vadd.f32 %v331, %v463
    %v465 = vpop.f32.mrb[0].mxu0
    %v466 = vadd.f32 %v335, %v465
    %467 = vmatprep.mubr.f32.mxu0 0.0
    %468 = vmatmul.mubr.f32.gmra.mrb[0].mxu0 %v365
    %v469 = vpop.f32.mrb[0].mxu0
    %v470 = vadd.f32 %v331, %v469
    %v471 = vpop.f32.mrb[0].mxu0
    %v472 = vadd.f32 %v335, %v471
    %473 = vmatprep.mubr.f32.mxu0 0.0
    %474 = vmatmul.mubr.f32.gmra.mrb[0].mxu0 %v368
    %v475 = vpop.f32.mrb[0].mxu0
    %v476 = vadd.f32 %v331, %v475
    %v477 = vpop.f32.mrb[0].mxu0
    %v478 = vadd.f32 %v335, %v477
    %479 = vmatprep.mubr.f32.mxu0 0.0
    %480 = vmatmul.mubr.f32.gmra.mrb[0].mxu0 %v371
    %v481 = vpop.f32.mrb[0].mxu0
    %v482 = vadd.f32 %v331, %v481
    %v483 = vpop.f32.mrb[0].mxu0
    %v484 = vadd.f32 %v335, %v483
    %485 = vdwg.mxu0
    %486 = vmatprep.subr.mxu0 %v321
    %487 = vmatpush1.msra.mxu0 %v320
    %488 = vmatprep.subr.mxu0 %v325
    %489 = vmatpush1.msra.mxu0 %v324
    %490 = vmatprep.subr.mxu0 0.0
    %491 = vmatpush1.msra.mxu0 0.0
    %492 = vmatprep.subr.mxu0 0.0
    %493 = vmatpush1.msra.mxu0 0.0
    %494 = vmatprep.subr.mxu0 0.0
    %495 = vmatpush1.msra.mxu0 0.0
    %496 = vmatprep.subr.mxu0 0.0
    %497 = vmatpush1.msra.mxu0 0.0
    %498 = vmatprep.subr.mxu0 0.0
    %499 = vmatpush1.msra.mxu0 0.0
    %500 = vmatprep.subr.mxu0 0.0
    %501 = vmatpush1.msra.mxu0 0.0
    %502 = vmatprep.subr.mxu0 0.0
    %503 = vmatpush1.msra.mxu0 0.0
    %504 = vmatprep.subr.mxu0 0.0
    %505 = vmatpush1.msra.mxu0 0.0
    %506 = vmatprep.subr.mxu0 0.0
    %507 = vmatpush1.msra.mxu0 0.0
    %508 = vmatprep.subr.mxu0 0.0
    %509 = vmatpush1.msra.mxu0 0.0
    %510 = vmatprep.subr.mxu0 0.0
    %511 = vmatpush1.msra.mxu0 0.0
    %512 = vmatprep.subr.mxu0 0.0
    %513 = vmatpush1.msra.mxu0 0.0
    %514 = vmatprep.subr.mxu0 0.0
    %515 = vmatpush1.msra.mxu0 0.0
    %516 = vmatprep.subr.mxu0 0.0
    %517 = vmatpush1.msra.mxu0 0.0
    %518 = vmatprep.subr.mxu0 0.0
    %519 = vmatpush1.msra.mxu0 0.0
    %520 = vmatprep.subr.mxu0 0.0
    %521 = vmatpush1.msra.mxu0 0.0
    %522 = vmatprep.subr.mxu0 0.0
    %523 = vmatpush1.msra.mxu0 0.0
    %524 = vmatprep.subr.mxu0 0.0
    %525 = vmatpush1.msra.mxu0 0.0
    %526 = vmatprep.subr.mxu0 0.0
    %527 = vmatpush1.msra.mxu0 0.0
    %528 = vmatprep.subr.mxu0 0.0
    %529 = vmatpush1.msra.mxu0 0.0
    %530 = vmatprep.subr.mxu0 0.0
    %531 = vmatpush1.msra.mxu0 0.0
    %532 = vmatprep.subr.mxu0 0.0
    %533 = vmatpush1.msra.mxu0 0.0
    %534 = vmatprep.subr.mxu0 0.0
    %535 = vmatpush1.msra.mxu0 0.0
    %536 = vmatprep.subr.mxu0 0.0
    %537 = vmatpush1.msra.mxu0 0.0
    %538 = vmatprep.subr.mxu0 0.0
    %539 = vmatpush1.msra.mxu0 0.0
    %540 = vmatprep.subr.mxu0 0.0
    %541 = vmatpush1.msra.mxu0 0.0
    %542 = vmatprep.subr.mxu0 0.0
    %543 = vmatpush1.msra.mxu0 0.0
    %544 = vmatprep.subr.mxu0 0.0
    %545 = vmatpush1.msra.mxu0 0.0
    %546 = vmatprep.subr.mxu0 0.0
    %547 = vmatpush1.msra.mxu0 0.0
    %548 = vmatprep.subr.mxu0 0.0
    %549 = vmatpush1.msra.mxu0 0.0
    %550 = vmatprep.mubr.f32.mxu0 0.0
    %551 = vmatmul.mubr.f32.gmra.mrb[0].mxu0 %v350
    %v552 = vpop.f32.mrb[0].mxu0
    %v553 = vadd.f32 %v339, %v552
    %v554 = vpop.f32.mrb[0].mxu0
    %v555 = vadd.f32 %v343, %v554
    %556 = vmatprep.mubr.f32.mxu0 0.0
    %557 = vmatmul.mubr.f32.gmra.mrb[0].mxu0 %v353
    %v558 = vpop.f32.mrb[0].mxu0
    %v559 = vadd.f32 %v339, %v558
    %v560 = vpop.f32.mrb[0].mxu0
    %v561 = vadd.f32 %v343, %v560
    %562 = vmatprep.mubr.f32.mxu0 0.0
    %563 = vmatmul.mubr.f32.gmra.mrb[0].mxu0 %v356
    %v564 = vpop.f32.mrb[0].mxu0
    %v565 = vadd.f32 %v339, %v564
    %v566 = vpop.f32.mrb[0].mxu0
    %v567 = vadd.f32 %v343, %v566
    %568 = vmatprep.mubr.f32.mxu0 0.0
    %569 = vmatmul.mubr.f32.gmra.mrb[0].mxu0 %v359
    %v570 = vpop.f32.mrb[0].mxu0
    %v571 = vadd.f32 %v339, %v570
    %v572 = vpop.f32.mrb[0].mxu0
    %v573 = vadd.f32 %v343, %v572
    %574 = vmatprep.mubr.f32.mxu0 0.0
    %575 = vmatmul.mubr.f32.gmra.mrb[0].mxu0 %v362
    %v576 = vpop.f32.mrb[0].mxu0
    %v577 = vadd.f32 %v339, %v576
    %v578 = vpop.f32.mrb[0].mxu0
    %v579 = vadd.f32 %v343, %v578
    %580 = vmatprep.mubr.f32.mxu0 0.0
    %581 = vmatmul.mubr.f32.gmra.mrb[0].mxu0 %v365
    %v582 = vpop.f32.mrb[0].mxu0
    %v583 = vadd.f32 %v339, %v582
    %v584 = vpop.f32.mrb[0].mxu0
    %v585 = vadd.f32 %v343, %v584
    %586 = vmatprep.mubr.f32.mxu0 0.0
    %587 = vmatmul.mubr.f32.gmra.mrb[0].mxu0 %v368
    %v588 = vpop.f32.mrb[0].mxu0
    %v589 = vadd.f32 %v339, %v588
    %v590 = vpop.f32.mrb[0].mxu0
    %v591 = vadd.f32 %v343, %v590
    %592 = vmatprep.mubr.f32.mxu0 0.0
    %593 = vmatmul.mubr.f32.gmra.mrb[0].mxu0 %v371
    %v594 = vpop.f32.mrb[0].mxu0
    %v595 = vadd.f32 %v339, %v594
    %v596 = vpop.f32.mrb[0].mxu0
    %v597 = vadd.f32 %v343, %v596
    %598 = vdwg.mxu0
    %v599 = vld [vmem:[#allocation13] sm:$0xf]
    %v601 = vlaneseq
    %v602 = vshrl.u32 %v601, 7
    %v603 = vsub.s32 0, %v602
    %v604 = vrot.slane %v599, %v603
    %v605 = vlaneseq
    %v606 = vshrl.u32 %v605, 7
    %v607 = vsub.s32 1, %v606
    %v608 = vrot.slane %v599, %v607
    %v609 = vlaneseq
    %v610 = vshrl.u32 %v609, 7
    %v611 = vsub.s32 2, %v610
    %v612 = vrot.slane %v599, %v611
    %v613 = vlaneseq
    %v614 = vshrl.u32 %v613, 7
    %v615 = vsub.s32 3, %v614
    %v616 = vrot.slane %v599, %v615
    %621 = vmatprep.subr.mxu0 %v247
    %622 = vmatpush1.msra.mxu0 %v246
    %623 = vmatprep.subr.mxu0 %v251
    %624 = vmatpush1.msra.mxu0 %v250
    %625 = vmatprep.subr.mxu0 %v255
    %626 = vmatpush1.msra.mxu0 %v254
    %627 = vmatprep.subr.mxu0 %v259
    %628 = vmatpush1.msra.mxu0 %v258
    %629 = vmatprep.subr.mxu0 %v263
    %630 = vmatpush1.msra.mxu0 %v262
    %631 = vmatprep.subr.mxu0 %v267
    %632 = vmatpush1.msra.mxu0 %v266
    %633 = vmatprep.subr.mxu0 %v271
    %634 = vmatpush1.msra.mxu0 %v270
    %635 = vmatprep.subr.mxu0 %v275
    %636 = vmatpush1.msra.mxu0 %v274
    %637 = vmatprep.subr.mxu0 %v279
    %638 = vmatpush1.msra.mxu0 %v278
    %639 = vmatprep.subr.mxu0 %v283
    %640 = vmatpush1.msra.mxu0 %v282
    %641 = vmatprep.subr.mxu0 %v287
    %642 = vmatpush1.msra.mxu0 %v286
    %643 = vmatprep.subr.mxu0 %v291
    %644 = vmatpush1.msra.mxu0 %v290
    %645 = vmatprep.subr.mxu0 %v295
    %646 = vmatpush1.msra.mxu0 %v294
    %647 = vmatprep.subr.mxu0 %v299
    %648 = vmatpush1.msra.mxu0 %v298
    %649 = vmatprep.subr.mxu0 %v303
    %650 = vmatpush1.msra.mxu0 %v302
    %651 = vmatprep.subr.mxu0 %v307
    %652 = vmatpush1.msra.mxu0 %v306
    %653 = vmatprep.subr.mxu0 0.0
    %654 = vmatpush1.msra.mxu0 0.0
    %655 = vmatprep.subr.mxu0 0.0
    %656 = vmatpush1.msra.mxu0 0.0
    %657 = vmatprep.subr.mxu0 0.0
    %658 = vmatpush1.msra.mxu0 0.0
    %659 = vmatprep.subr.mxu0 0.0
    %660 = vmatpush1.msra.mxu0 0.0
    %661 = vmatprep.subr.mxu0 0.0
    %662 = vmatpush1.msra.mxu0 0.0
    %663 = vmatprep.subr.mxu0 0.0
    %664 = vmatpush1.msra.mxu0 0.0
    %665 = vmatprep.subr.mxu0 0.0
    %666 = vmatpush1.msra.mxu0 0.0
    %667 = vmatprep.subr.mxu0 0.0
    %668 = vmatpush1.msra.mxu0 0.0
    %669 = vmatprep.subr.mxu0 0.0
    %670 = vmatpush1.msra.mxu0 0.0
    %671 = vmatprep.subr.mxu0 0.0
    %672 = vmatpush1.msra.mxu0 0.0
    %673 = vmatprep.subr.mxu0 0.0
    %674 = vmatpush1.msra.mxu0 0.0
    %675 = vmatprep.subr.mxu0 0.0
    %676 = vmatpush1.msra.mxu0 0.0
    %677 = vmatprep.subr.mxu0 0.0
    %678 = vmatpush1.msra.mxu0 0.0
    %679 = vmatprep.subr.mxu0 0.0
    %680 = vmatpush1.msra.mxu0 0.0
    %681 = vmatprep.subr.mxu0 0.0
    %682 = vmatpush1.msra.mxu0 0.0
    %683 = vmatprep.subr.mxu0 0.0
    %684 = vmatpush1.msra.mxu0 0.0
    %685 = vmatprep.mubr.f32.mxu0 0.0
    %686 = vmatmul.mubr.f32.gmra.mrb[0].mxu0 0.0
    %v687 = vpop.f32.mrb[0].mxu0
    %v688 = vadd.f32 %v604, %v687
    %v689 = vpop.f32.mrb[0].mxu0
    %v690 = vadd.f32 %v608, %v689
    %691 = vdwg.mxu0
    %692 = vmatprep.subr.mxu0 %v249
    %693 = vmatpush1.msra.mxu0 %v248
    %694 = vmatprep.subr.mxu0 %v253
    %695 = vmatpush1.msra.mxu0 %v252
    %696 = vmatprep.subr.mxu0 %v257
    %697 = vmatpush1.msra.mxu0 %v256
    %698 = vmatprep.subr.mxu0 %v261
    %699 = vmatpush1.msra.mxu0 %v260
    %700 = vmatprep.subr.mxu0 %v265
    %701 = vmatpush1.msra.mxu0 %v264
    %702 = vmatprep.subr.mxu0 %v269
    %703 = vmatpush1.msra.mxu0 %v268
    %704 = vmatprep.subr.mxu0 %v273
    %705 = vmatpush1.msra.mxu0 %v272
    %706 = vmatprep.subr.mxu0 %v277
    %707 = vmatpush1.msra.mxu0 %v276
    %708 = vmatprep.subr.mxu0 %v281
    %709 = vmatpush1.msra.mxu0 %v280
    %710 = vmatprep.subr.mxu0 %v285
    %711 = vmatpush1.msra.mxu0 %v284
    %712 = vmatprep.subr.mxu0 %v289
    %713 = vmatpush1.msra.mxu0 %v288
    %714 = vmatprep.subr.mxu0 %v293
    %715 = vmatpush1.msra.mxu0 %v292
    %716 = vmatprep.subr.mxu0 %v297
    %717 = vmatpush1.msra.mxu0 %v296
    %718 = vmatprep.subr.mxu0 %v301
    %719 = vmatpush1.msra.mxu0 %v300
    %720 = vmatprep.subr.mxu0 %v305
    %721 = vmatpush1.msra.mxu0 %v304
    %722 = vmatprep.subr.mxu0 %v309
    %723 = vmatpush1.msra.mxu0 %v308
    %724 = vmatprep.subr.mxu0 0.0
    %725 = vmatpush1.msra.mxu0 0.0
    %726 = vmatprep.subr.mxu0 0.0
    %727 = vmatpush1.msra.mxu0 0.0
    %728 = vmatprep.subr.mxu0 0.0
    %729 = vmatpush1.msra.mxu0 0.0
    %730 = vmatprep.subr.mxu0 0.0
    %731 = vmatpush1.msra.mxu0 0.0
    %732 = vmatprep.subr.mxu0 0.0
    %733 = vmatpush1.msra.mxu0 0.0
    %734 = vmatprep.subr.mxu0 0.0
    %735 = vmatpush1.msra.mxu0 0.0
    %736 = vmatprep.subr.mxu0 0.0
    %737 = vmatpush1.msra.mxu0 0.0
    %738 = vmatprep.subr.mxu0 0.0
    %739 = vmatpush1.msra.mxu0 0.0
    %740 = vmatprep.subr.mxu0 0.0
    %741 = vmatpush1.msra.mxu0 0.0
    %742 = vmatprep.subr.mxu0 0.0
    %743 = vmatpush1.msra.mxu0 0.0
    %744 = vmatprep.subr.mxu0 0.0
    %745 = vmatpush1.msra.mxu0 0.0
    %746 = vmatprep.subr.mxu0 0.0
    %747 = vmatpush1.msra.mxu0 0.0
    %748 = vmatprep.subr.mxu0 0.0
    %749 = vmatpush1.msra.mxu0 0.0
    %750 = vmatprep.subr.mxu0 0.0
    %751 = vmatpush1.msra.mxu0 0.0
    %752 = vmatprep.subr.mxu0 0.0
    %753 = vmatpush1.msra.mxu0 0.0
    %754 = vmatprep.subr.mxu0 0.0
    %755 = vmatpush1.msra.mxu0 0.0
    %756 = vmatprep.mubr.f32.mxu0 0.0
    %757 = vmatmul.mubr.f32.gmra.mrb[0].mxu0 0.0
    %v758 = vpop.f32.mrb[0].mxu0
    %v759 = vadd.f32 %v612, %v758
    %v760 = vpop.f32.mrb[0].mxu0
    %v761 = vadd.f32 %v616, %v760
    %762 = vdwg.mxu0
    %763 = vmatprep.subr.mxu0 %v119
    %764 = vmatpush1.msra.mxu0 %v118
    %765 = vmatprep.subr.mxu0 %v123
    %766 = vmatpush1.msra.mxu0 %v122
    %767 = vmatprep.subr.mxu0 %v127
    %768 = vmatpush1.msra.mxu0 %v126
    %769 = vmatprep.subr.mxu0 %v131
    %770 = vmatpush1.msra.mxu0 %v130
    %771 = vmatprep.subr.mxu0 %v135
    %772 = vmatpush1.msra.mxu0 %v134
    %773 = vmatprep.subr.mxu0 %v139
    %774 = vmatpush1.msra.mxu0 %v138
    %775 = vmatprep.subr.mxu0 %v143
    %776 = vmatpush1.msra.mxu0 %v142
    %777 = vmatprep.subr.mxu0 %v147
    %778 = vmatpush1.msra.mxu0 %v146
    %779 = vmatprep.subr.mxu0 %v151
    %780 = vmatpush1.msra.mxu0 %v150
    %781 = vmatprep.subr.mxu0 %v155
    %782 = vmatpush1.msra.mxu0 %v154
    %783 = vmatprep.subr.mxu0 %v159
    %784 = vmatpush1.msra.mxu0 %v158
    %785 = vmatprep.subr.mxu0 %v163
    %786 = vmatpush1.msra.mxu0 %v162
    %787 = vmatprep.subr.mxu0 %v167
    %788 = vmatpush1.msra.mxu0 %v166
    %789 = vmatprep.subr.mxu0 %v171
    %790 = vmatpush1.msra.mxu0 %v170
    %791 = vmatprep.subr.mxu0 %v175
    %792 = vmatpush1.msra.mxu0 %v174
    %793 = vmatprep.subr.mxu0 %v179
    %794 = vmatpush1.msra.mxu0 %v178
    %795 = vmatprep.subr.mxu0 0.0
    %796 = vmatpush1.msra.mxu0 0.0
    %797 = vmatprep.subr.mxu0 0.0
    %798 = vmatpush1.msra.mxu0 0.0
    %799 = vmatprep.subr.mxu0 0.0
    %800 = vmatpush1.msra.mxu0 0.0
    %801 = vmatprep.subr.mxu0 0.0
    %802 = vmatpush1.msra.mxu0 0.0
    %803 = vmatprep.subr.mxu0 0.0
    %804 = vmatpush1.msra.mxu0 0.0
    %805 = vmatprep.subr.mxu0 0.0
    %806 = vmatpush1.msra.mxu0 0.0
    %807 = vmatprep.subr.mxu0 0.0
    %808 = vmatpush1.msra.mxu0 0.0
    %809 = vmatprep.subr.mxu0 0.0
    %810 = vmatpush1.msra.mxu0 0.0
    %811 = vmatprep.subr.mxu0 0.0
    %812 = vmatpush1.msra.mxu0 0.0
    %813 = vmatprep.subr.mxu0 0.0
    %814 = vmatpush1.msra.mxu0 0.0
    %815 = vmatprep.subr.mxu0 0.0
    %816 = vmatpush1.msra.mxu0 0.0
    %817 = vmatprep.subr.mxu0 0.0
    %818 = vmatpush1.msra.mxu0 0.0
    %819 = vmatprep.subr.mxu0 0.0
    %820 = vmatpush1.msra.mxu0 0.0
    %821 = vmatprep.subr.mxu0 0.0
    %822 = vmatpush1.msra.mxu0 0.0
    %823 = vmatprep.subr.mxu0 0.0
    %824 = vmatpush1.msra.mxu0 0.0
    %825 = vmatprep.subr.mxu0 0.0
    %826 = vmatpush1.msra.mxu0 0.0
    %827 = vmatprep.mubr.f32.mxu0 0.0
    %828 = vmatmul.mubr.f32.gmra.mrb[0].mxu0 0.0
    %v829 = vpop.f32.mrb[0].mxu0
    %v830 = vadd.f32 0.0, %v829
    %v831 = vpop.f32.mrb[0].mxu0
    %v832 = vadd.f32 0.0, %v831
    %833 = vdwg.mxu0
    %834 = vmatprep.subr.mxu0 %v121
    %835 = vmatpush1.msra.mxu0 %v120
    %836 = vmatprep.subr.mxu0 %v125
    %837 = vmatpush1.msra.mxu0 %v124
    %838 = vmatprep.subr.mxu0 %v129
    %839 = vmatpush1.msra.mxu0 %v128
    %840 = vmatprep.subr.mxu0 %v133
    %841 = vmatpush1.msra.mxu0 %v132
    %842 = vmatprep.subr.mxu0 %v137
    %843 = vmatpush1.msra.mxu0 %v136
    %844 = vmatprep.subr.mxu0 %v141
    %845 = vmatpush1.msra.mxu0 %v140
    %846 = vmatprep.subr.mxu0 %v145
    %847 = vmatpush1.msra.mxu0 %v144
    %848 = vmatprep.subr.mxu0 %v149
    %849 = vmatpush1.msra.mxu0 %v148
    %850 = vmatprep.subr.mxu0 %v153
    %851 = vmatpush1.msra.mxu0 %v152
    %852 = vmatprep.subr.mxu0 %v157
    %853 = vmatpush1.msra.mxu0 %v156
    %854 = vmatprep.subr.mxu0 %v161
    %855 = vmatpush1.msra.mxu0 %v160
    %856 = vmatprep.subr.mxu0 %v165
    %857 = vmatpush1.msra.mxu0 %v164
    %858 = vmatprep.subr.mxu0 %v169
    %859 = vmatpush1.msra.mxu0 %v168
    %860 = vmatprep.subr.mxu0 %v173
    %861 = vmatpush1.msra.mxu0 %v172
    %862 = vmatprep.subr.mxu0 %v177
    %863 = vmatpush1.msra.mxu0 %v176
    %864 = vmatprep.subr.mxu0 %v181
    %865 = vmatpush1.msra.mxu0 %v180
    %866 = vmatprep.subr.mxu0 0.0
    %867 = vmatpush1.msra.mxu0 0.0
    %868 = vmatprep.subr.mxu0 0.0
    %869 = vmatpush1.msra.mxu0 0.0
    %870 = vmatprep.subr.mxu0 0.0
    %871 = vmatpush1.msra.mxu0 0.0
    %872 = vmatprep.subr.mxu0 0.0
    %873 = vmatpush1.msra.mxu0 0.0
    %874 = vmatprep.subr.mxu0 0.0
    %875 = vmatpush1.msra.mxu0 0.0
    %876 = vmatprep.subr.mxu0 0.0
    %877 = vmatpush1.msra.mxu0 0.0
    %878 = vmatprep.subr.mxu0 0.0
    %879 = vmatpush1.msra.mxu0 0.0
    %880 = vmatprep.subr.mxu0 0.0
    %881 = vmatpush1.msra.mxu0 0.0
    %882 = vmatprep.subr.mxu0 0.0
    %883 = vmatpush1.msra.mxu0 0.0
    %884 = vmatprep.subr.mxu0 0.0
    %885 = vmatpush1.msra.mxu0 0.0
    %886 = vmatprep.subr.mxu0 0.0
    %887 = vmatpush1.msra.mxu0 0.0
    %888 = vmatprep.subr.mxu0 0.0
    %889 = vmatpush1.msra.mxu0 0.0
    %890 = vmatprep.subr.mxu0 0.0
    %891 = vmatpush1.msra.mxu0 0.0
    %892 = vmatprep.subr.mxu0 0.0
    %893 = vmatpush1.msra.mxu0 0.0
    %894 = vmatprep.subr.mxu0 0.0
    %895 = vmatpush1.msra.mxu0 0.0
    %896 = vmatprep.subr.mxu0 0.0
    %897 = vmatpush1.msra.mxu0 0.0
    %898 = vmatprep.mubr.f32.mxu0 0.0
    %899 = vmatmul.mubr.f32.gmra.mrb[0].mxu0 0.0
    %v900 = vpop.f32.mrb[0].mxu0
    %v901 = vadd.f32 0.0, %v900
    %v902 = vpop.f32.mrb[0].mxu0
    %v903 = vadd.f32 0.0, %v902
    %904 = vdwg.mxu0
    %v905 = vadd.f32 %v440, %v830
    %v906 = vadd.f32 %v442, %v832
    %v907 = vadd.f32 %v553, %v901
    %v908 = vadd.f32 %v555, %v903
    %v909 = vxor.u32 %v905, 2147483648
    %v910 = vxor.u32 %v906, 2147483648
    %v911 = vxor.u32 %v908, 2147483648
    %v912 = vmul.f32 %v909, 1.442695
    %v913 = vpow.pop %v912
    %v914 = vmul.f32 %v910, 1.442695
    %v915 = vpow.pop %v914
    %v916 = vmul.f32 %v911, 1.442695
    %v917 = vpow.pop %v916
    %v918 = vadd.f32 %v913, 1.0
    %v919 = vadd.f32 %v915, 1.0
    %v920 = vadd.f32 %v917, 1.0
    %v921 = vrcp.pop %v918
    %v922 = vmul.f32 1.0, %v921
    %v923 = vrcp.pop %v919
    %v924 = vmul.f32 1.0, %v923
    %v925 = vrcp.pop %v920
    %v926 = vmul.f32 1.0, %v925
    %v927 = vtanh.pop %v907
    %v928 = vmul.f32 %v924, 0.0
    %v929 = vmul.f32 %v922, %v927
    %v930 = vadd.f32 %v928, %v929
    %v931 = vtanh.pop %v930
    %v932 = vmul.f32 %v926, %v931
    %933 = vmatprep.subr.mxu0 %v183
    %934 = vmatpush1.msra.mxu0 %v182
    %935 = vmatprep.subr.mxu0 %v187
    %936 = vmatpush1.msra.mxu0 %v186
    %937 = vmatprep.subr.mxu0 %v191
    %938 = vmatpush1.msra.mxu0 %v190
    %939 = vmatprep.subr.mxu0 %v195
    %940 = vmatpush1.msra.mxu0 %v194
    %941 = vmatprep.subr.mxu0 %v199
    %942 = vmatpush1.msra.mxu0 %v198
    %943 = vmatprep.subr.mxu0 %v203
    %944 = vmatpush1.msra.mxu0 %v202
    %945 = vmatprep.subr.mxu0 %v207
    %946 = vmatpush1.msra.mxu0 %v206
    %947 = vmatprep.subr.mxu0 %v211
    %948 = vmatpush1.msra.mxu0 %v210
    %949 = vmatprep.subr.mxu0 %v215
    %950 = vmatpush1.msra.mxu0 %v214
    %951 = vmatprep.subr.mxu0 %v219
    %952 = vmatpush1.msra.mxu0 %v218
    %953 = vmatprep.subr.mxu0 %v223
    %954 = vmatpush1.msra.mxu0 %v222
    %955 = vmatprep.subr.mxu0 %v227
    %956 = vmatpush1.msra.mxu0 %v226
    %957 = vmatprep.subr.mxu0 %v231
    %958 = vmatpush1.msra.mxu0 %v230
    %959 = vmatprep.subr.mxu0 %v235
    %960 = vmatpush1.msra.mxu0 %v234
    %961 = vmatprep.subr.mxu0 %v239
    %962 = vmatpush1.msra.mxu0 %v238
    %963 = vmatprep.subr.mxu0 %v243
    %964 = vmatpush1.msra.mxu0 %v242
    %965 = vmatprep.subr.mxu0 0.0
    %966 = vmatpush1.msra.mxu0 0.0
    %967 = vmatprep.subr.mxu0 0.0
    %968 = vmatpush1.msra.mxu0 0.0
    %969 = vmatprep.subr.mxu0 0.0
    %970 = vmatpush1.msra.mxu0 0.0
    %971 = vmatprep.subr.mxu0 0.0
    %972 = vmatpush1.msra.mxu0 0.0
    %973 = vmatprep.subr.mxu0 0.0
    %974 = vmatpush1.msra.mxu0 0.0
    %975 = vmatprep.subr.mxu0 0.0
    %976 = vmatpush1.msra.mxu0 0.0
    %977 = vmatprep.subr.mxu0 0.0
    %978 = vmatpush1.msra.mxu0 0.0
    %979 = vmatprep.subr.mxu0 0.0
    %980 = vmatpush1.msra.mxu0 0.0
    %981 = vmatprep.subr.mxu0 0.0
    %982 = vmatpush1.msra.mxu0 0.0
    %983 = vmatprep.subr.mxu0 0.0
    %984 = vmatpush1.msra.mxu0 0.0
    %985 = vmatprep.subr.mxu0 0.0
    %986 = vmatpush1.msra.mxu0 0.0
    %987 = vmatprep.subr.mxu0 0.0
    %988 = vmatpush1.msra.mxu0 0.0
    %989 = vmatprep.subr.mxu0 0.0
    %990 = vmatpush1.msra.mxu0 0.0
    %991 = vmatprep.subr.mxu0 0.0
    %992 = vmatpush1.msra.mxu0 0.0
    %993 = vmatprep.subr.mxu0 0.0
    %994 = vmatpush1.msra.mxu0 0.0
    %995 = vmatprep.subr.mxu0 0.0
    %996 = vmatpush1.msra.mxu0 0.0
    %997 = vmatprep.mubr.f32.mxu0 0.0
    %998 = vmatmul.mubr.f32.gmra.mrb[0].mxu0 %v932
    %v999 = vpop.f32.mrb[0].mxu0
    %v1000 = vadd.f32 0.0, %v999
    %v1001 = vpop.f32.mrb[0].mxu0
    %v1002 = vadd.f32 0.0, %v1001
    %1003 = vdwg.mxu0
    %1004 = vmatprep.subr.mxu0 %v185
    %1005 = vmatpush1.msra.mxu0 %v184
    %1006 = vmatprep.subr.mxu0 %v189
    %1007 = vmatpush1.msra.mxu0 %v188
    %1008 = vmatprep.subr.mxu0 %v193
    %1009 = vmatpush1.msra.mxu0 %v192
    %1010 = vmatprep.subr.mxu0 %v197
    %1011 = vmatpush1.msra.mxu0 %v196
    %1012 = vmatprep.subr.mxu0 %v201
    %1013 = vmatpush1.msra.mxu0 %v200
    %1014 = vmatprep.subr.mxu0 %v205
    %1015 = vmatpush1.msra.mxu0 %v204
    %1016 = vmatprep.subr.mxu0 %v209
    %1017 = vmatpush1.msra.mxu0 %v208
    %1018 = vmatprep.subr.mxu0 %v213
    %1019 = vmatpush1.msra.mxu0 %v212
    %1020 = vmatprep.subr.mxu0 %v217
    %1021 = vmatpush1.msra.mxu0 %v216
    %1022 = vmatprep.subr.mxu0 %v221
    %1023 = vmatpush1.msra.mxu0 %v220
    %1024 = vmatprep.subr.mxu0 %v225
    %1025 = vmatpush1.msra.mxu0 %v224
    %1026 = vmatprep.subr.mxu0 %v229
    %1027 = vmatpush1.msra.mxu0 %v228
    %1028 = vmatprep.subr.mxu0 %v233
    %1029 = vmatpush1.msra.mxu0 %v232
    %1030 = vmatprep.subr.mxu0 %v237
    %1031 = vmatpush1.msra.mxu0 %v236
    %1032 = vmatprep.subr.mxu0 %v241
    %1033 = vmatpush1.msra.mxu0 %v240
    %1034 = vmatprep.subr.mxu0 %v245
    %1035 = vmatpush1.msra.mxu0 %v244
    %1036 = vmatprep.subr.mxu0 0.0
    %1037 = vmatpush1.msra.mxu0 0.0
    %1038 = vmatprep.subr.mxu0 0.0
    %1039 = vmatpush1.msra.mxu0 0.0
    %1040 = vmatprep.subr.mxu0 0.0
    %1041 = vmatpush1.msra.mxu0 0.0
    %1042 = vmatprep.subr.mxu0 0.0
    %1043 = vmatpush1.msra.mxu0 0.0
    %1044 = vmatprep.subr.mxu0 0.0
    %1045 = vmatpush1.msra.mxu0 0.0
    %1046 = vmatprep.subr.mxu0 0.0
    %1047 = vmatpush1.msra.mxu0 0.0
    %1048 = vmatprep.subr.mxu0 0.0
    %1049 = vmatpush1.msra.mxu0 0.0
    %1050 = vmatprep.subr.mxu0 0.0
    %1051 = vmatpush1.msra.mxu0 0.0
    %1052 = vmatprep.subr.mxu0 0.0
    %1053 = vmatpush1.msra.mxu0 0.0
    %1054 = vmatprep.subr.mxu0 0.0
    %1055 = vmatpush1.msra.mxu0 0.0
    %1056 = vmatprep.subr.mxu0 0.0
    %1057 = vmatpush1.msra.mxu0 0.0
    %1058 = vmatprep.subr.mxu0 0.0
    %1059 = vmatpush1.msra.mxu0 0.0
    %1060 = vmatprep.subr.mxu0 0.0
    %1061 = vmatpush1.msra.mxu0 0.0
    %1062 = vmatprep.subr.mxu0 0.0
    %1063 = vmatpush1.msra.mxu0 0.0
    %1064 = vmatprep.subr.mxu0 0.0
    %1065 = vmatpush1.msra.mxu0 0.0
    %1066 = vmatprep.subr.mxu0 0.0
    %1067 = vmatpush1.msra.mxu0 0.0
    %1068 = vmatprep.mubr.f32.mxu0 0.0
    %1069 = vmatmul.mubr.f32.gmra.mrb[0].mxu0 %v932
    %v1070 = vpop.f32.mrb[0].mxu0
    %v1071 = vadd.f32 0.0, %v1070
    %v1072 = vpop.f32.mrb[0].mxu0
    %v1073 = vadd.f32 0.0, %v1072
    %1074 = vdwg.mxu0
    %v1075 = vadd.f32 %v688, %v1000
    %v1076 = vadd.f32 %v690, %v1002
    %v1077 = vadd.f32 %v759, %v1071
    %v1078 = vadd.f32 %v761, %v1073
    %v1079 = vxor.u32 %v1075, 2147483648
    %v1080 = vxor.u32 %v1076, 2147483648
    %v1081 = vxor.u32 %v1078, 2147483648
    %v1082 = vmul.f32 %v1079, 1.442695
    %v1083 = vpow.pop %v1082
    %v1084 = vmul.f32 %v1080, 1.442695
    %v1085 = vpow.pop %v1084
    %v1086 = vmul.f32 %v1081, 1.442695
    %v1087 = vpow.pop %v1086
    %v1088 = vadd.f32 %v1083, 1.0
    %v1089 = vadd.f32 %v1085, 1.0
    %v1090 = vadd.f32 %v1087, 1.0
    %v1091 = vrcp.pop %v1088
    %v1092 = vmul.f32 1.0, %v1091
    %v1093 = vrcp.pop %v1089
    %v1094 = vmul.f32 1.0, %v1093
    %v1095 = vrcp.pop %v1090
    %v1096 = vmul.f32 1.0, %v1095
    %v1097 = vtanh.pop %v1077
    %v1098 = vmul.f32 %v1094, 0.0
    %v1099 = vmul.f32 %v1092, %v1097
    %v1100 = vadd.f32 %v1098, %v1099
    %v1101 = vtanh.pop %v1100
    %v1102 = vmul.f32 %v1096, %v1101
    %1103 = vmatprep.subr.mxu0 %v247
    %1104 = vmatpush1.msra.mxu0 %v246
    %1105 = vmatprep.subr.mxu0 %v251
    %1106 = vmatpush1.msra.mxu0 %v250
    %1107 = vmatprep.subr.mxu0 %v255
    %1108 = vmatpush1.msra.mxu0 %v254
    %1109 = vmatprep.subr.mxu0 %v259
    %1110 = vmatpush1.msra.mxu0 %v258
    %1111 = vmatprep.subr.mxu0 %v263
    %1112 = vmatpush1.msra.mxu0 %v262
    %1113 = vmatprep.subr.mxu0 %v267
    %1114 = vmatpush1.msra.mxu0 %v266
    %1115 = vmatprep.subr.mxu0 %v271
    %1116 = vmatpush1.msra.mxu0 %v270
    %1117 = vmatprep.subr.mxu0 %v275
    %1118 = vmatpush1.msra.mxu0 %v274
    %1119 = vmatprep.subr.mxu0 %v279
    %1120 = vmatpush1.msra.mxu0 %v278
    %1121 = vmatprep.subr.mxu0 %v283
    %1122 = vmatpush1.msra.mxu0 %v282
    %1123 = vmatprep.subr.mxu0 %v287
    %1124 = vmatpush1.msra.mxu0 %v286
    %1125 = vmatprep.subr.mxu0 %v291
    %1126 = vmatpush1.msra.mxu0 %v290
    %1127 = vmatprep.subr.mxu0 %v295
    %1128 = vmatpush1.msra.mxu0 %v294
    %1129 = vmatprep.subr.mxu0 %v299
    %1130 = vmatpush1.msra.mxu0 %v298
    %1131 = vmatprep.subr.mxu0 %v303
    %1132 = vmatpush1.msra.mxu0 %v302
    %1133 = vmatprep.subr.mxu0 %v307
    %1134 = vmatpush1.msra.mxu0 %v306
    %1135 = vmatprep.subr.mxu0 0.0
    %1136 = vmatpush1.msra.mxu0 0.0
    %1137 = vmatprep.subr.mxu0 0.0
    %1138 = vmatpush1.msra.mxu0 0.0
    %1139 = vmatprep.subr.mxu0 0.0
    %1140 = vmatpush1.msra.mxu0 0.0
    %1141 = vmatprep.subr.mxu0 0.0
    %1142 = vmatpush1.msra.mxu0 0.0
    %1143 = vmatprep.subr.mxu0 0.0
    %1144 = vmatpush1.msra.mxu0 0.0
    %1145 = vmatprep.subr.mxu0 0.0
    %1146 = vmatpush1.msra.mxu0 0.0
    %1147 = vmatprep.subr.mxu0 0.0
    %1148 = vmatpush1.msra.mxu0 0.0
    %1149 = vmatprep.subr.mxu0 0.0
    %1150 = vmatpush1.msra.mxu0 0.0
    %1151 = vmatprep.subr.mxu0 0.0
    %1152 = vmatpush1.msra.mxu0 0.0
    %1153 = vmatprep.subr.mxu0 0.0
    %1154 = vmatpush1.msra.mxu0 0.0
    %1155 = vmatprep.subr.mxu0 0.0
    %1156 = vmatpush1.msra.mxu0 0.0
    %1157 = vmatprep.subr.mxu0 0.0
    %1158 = vmatpush1.msra.mxu0 0.0
    %1159 = vmatprep.subr.mxu0 0.0
    %1160 = vmatpush1.msra.mxu0 0.0
    %1161 = vmatprep.subr.mxu0 0.0
    %1162 = vmatpush1.msra.mxu0 0.0
    %1163 = vmatprep.subr.mxu0 0.0
    %1164 = vmatpush1.msra.mxu0 0.0
    %1165 = vmatprep.subr.mxu0 0.0
    %1166 = vmatpush1.msra.mxu0 0.0
    %1167 = vmatprep.mubr.f32.mxu0 0.0
    %1168 = vmatmul.mubr.f32.gmra.mrb[0].mxu0 %v1102
    %v1169 = vpop.f32.mrb[0].mxu0
    %v1170 = vadd.f32 %v604, %v1169
    %v1171 = vpop.f32.mrb[0].mxu0
    %v1172 = vadd.f32 %v608, %v1171
    %1173 = vdwg.mxu0
    %1174 = vmatprep.subr.mxu0 %v249
    %1175 = vmatpush1.msra.mxu0 %v248
    %1176 = vmatprep.subr.mxu0 %v253
    %1177 = vmatpush1.msra.mxu0 %v252
    %1178 = vmatprep.subr.mxu0 %v257
    %1179 = vmatpush1.msra.mxu0 %v256
    %1180 = vmatprep.subr.mxu0 %v261
    %1181 = vmatpush1.msra.mxu0 %v260
    %1182 = vmatprep.subr.mxu0 %v265
    %1183 = vmatpush1.msra.mxu0 %v264
    %1184 = vmatprep.subr.mxu0 %v269
    %1185 = vmatpush1.msra.mxu0 %v268
    %1186 = vmatprep.subr.mxu0 %v273
    %1187 = vmatpush1.msra.mxu0 %v272
    %1188 = vmatprep.subr.mxu0 %v277
    %1189 = vmatpush1.msra.mxu0 %v276
    %1190 = vmatprep.subr.mxu0 %v281
    %1191 = vmatpush1.msra.mxu0 %v280
    %1192 = vmatprep.subr.mxu0 %v285
    %1193 = vmatpush1.msra.mxu0 %v284
    %1194 = vmatprep.subr.mxu0 %v289
    %1195 = vmatpush1.msra.mxu0 %v288
    %1196 = vmatprep.subr.mxu0 %v293
    %1197 = vmatpush1.msra.mxu0 %v292
    %1198 = vmatprep.subr.mxu0 %v297
    %1199 = vmatpush1.msra.mxu0 %v296
    %1200 = vmatprep.subr.mxu0 %v301
    %1201 = vmatpush1.msra.mxu0 %v300
    %1202 = vmatprep.subr.mxu0 %v305
    %1203 = vmatpush1.msra.mxu0 %v304
    %1204 = vmatprep.subr.mxu0 %v309
    %1205 = vmatpush1.msra.mxu0 %v308
    %1206 = vmatprep.subr.mxu0 0.0
    %1207 = vmatpush1.msra.mxu0 0.0
    %1208 = vmatprep.subr.mxu0 0.0
    %1209 = vmatpush1.msra.mxu0 0.0
    %1210 = vmatprep.subr.mxu0 0.0
    %1211 = vmatpush1.msra.mxu0 0.0
    %1212 = vmatprep.subr.mxu0 0.0
    %1213 = vmatpush1.msra.mxu0 0.0
    %1214 = vmatprep.subr.mxu0 0.0
    %1215 = vmatpush1.msra.mxu0 0.0
    %1216 = vmatprep.subr.mxu0 0.0
    %1217 = vmatpush1.msra.mxu0 0.0
    %1218 = vmatprep.subr.mxu0 0.0
    %1219 = vmatpush1.msra.mxu0 0.0
    %1220 = vmatprep.subr.mxu0 0.0
    %1221 = vmatpush1.msra.mxu0 0.0
    %1222 = vmatprep.subr.mxu0 0.0
    %1223 = vmatpush1.msra.mxu0 0.0
    %1224 = vmatprep.subr.mxu0 0.0
    %1225 = vmatpush1.msra.mxu0 0.0
    %1226 = vmatprep.subr.mxu0 0.0
    %1227 = vmatpush1.msra.mxu0 0.0
    %1228 = vmatprep.subr.mxu0 0.0
    %1229 = vmatpush1.msra.mxu0 0.0
    %1230 = vmatprep.subr.mxu0 0.0
    %1231 = vmatpush1.msra.mxu0 0.0
    %1232 = vmatprep.subr.mxu0 0.0
    %1233 = vmatpush1.msra.mxu0 0.0
    %1234 = vmatprep.subr.mxu0 0.0
    %1235 = vmatpush1.msra.mxu0 0.0
    %1236 = vmatprep.subr.mxu0 0.0
    %1237 = vmatpush1.msra.mxu0 0.0
    %1238 = vmatprep.mubr.f32.mxu0 0.0
    %1239 = vmatmul.mubr.f32.gmra.mrb[0].mxu0 %v1102
    %v1240 = vpop.f32.mrb[0].mxu0
    %v1241 = vadd.f32 %v612, %v1240
    %v1242 = vpop.f32.mrb[0].mxu0
    %v1243 = vadd.f32 %v616, %v1242
    %1244 = vdwg.mxu0
    %1245 = vmatprep.subr.mxu0 %v119
    %1246 = vmatpush1.msra.mxu0 %v118
    %1247 = vmatprep.subr.mxu0 %v123
    %1248 = vmatpush1.msra.mxu0 %v122
    %1249 = vmatprep.subr.mxu0 %v127
    %1250 = vmatpush1.msra.mxu0 %v126
    %1251 = vmatprep.subr.mxu0 %v131
    %1252 = vmatpush1.msra.mxu0 %v130
    %1253 = vmatprep.subr.mxu0 %v135
    %1254 = vmatpush1.msra.mxu0 %v134
    %1255 = vmatprep.subr.mxu0 %v139
    %1256 = vmatpush1.msra.mxu0 %v138
    %1257 = vmatprep.subr.mxu0 %v143
    %1258 = vmatpush1.msra.mxu0 %v142
    %1259 = vmatprep.subr.mxu0 %v147
    %1260 = vmatpush1.msra.mxu0 %v146
    %1261 = vmatprep.subr.mxu0 %v151
    %1262 = vmatpush1.msra.mxu0 %v150
    %1263 = vmatprep.subr.mxu0 %v155
    %1264 = vmatpush1.msra.mxu0 %v154
    %1265 = vmatprep.subr.mxu0 %v159
    %1266 = vmatpush1.msra.mxu0 %v158
    %1267 = vmatprep.subr.mxu0 %v163
    %1268 = vmatpush1.msra.mxu0 %v162
    %1269 = vmatprep.subr.mxu0 %v167
    %1270 = vmatpush1.msra.mxu0 %v166
    %1271 = vmatprep.subr.mxu0 %v171
    %1272 = vmatpush1.msra.mxu0 %v170
    %1273 = vmatprep.subr.mxu0 %v175
    %1274 = vmatpush1.msra.mxu0 %v174
    %1275 = vmatprep.subr.mxu0 %v179
    %1276 = vmatpush1.msra.mxu0 %v178
    %1277 = vmatprep.subr.mxu0 0.0
    %1278 = vmatpush1.msra.mxu0 0.0
    %1279 = vmatprep.subr.mxu0 0.0
    %1280 = vmatpush1.msra.mxu0 0.0
    %1281 = vmatprep.subr.mxu0 0.0
    %1282 = vmatpush1.msra.mxu0 0.0
    %1283 = vmatprep.subr.mxu0 0.0
    %1284 = vmatpush1.msra.mxu0 0.0
    %1285 = vmatprep.subr.mxu0 0.0
    %1286 = vmatpush1.msra.mxu0 0.0
    %1287 = vmatprep.subr.mxu0 0.0
    %1288 = vmatpush1.msra.mxu0 0.0
    %1289 = vmatprep.subr.mxu0 0.0
    %1290 = vmatpush1.msra.mxu0 0.0
    %1291 = vmatprep.subr.mxu0 0.0
    %1292 = vmatpush1.msra.mxu0 0.0
    %1293 = vmatprep.subr.mxu0 0.0
    %1294 = vmatpush1.msra.mxu0 0.0
    %1295 = vmatprep.subr.mxu0 0.0
    %1296 = vmatpush1.msra.mxu0 0.0
    %1297 = vmatprep.subr.mxu0 0.0
    %1298 = vmatpush1.msra.mxu0 0.0
    %1299 = vmatprep.subr.mxu0 0.0
    %1300 = vmatpush1.msra.mxu0 0.0
    %1301 = vmatprep.subr.mxu0 0.0
    %1302 = vmatpush1.msra.mxu0 0.0
    %1303 = vmatprep.subr.mxu0 0.0
    %1304 = vmatpush1.msra.mxu0 0.0
    %1305 = vmatprep.subr.mxu0 0.0
    %1306 = vmatpush1.msra.mxu0 0.0
    %1307 = vmatprep.subr.mxu0 0.0
    %1308 = vmatpush1.msra.mxu0 0.0
    %1309 = vmatprep.mubr.f32.mxu0 0.0
    %1310 = vmatmul.mubr.f32.gmra.mrb[0].mxu0 %v932
    %v1311 = vpop.f32.mrb[0].mxu0
    %v1312 = vadd.f32 0.0, %v1311
    %v1313 = vpop.f32.mrb[0].mxu0
    %v1314 = vadd.f32 0.0, %v1313
    %1315 = vdwg.mxu0
    %1316 = vmatprep.subr.mxu0 %v121
    %1317 = vmatpush1.msra.mxu0 %v120
    %1318 = vmatprep.subr.mxu0 %v125
    %1319 = vmatpush1.msra.mxu0 %v124
    %1320 = vmatprep.subr.mxu0 %v129
    %1321 = vmatpush1.msra.mxu0 %v128
    %1322 = vmatprep.subr.mxu0 %v133
    %1323 = vmatpush1.msra.mxu0 %v132
    %1324 = vmatprep.subr.mxu0 %v137
    %1325 = vmatpush1.msra.mxu0 %v136
    %1326 = vmatprep.subr.mxu0 %v141
    %1327 = vmatpush1.msra.mxu0 %v140
    %1328 = vmatprep.subr.mxu0 %v145
    %1329 = vmatpush1.msra.mxu0 %v144
    %1330 = vmatprep.subr.mxu0 %v149
    %1331 = vmatpush1.msra.mxu0 %v148
    %1332 = vmatprep.subr.mxu0 %v153
    %1333 = vmatpush1.msra.mxu0 %v152
    %1334 = vmatprep.subr.mxu0 %v157
    %1335 = vmatpush1.msra.mxu0 %v156
    %1336 = vmatprep.subr.mxu0 %v161
    %1337 = vmatpush1.msra.mxu0 %v160
    %1338 = vmatprep.subr.mxu0 %v165
    %1339 = vmatpush1.msra.mxu0 %v164
    %1340 = vmatprep.subr.mxu0 %v169
    %1341 = vmatpush1.msra.mxu0 %v168
    %1342 = vmatprep.subr.mxu0 %v173
    %1343 = vmatpush1.msra.mxu0 %v172
    %1344 = vmatprep.subr.mxu0 %v177
    %1345 = vmatpush1.msra.mxu0 %v176
    %1346 = vmatprep.subr.mxu0 %v181
    %1347 = vmatpush1.msra.mxu0 %v180
    %1348 = vmatprep.subr.mxu0 0.0
    %1349 = vmatpush1.msra.mxu0 0.0
    %1350 = vmatprep.subr.mxu0 0.0
    %1351 = vmatpush1.msra.mxu0 0.0
    %1352 = vmatprep.subr.mxu0 0.0
    %1353 = vmatpush1.msra.mxu0 0.0
    %1354 = vmatprep.subr.mxu0 0.0
    %1355 = vmatpush1.msra.mxu0 0.0
    %1356 = vmatprep.subr.mxu0 0.0
    %1357 = vmatpush1.msra.mxu0 0.0
    %1358 = vmatprep.subr.mxu0 0.0
    %1359 = vmatpush1.msra.mxu0 0.0
    %1360 = vmatprep.subr.mxu0 0.0
    %1361 = vmatpush1.msra.mxu0 0.0
    %1362 = vmatprep.subr.mxu0 0.0
    %1363 = vmatpush1.msra.mxu0 0.0
    %1364 = vmatprep.subr.mxu0 0.0
    %1365 = vmatpush1.msra.mxu0 0.0
    %1366 = vmatprep.subr.mxu0 0.0
    %1367 = vmatpush1.msra.mxu0 0.0
    %1368 = vmatprep.subr.mxu0 0.0
    %1369 = vmatpush1.msra.mxu0 0.0
    %1370 = vmatprep.subr.mxu0 0.0
    %1371 = vmatpush1.msra.mxu0 0.0
    %1372 = vmatprep.subr.mxu0 0.0
    %1373 = vmatpush1.msra.mxu0 0.0
    %1374 = vmatprep.subr.mxu0 0.0
    %1375 = vmatpush1.msra.mxu0 0.0
    %1376 = vmatprep.subr.mxu0 0.0
    %1377 = vmatpush1.msra.mxu0 0.0
    %1378 = vmatprep.subr.mxu0 0.0
    %1379 = vmatpush1.msra.mxu0 0.0
    %1380 = vmatprep.mubr.f32.mxu0 0.0
    %1381 = vmatmul.mubr.f32.gmra.mrb[0].mxu0 %v932
    %v1382 = vpop.f32.mrb[0].mxu0
    %v1383 = vadd.f32 0.0, %v1382
    %v1384 = vpop.f32.mrb[0].mxu0
    %v1385 = vadd.f32 0.0, %v1384
    %1386 = vdwg.mxu0
    %v1387 = vadd.f32 %v446, %v1312
    %v1388 = vadd.f32 %v448, %v1314
    %v1389 = vadd.f32 %v559, %v1383
    %v1390 = vadd.f32 %v561, %v1385
    %v1391 = vxor.u32 %v1387, 2147483648
    %v1392 = vxor.u32 %v1388, 2147483648
    %v1393 = vxor.u32 %v1390, 2147483648
    %v1394 = vmul.f32 %v1391, 1.442695
    %v1395 = vpow.pop %v1394
    %v1396 = vmul.f32 %v1392, 1.442695
    %v1397 = vpow.pop %v1396
    %v1398 = vmul.f32 %v1393, 1.442695
    %v1399 = vpow.pop %v1398
    %v1400 = vadd.f32 %v1395, 1.0
    %v1401 = vadd.f32 %v1397, 1.0
    %v1402 = vadd.f32 %v1399, 1.0
    %v1403 = vrcp.pop %v1400
    %v1404 = vmul.f32 1.0, %v1403
    %v1405 = vrcp.pop %v1401
    %v1406 = vmul.f32 1.0, %v1405
    %v1407 = vrcp.pop %v1402
    %v1408 = vmul.f32 1.0, %v1407
    %v1409 = vtanh.pop %v1389
    %v1410 = vmul.f32 %v1406, %v930
    %v1411 = vmul.f32 %v1404, %v1409
    %v1412 = vadd.f32 %v1410, %v1411
    %v1413 = vtanh.pop %v1412
    %v1414 = vmul.f32 %v1408, %v1413
    %1415 = vmatprep.subr.mxu0 %v183
    %1416 = vmatpush1.msra.mxu0 %v182
    %1417 = vmatprep.subr.mxu0 %v187
    %1418 = vmatpush1.msra.mxu0 %v186
    %1419 = vmatprep.subr.mxu0 %v191
    %1420 = vmatpush1.msra.mxu0 %v190
    %1421 = vmatprep.subr.mxu0 %v195
    %1422 = vmatpush1.msra.mxu0 %v194
    %1423 = vmatprep.subr.mxu0 %v199
    %1424 = vmatpush1.msra.mxu0 %v198
    %1425 = vmatprep.subr.mxu0 %v203
    %1426 = vmatpush1.msra.mxu0 %v202
    %1427 = vmatprep.subr.mxu0 %v207
    %1428 = vmatpush1.msra.mxu0 %v206
    %1429 = vmatprep.subr.mxu0 %v211
    %1430 = vmatpush1.msra.mxu0 %v210
    %1431 = vmatprep.subr.mxu0 %v215
    %1432 = vmatpush1.msra.mxu0 %v214
    %1433 = vmatprep.subr.mxu0 %v219
    %1434 = vmatpush1.msra.mxu0 %v218
    %1435 = vmatprep.subr.mxu0 %v223
    %1436 = vmatpush1.msra.mxu0 %v222
    %1437 = vmatprep.subr.mxu0 %v227
    %1438 = vmatpush1.msra.mxu0 %v226
    %1439 = vmatprep.subr.mxu0 %v231
    %1440 = vmatpush1.msra.mxu0 %v230
    %1441 = vmatprep.subr.mxu0 %v235
    %1442 = vmatpush1.msra.mxu0 %v234
    %1443 = vmatprep.subr.mxu0 %v239
    %1444 = vmatpush1.msra.mxu0 %v238
    %1445 = vmatprep.subr.mxu0 %v243
    %1446 = vmatpush1.msra.mxu0 %v242
    %1447 = vmatprep.subr.mxu0 0.0
    %1448 = vmatpush1.msra.mxu0 0.0
    %1449 = vmatprep.subr.mxu0 0.0
    %1450 = vmatpush1.msra.mxu0 0.0
    %1451 = vmatprep.subr.mxu0 0.0
    %1452 = vmatpush1.msra.mxu0 0.0
    %1453 = vmatprep.subr.mxu0 0.0
    %1454 = vmatpush1.msra.mxu0 0.0
    %1455 = vmatprep.subr.mxu0 0.0
    %1456 = vmatpush1.msra.mxu0 0.0
    %1457 = vmatprep.subr.mxu0 0.0
    %1458 = vmatpush1.msra.mxu0 0.0
    %1459 = vmatprep.subr.mxu0 0.0
    %1460 = vmatpush1.msra.mxu0 0.0
    %1461 = vmatprep.subr.mxu0 0.0
    %1462 = vmatpush1.msra.mxu0 0.0
    %1463 = vmatprep.subr.mxu0 0.0
    %1464 = vmatpush1.msra.mxu0 0.0
    %1465 = vmatprep.subr.mxu0 0.0
    %1466 = vmatpush1.msra.mxu0 0.0
    %1467 = vmatprep.subr.mxu0 0.0
    %1468 = vmatpush1.msra.mxu0 0.0
    %1469 = vmatprep.subr.mxu0 0.0
    %1470 = vmatpush1.msra.mxu0 0.0
    %1471 = vmatprep.subr.mxu0 0.0
    %1472 = vmatpush1.msra.mxu0 0.0
    %1473 = vmatprep.subr.mxu0 0.0
    %1474 = vmatpush1.msra.mxu0 0.0
    %1475 = vmatprep.subr.mxu0 0.0
    %1476 = vmatpush1.msra.mxu0 0.0
    %1477 = vmatprep.subr.mxu0 0.0
    %1478 = vmatpush1.msra.mxu0 0.0
    %1479 = vmatprep.mubr.f32.mxu0 0.0
    %1480 = vmatmul.mubr.f32.gmra.mrb[0].mxu0 %v1414
    %v1481 = vpop.f32.mrb[0].mxu0
    %v1482 = vadd.f32 0.0, %v1481
    %v1483 = vpop.f32.mrb[0].mxu0
    %v1484 = vadd.f32 0.0, %v1483
    %1485 = vdwg.mxu0
    %1486 = vmatprep.subr.mxu0 %v185
    %1487 = vmatpush1.msra.mxu0 %v184
    %1488 = vmatprep.subr.mxu0 %v189
    %1489 = vmatpush1.msra.mxu0 %v188
    %1490 = vmatprep.subr.mxu0 %v193
    %1491 = vmatpush1.msra.mxu0 %v192
    %1492 = vmatprep.subr.mxu0 %v197
    %1493 = vmatpush1.msra.mxu0 %v196
    %1494 = vmatprep.subr.mxu0 %v201
    %1495 = vmatpush1.msra.mxu0 %v200
    %1496 = vmatprep.subr.mxu0 %v205
    %1497 = vmatpush1.msra.mxu0 %v204
    %1498 = vmatprep.subr.mxu0 %v209
    %1499 = vmatpush1.msra.mxu0 %v208
    %1500 = vmatprep.subr.mxu0 %v213
    %1501 = vmatpush1.msra.mxu0 %v212
    %1502 = vmatprep.subr.mxu0 %v217
    %1503 = vmatpush1.msra.mxu0 %v216
    %1504 = vmatprep.subr.mxu0 %v221
    %1505 = vmatpush1.msra.mxu0 %v220
    %1506 = vmatprep.subr.mxu0 %v225
    %1507 = vmatpush1.msra.mxu0 %v224
    %1508 = vmatprep.subr.mxu0 %v229
    %1509 = vmatpush1.msra.mxu0 %v228
    %1510 = vmatprep.subr.mxu0 %v233
    %1511 = vmatpush1.msra.mxu0 %v232
    %1512 = vmatprep.subr.mxu0 %v237
    %1513 = vmatpush1.msra.mxu0 %v236
    %1514 = vmatprep.subr.mxu0 %v241
    %1515 = vmatpush1.msra.mxu0 %v240
    %1516 = vmatprep.subr.mxu0 %v245
    %1517 = vmatpush1.msra.mxu0 %v244
    %1518 = vmatprep.subr.mxu0 0.0
    %1519 = vmatpush1.msra.mxu0 0.0
    %1520 = vmatprep.subr.mxu0 0.0
    %1521 = vmatpush1.msra.mxu0 0.0
    %1522 = vmatprep.subr.mxu0 0.0
    %1523 = vmatpush1.msra.mxu0 0.0
    %1524 = vmatprep.subr.mxu0 0.0
    %1525 = vmatpush1.msra.mxu0 0.0
    %1526 = vmatprep.subr.mxu0 0.0
    %1527 = vmatpush1.msra.mxu0 0.0
    %1528 = vmatprep.subr.mxu0 0.0
    %1529 = vmatpush1.msra.mxu0 0.0
    %1530 = vmatprep.subr.mxu0 0.0
    %1531 = vmatpush1.msra.mxu0 0.0
    %1532 = vmatprep.subr.mxu0 0.0
    %1533 = vmatpush1.msra.mxu0 0.0
    %1534 = vmatprep.subr.mxu0 0.0
    %1535 = vmatpush1.msra.mxu0 0.0
    %1536 = vmatprep.subr.mxu0 0.0
    %1537 = vmatpush1.msra.mxu0 0.0
    %1538 = vmatprep.subr.mxu0 0.0
    %1539 = vmatpush1.msra.mxu0 0.0
    %1540 = vmatprep.subr.mxu0 0.0
    %1541 = vmatpush1.msra.mxu0 0.0
    %1542 = vmatprep.subr.mxu0 0.0
    %1543 = vmatpush1.msra.mxu0 0.0
    %1544 = vmatprep.subr.mxu0 0.0
    %1545 = vmatpush1.msra.mxu0 0.0
    %1546 = vmatprep.subr.mxu0 0.0
    %1547 = vmatpush1.msra.mxu0 0.0
    %1548 = vmatprep.subr.mxu0 0.0
    %1549 = vmatpush1.msra.mxu0 0.0
    %1550 = vmatprep.mubr.f32.mxu0 0.0
    %1551 = vmatmul.mubr.f32.gmra.mrb[0].mxu0 %v1414
    %v1552 = vpop.f32.mrb[0].mxu0
    %v1553 = vadd.f32 0.0, %v1552
    %v1554 = vpop.f32.mrb[0].mxu0
    %v1555 = vadd.f32 0.0, %v1554
    %1556 = vdwg.mxu0
    %v1557 = vadd.f32 %v1170, %v1482
    %v1558 = vadd.f32 %v1172, %v1484
    %v1559 = vadd.f32 %v1241, %v1553
    %v1560 = vadd.f32 %v1243, %v1555
    %v1561 = vxor.u32 %v1557, 2147483648
    %v1562 = vxor.u32 %v1558, 2147483648
    %v1563 = vxor.u32 %v1560, 2147483648
    %v1564 = vmul.f32 %v1561, 1.442695
    %v1565 = vpow.pop %v1564
    %v1566 = vmul.f32 %v1562, 1.442695
    %v1567 = vpow.pop %v1566
    %v1568 = vmul.f32 %v1563, 1.442695
    %v1569 = vpow.pop %v1568
    %v1570 = vadd.f32 %v1565, 1.0
    %v1571 = vadd.f32 %v1567, 1.0
    %v1572 = vadd.f32 %v1569, 1.0
    %v1573 = vrcp.pop %v1570
    %v1574 = vmul.f32 1.0, %v1573
    %v1575 = vrcp.pop %v1571
    %v1576 = vmul.f32 1.0, %v1575
    %v1577 = vrcp.pop %v1572
    %v1578 = vmul.f32 1.0, %v1577
    %v1579 = vtanh.pop %v1559
    %v1580 = vmul.f32 %v1576, %v1100
    %v1581 = vmul.f32 %v1574, %v1579
    %v1582 = vadd.f32 %v1580, %v1581
    %v1583 = vtanh.pop %v1582
    %v1584 = vmul.f32 %v1578, %v1583
    %1585 = vmatprep.subr.mxu0 %v247
    %1586 = vmatpush1.msra.mxu0 %v246
    %1587 = vmatprep.subr.mxu0 %v251
    %1588 = vmatpush1.msra.mxu0 %v250
    %1589 = vmatprep.subr.mxu0 %v255
    %1590 = vmatpush1.msra.mxu0 %v254
    %1591 = vmatprep.subr.mxu0 %v259
    %1592 = vmatpush1.msra.mxu0 %v258
    %1593 = vmatprep.subr.mxu0 %v263
    %1594 = vmatpush1.msra.mxu0 %v262
    %1595 = vmatprep.subr.mxu0 %v267
    %1596 = vmatpush1.msra.mxu0 %v266
    %1597 = vmatprep.subr.mxu0 %v271
    %1598 = vmatpush1.msra.mxu0 %v270
    %1599 = vmatprep.subr.mxu0 %v275
    %1600 = vmatpush1.msra.mxu0 %v274
    %1601 = vmatprep.subr.mxu0 %v279
    %1602 = vmatpush1.msra.mxu0 %v278
    %1603 = vmatprep.subr.mxu0 %v283
    %1604 = vmatpush1.msra.mxu0 %v282
    %1605 = vmatprep.subr.mxu0 %v287
    %1606 = vmatpush1.msra.mxu0 %v286
    %1607 = vmatprep.subr.mxu0 %v291
    %1608 = vmatpush1.msra.mxu0 %v290
    %1609 = vmatprep.subr.mxu0 %v295
    %1610 = vmatpush1.msra.mxu0 %v294
    %1611 = vmatprep.subr.mxu0 %v299
    %1612 = vmatpush1.msra.mxu0 %v298
    %1613 = vmatprep.subr.mxu0 %v303
    %1614 = vmatpush1.msra.mxu0 %v302
    %1615 = vmatprep.subr.mxu0 %v307
    %1616 = vmatpush1.msra.mxu0 %v306
    %1617 = vmatprep.subr.mxu0 0.0
    %1618 = vmatpush1.msra.mxu0 0.0
    %1619 = vmatprep.subr.mxu0 0.0
    %1620 = vmatpush1.msra.mxu0 0.0
    %1621 = vmatprep.subr.mxu0 0.0
    %1622 = vmatpush1.msra.mxu0 0.0
    %1623 = vmatprep.subr.mxu0 0.0
    %1624 = vmatpush1.msra.mxu0 0.0
    %1625 = vmatprep.subr.mxu0 0.0
    %1626 = vmatpush1.msra.mxu0 0.0
    %1627 = vmatprep.subr.mxu0 0.0
    %1628 = vmatpush1.msra.mxu0 0.0
    %1629 = vmatprep.subr.mxu0 0.0
    %1630 = vmatpush1.msra.mxu0 0.0
    %1631 = vmatprep.subr.mxu0 0.0
    %1632 = vmatpush1.msra.mxu0 0.0
    %1633 = vmatprep.subr.mxu0 0.0
    %1634 = vmatpush1.msra.mxu0 0.0
    %1635 = vmatprep.subr.mxu0 0.0
    %1636 = vmatpush1.msra.mxu0 0.0
    %1637 = vmatprep.subr.mxu0 0.0
    %1638 = vmatpush1.msra.mxu0 0.0
    %1639 = vmatprep.subr.mxu0 0.0
    %1640 = vmatpush1.msra.mxu0 0.0
    %1641 = vmatprep.subr.mxu0 0.0
    %1642 = vmatpush1.msra.mxu0 0.0
    %1643 = vmatprep.subr.mxu0 0.0
    %1644 = vmatpush1.msra.mxu0 0.0
    %1645 = vmatprep.subr.mxu0 0.0
    %1646 = vmatpush1.msra.mxu0 0.0
    %1647 = vmatprep.subr.mxu0 0.0
    %1648 = vmatpush1.msra.mxu0 0.0
    %1649 = vmatprep.mubr.f32.mxu0 0.0
    %1650 = vmatmul.mubr.f32.gmra.mrb[0].mxu0 %v1584
    %v1651 = vpop.f32.mrb[0].mxu0
    %v1652 = vadd.f32 %v604, %v1651
    %v1653 = vpop.f32.mrb[0].mxu0
    %v1654 = vadd.f32 %v608, %v1653
    %1655 = vdwg.mxu0
    %1656 = vmatprep.subr.mxu0 %v249
    %1657 = vmatpush1.msra.mxu0 %v248
    %1658 = vmatprep.subr.mxu0 %v253
    %1659 = vmatpush1.msra.mxu0 %v252
    %1660 = vmatprep.subr.mxu0 %v257
    %1661 = vmatpush1.msra.mxu0 %v256
    %1662 = vmatprep.subr.mxu0 %v261
    %1663 = vmatpush1.msra.mxu0 %v260
    %1664 = vmatprep.subr.mxu0 %v265
    %1665 = vmatpush1.msra.mxu0 %v264
    %1666 = vmatprep.subr.mxu0 %v269
    %1667 = vmatpush1.msra.mxu0 %v268
    %1668 = vmatprep.subr.mxu0 %v273
    %1669 = vmatpush1.msra.mxu0 %v272
    %1670 = vmatprep.subr.mxu0 %v277
    %1671 = vmatpush1.msra.mxu0 %v276
    %1672 = vmatprep.subr.mxu0 %v281
    %1673 = vmatpush1.msra.mxu0 %v280
    %1674 = vmatprep.subr.mxu0 %v285
    %1675 = vmatpush1.msra.mxu0 %v284
    %1676 = vmatprep.subr.mxu0 %v289
    %1677 = vmatpush1.msra.mxu0 %v288
    %1678 = vmatprep.subr.mxu0 %v293
    %1679 = vmatpush1.msra.mxu0 %v292
    %1680 = vmatprep.subr.mxu0 %v297
    %1681 = vmatpush1.msra.mxu0 %v296
    %1682 = vmatprep.subr.mxu0 %v301
    %1683 = vmatpush1.msra.mxu0 %v300
    %1684 = vmatprep.subr.mxu0 %v305
    %1685 = vmatpush1.msra.mxu0 %v304
    %1686 = vmatprep.subr.mxu0 %v309
    %1687 = vmatpush1.msra.mxu0 %v308
    %1688 = vmatprep.subr.mxu0 0.0
    %1689 = vmatpush1.msra.mxu0 0.0
    %1690 = vmatprep.subr.mxu0 0.0
    %1691 = vmatpush1.msra.mxu0 0.0
    %1692 = vmatprep.subr.mxu0 0.0
    %1693 = vmatpush1.msra.mxu0 0.0
    %1694 = vmatprep.subr.mxu0 0.0
    %1695 = vmatpush1.msra.mxu0 0.0
    %1696 = vmatprep.subr.mxu0 0.0
    %1697 = vmatpush1.msra.mxu0 0.0
    %1698 = vmatprep.subr.mxu0 0.0
    %1699 = vmatpush1.msra.mxu0 0.0
    %1700 = vmatprep.subr.mxu0 0.0
    %1701 = vmatpush1.msra.mxu0 0.0
    %1702 = vmatprep.subr.mxu0 0.0
    %1703 = vmatpush1.msra.mxu0 0.0
    %1704 = vmatprep.subr.mxu0 0.0
    %1705 = vmatpush1.msra.mxu0 0.0
    %1706 = vmatprep.subr.mxu0 0.0
    %1707 = vmatpush1.msra.mxu0 0.0
    %1708 = vmatprep.subr.mxu0 0.0
    %1709 = vmatpush1.msra.mxu0 0.0
    %1710 = vmatprep.subr.mxu0 0.0
    %1711 = vmatpush1.msra.mxu0 0.0
    %1712 = vmatprep.subr.mxu0 0.0
    %1713 = vmatpush1.msra.mxu0 0.0
    %1714 = vmatprep.subr.mxu0 0.0
    %1715 = vmatpush1.msra.mxu0 0.0
    %1716 = vmatprep.subr.mxu0 0.0
    %1717 = vmatpush1.msra.mxu0 0.0
    %1718 = vmatprep.subr.mxu0 0.0
    %1719 = vmatpush1.msra.mxu0 0.0
    %1720 = vmatprep.mubr.f32.mxu0 0.0
    %1721 = vmatmul.mubr.f32.gmra.mrb[0].mxu0 %v1584
    %v1722 = vpop.f32.mrb[0].mxu0
    %v1723 = vadd.f32 %v612, %v1722
    %v1724 = vpop.f32.mrb[0].mxu0
    %v1725 = vadd.f32 %v616, %v1724
    %1726 = vdwg.mxu0
    %1727 = vmatprep.subr.mxu0 %v119
    %1728 = vmatpush1.msra.mxu0 %v118
    %1729 = vmatprep.subr.mxu0 %v123
    %1730 = vmatpush1.msra.mxu0 %v122
    %1731 = vmatprep.subr.mxu0 %v127
    %1732 = vmatpush1.msra.mxu0 %v126
    %1733 = vmatprep.subr.mxu0 %v131
    %1734 = vmatpush1.msra.mxu0 %v130
    %1735 = vmatprep.subr.mxu0 %v135
    %1736 = vmatpush1.msra.mxu0 %v134
    %1737 = vmatprep.subr.mxu0 %v139
    %1738 = vmatpush1.msra.mxu0 %v138
    %1739 = vmatprep.subr.mxu0 %v143
    %1740 = vmatpush1.msra.mxu0 %v142
    %1741 = vmatprep.subr.mxu0 %v147
    %1742 = vmatpush1.msra.mxu0 %v146
    %1743 = vmatprep.subr.mxu0 %v151
    %1744 = vmatpush1.msra.mxu0 %v150
    %1745 = vmatprep.subr.mxu0 %v155
    %1746 = vmatpush1.msra.mxu0 %v154
    %1747 = vmatprep.subr.mxu0 %v159
    %1748 = vmatpush1.msra.mxu0 %v158
    %1749 = vmatprep.subr.mxu0 %v163
    %1750 = vmatpush1.msra.mxu0 %v162
    %1751 = vmatprep.subr.mxu0 %v167
    %1752 = vmatpush1.msra.mxu0 %v166
    %1753 = vmatprep.subr.mxu0 %v171
    %1754 = vmatpush1.msra.mxu0 %v170
    %1755 = vmatprep.subr.mxu0 %v175
    %1756 = vmatpush1.msra.mxu0 %v174
    %1757 = vmatprep.subr.mxu0 %v179
    %1758 = vmatpush1.msra.mxu0 %v178
    %1759 = vmatprep.subr.mxu0 0.0
    %1760 = vmatpush1.msra.mxu0 0.0
    %1761 = vmatprep.subr.mxu0 0.0
    %1762 = vmatpush1.msra.mxu0 0.0
    %1763 = vmatprep.subr.mxu0 0.0
    %1764 = vmatpush1.msra.mxu0 0.0
    %1765 = vmatprep.subr.mxu0 0.0
    %1766 = vmatpush1.msra.mxu0 0.0
    %1767 = vmatprep.subr.mxu0 0.0
    %1768 = vmatpush1.msra.mxu0 0.0
    %1769 = vmatprep.subr.mxu0 0.0
    %1770 = vmatpush1.msra.mxu0 0.0
    %1771 = vmatprep.subr.mxu0 0.0
    %1772 = vmatpush1.msra.mxu0 0.0
    %1773 = vmatprep.subr.mxu0 0.0
    %1774 = vmatpush1.msra.mxu0 0.0
    %1775 = vmatprep.subr.mxu0 0.0
    %1776 = vmatpush1.msra.mxu0 0.0
    %1777 = vmatprep.subr.mxu0 0.0
    %1778 = vmatpush1.msra.mxu0 0.0
    %1779 = vmatprep.subr.mxu0 0.0
    %1780 = vmatpush1.msra.mxu0 0.0
    %1781 = vmatprep.subr.mxu0 0.0
    %1782 = vmatpush1.msra.mxu0 0.0
    %1783 = vmatprep.subr.mxu0 0.0
    %1784 = vmatpush1.msra.mxu0 0.0
    %1785 = vmatprep.subr.mxu0 0.0
    %1786 = vmatpush1.msra.mxu0 0.0
    %1787 = vmatprep.subr.mxu0 0.0
    %1788 = vmatpush1.msra.mxu0 0.0
    %1789 = vmatprep.subr.mxu0 0.0
    %1790 = vmatpush1.msra.mxu0 0.0
    %1791 = vmatprep.mubr.f32.mxu0 0.0
    %1792 = vmatmul.mubr.f32.gmra.mrb[0].mxu0 %v1414
    %v1793 = vpop.f32.mrb[0].mxu0
    %v1794 = vadd.f32 0.0, %v1793
    %v1795 = vpop.f32.mrb[0].mxu0
    %v1796 = vadd.f32 0.0, %v1795
    %1797 = vdwg.mxu0
    %1798 = vmatprep.subr.mxu0 %v121
    %1799 = vmatpush1.msra.mxu0 %v120
    %1800 = vmatprep.subr.mxu0 %v125
    %1801 = vmatpush1.msra.mxu0 %v124
    %1802 = vmatprep.subr.mxu0 %v129
    %1803 = vmatpush1.msra.mxu0 %v128
    %1804 = vmatprep.subr.mxu0 %v133
    %1805 = vmatpush1.msra.mxu0 %v132
    %1806 = vmatprep.subr.mxu0 %v137
    %1807 = vmatpush1.msra.mxu0 %v136
    %1808 = vmatprep.subr.mxu0 %v141
    %1809 = vmatpush1.msra.mxu0 %v140
    %1810 = vmatprep.subr.mxu0 %v145
    %1811 = vmatpush1.msra.mxu0 %v144
    %1812 = vmatprep.subr.mxu0 %v149
    %1813 = vmatpush1.msra.mxu0 %v148
    %1814 = vmatprep.subr.mxu0 %v153
    %1815 = vmatpush1.msra.mxu0 %v152
    %1816 = vmatprep.subr.mxu0 %v157
    %1817 = vmatpush1.msra.mxu0 %v156
    %1818 = vmatprep.subr.mxu0 %v161
    %1819 = vmatpush1.msra.mxu0 %v160
    %1820 = vmatprep.subr.mxu0 %v165
    %1821 = vmatpush1.msra.mxu0 %v164
    %1822 = vmatprep.subr.mxu0 %v169
    %1823 = vmatpush1.msra.mxu0 %v168
    %1824 = vmatprep.subr.mxu0 %v173
    %1825 = vmatpush1.msra.mxu0 %v172
    %1826 = vmatprep.subr.mxu0 %v177
    %1827 = vmatpush1.msra.mxu0 %v176
    %1828 = vmatprep.subr.mxu0 %v181
    %1829 = vmatpush1.msra.mxu0 %v180
    %1830 = vmatprep.subr.mxu0 0.0
    %1831 = vmatpush1.msra.mxu0 0.0
    %1832 = vmatprep.subr.mxu0 0.0
    %1833 = vmatpush1.msra.mxu0 0.0
    %1834 = vmatprep.subr.mxu0 0.0
    %1835 = vmatpush1.msra.mxu0 0.0
    %1836 = vmatprep.subr.mxu0 0.0
    %1837 = vmatpush1.msra.mxu0 0.0
    %1838 = vmatprep.subr.mxu0 0.0
    %1839 = vmatpush1.msra.mxu0 0.0
    %1840 = vmatprep.subr.mxu0 0.0
    %1841 = vmatpush1.msra.mxu0 0.0
    %1842 = vmatprep.subr.mxu0 0.0
    %1843 = vmatpush1.msra.mxu0 0.0
    %1844 = vmatprep.subr.mxu0 0.0
    %1845 = vmatpush1.msra.mxu0 0.0
    %1846 = vmatprep.subr.mxu0 0.0
    %1847 = vmatpush1.msra.mxu0 0.0
    %1848 = vmatprep.subr.mxu0 0.0
    %1849 = vmatpush1.msra.mxu0 0.0
    %1850 = vmatprep.subr.mxu0 0.0
    %1851 = vmatpush1.msra.mxu0 0.0
    %1852 = vmatprep.subr.mxu0 0.0
    %1853 = vmatpush1.msra.mxu0 0.0
    %1854 = vmatprep.subr.mxu0 0.0
    %1855 = vmatpush1.msra.mxu0 0.0
    %1856 = vmatprep.subr.mxu0 0.0
    %1857 = vmatpush1.msra.mxu0 0.0
    %1858 = vmatprep.subr.mxu0 0.0
    %1859 = vmatpush1.msra.mxu0 0.0
    %1860 = vmatprep.subr.mxu0 0.0
    %1861 = vmatpush1.msra.mxu0 0.0
    %1862 = vmatprep.mubr.f32.mxu0 0.0
    %1863 = vmatmul.mubr.f32.gmra.mrb[0].mxu0 %v1414
    %v1864 = vpop.f32.mrb[0].mxu0
    %v1865 = vadd.f32 0.0, %v1864
    %v1866 = vpop.f32.mrb[0].mxu0
    %v1867 = vadd.f32 0.0, %v1866
    %1868 = vdwg.mxu0
    %v1869 = vadd.f32 %v452, %v1794
    %v1870 = vadd.f32 %v454, %v1796
    %v1871 = vadd.f32 %v565, %v1865
    %v1872 = vadd.f32 %v567, %v1867
    %v1873 = vxor.u32 %v1869, 2147483648
    %v1874 = vxor.u32 %v1870, 2147483648
    %v1875 = vxor.u32 %v1872, 2147483648
    %v1876 = vmul.f32 %v1873, 1.442695
    %v1877 = vpow.pop %v1876
    %v1878 = vmul.f32 %v1874, 1.442695
    %v1879 = vpow.pop %v1878
    %v1880 = vmul.f32 %v1875, 1.442695
    %v1881 = vpow.pop %v1880
    %v1882 = vadd.f32 %v1877, 1.0
    %v1883 = vadd.f32 %v1879, 1.0
    %v1884 = vadd.f32 %v1881, 1.0
    %v1885 = vrcp.pop %v1882
    %v1886 = vmul.f32 1.0, %v1885
    %v1887 = vrcp.pop %v1883
    %v1888 = vmul.f32 1.0, %v1887
    %v1889 = vrcp.pop %v1884
    %v1890 = vmul.f32 1.0, %v1889
    %v1891 = vtanh.pop %v1871
    %v1892 = vmul.f32 %v1888, %v1412
    %v1893 = vmul.f32 %v1886, %v1891
    %v1894 = vadd.f32 %v1892, %v1893
    %v1895 = vtanh.pop %v1894
    %v1896 = vmul.f32 %v1890, %v1895
    %1897 = vmatprep.subr.mxu0 %v183
    %1898 = vmatpush1.msra.mxu0 %v182
    %1899 = vmatprep.subr.mxu0 %v187
    %1900 = vmatpush1.msra.mxu0 %v186
    %1901 = vmatprep.subr.mxu0 %v191
    %1902 = vmatpush1.msra.mxu0 %v190
    %1903 = vmatprep.subr.mxu0 %v195
    %1904 = vmatpush1.msra.mxu0 %v194
    %1905 = vmatprep.subr.mxu0 %v199
    %1906 = vmatpush1.msra.mxu0 %v198
    %1907 = vmatprep.subr.mxu0 %v203
    %1908 = vmatpush1.msra.mxu0 %v202
    %1909 = vmatprep.subr.mxu0 %v207
    %1910 = vmatpush1.msra.mxu0 %v206
    %1911 = vmatprep.subr.mxu0 %v211
    %1912 = vmatpush1.msra.mxu0 %v210
    %1913 = vmatprep.subr.mxu0 %v215
    %1914 = vmatpush1.msra.mxu0 %v214
    %1915 = vmatprep.subr.mxu0 %v219
    %1916 = vmatpush1.msra.mxu0 %v218
    %1917 = vmatprep.subr.mxu0 %v223
    %1918 = vmatpush1.msra.mxu0 %v222
    %1919 = vmatprep.subr.mxu0 %v227
    %1920 = vmatpush1.msra.mxu0 %v226
    %1921 = vmatprep.subr.mxu0 %v231
    %1922 = vmatpush1.msra.mxu0 %v230
    %1923 = vmatprep.subr.mxu0 %v235
    %1924 = vmatpush1.msra.mxu0 %v234
    %1925 = vmatprep.subr.mxu0 %v239
    %1926 = vmatpush1.msra.mxu0 %v238
    %1927 = vmatprep.subr.mxu0 %v243
    %1928 = vmatpush1.msra.mxu0 %v242
    %1929 = vmatprep.subr.mxu0 0.0
    %1930 = vmatpush1.msra.mxu0 0.0
    %1931 = vmatprep.subr.mxu0 0.0
    %1932 = vmatpush1.msra.mxu0 0.0
    %1933 = vmatprep.subr.mxu0 0.0
    %1934 = vmatpush1.msra.mxu0 0.0
    %1935 = vmatprep.subr.mxu0 0.0
    %1936 = vmatpush1.msra.mxu0 0.0
    %1937 = vmatprep.subr.mxu0 0.0
    %1938 = vmatpush1.msra.mxu0 0.0
    %1939 = vmatprep.subr.mxu0 0.0
    %1940 = vmatpush1.msra.mxu0 0.0
    %1941 = vmatprep.subr.mxu0 0.0
    %1942 = vmatpush1.msra.mxu0 0.0
    %1943 = vmatprep.subr.mxu0 0.0
    %1944 = vmatpush1.msra.mxu0 0.0
    %1945 = vmatprep.subr.mxu0 0.0
    %1946 = vmatpush1.msra.mxu0 0.0
    %1947 = vmatprep.subr.mxu0 0.0
    %1948 = vmatpush1.msra.mxu0 0.0
    %1949 = vmatprep.subr.mxu0 0.0
    %1950 = vmatpush1.msra.mxu0 0.0
    %1951 = vmatprep.subr.mxu0 0.0
    %1952 = vmatpush1.msra.mxu0 0.0
    %1953 = vmatprep.subr.mxu0 0.0
    %1954 = vmatpush1.msra.mxu0 0.0
    %1955 = vmatprep.subr.mxu0 0.0
    %1956 = vmatpush1.msra.mxu0 0.0
    %1957 = vmatprep.subr.mxu0 0.0
    %1958 = vmatpush1.msra.mxu0 0.0
    %1959 = vmatprep.subr.mxu0 0.0
    %1960 = vmatpush1.msra.mxu0 0.0
    %1961 = vmatprep.mubr.f32.mxu0 0.0
    %1962 = vmatmul.mubr.f32.gmra.mrb[0].mxu0 %v1896
    %v1963 = vpop.f32.mrb[0].mxu0
    %v1964 = vadd.f32 0.0, %v1963
    %v1965 = vpop.f32.mrb[0].mxu0
    %v1966 = vadd.f32 0.0, %v1965
    %1967 = vdwg.mxu0
    %1968 = vmatprep.subr.mxu0 %v185
    %1969 = vmatpush1.msra.mxu0 %v184
    %1970 = vmatprep.subr.mxu0 %v189
    %1971 = vmatpush1.msra.mxu0 %v188
    %1972 = vmatprep.subr.mxu0 %v193
    %1973 = vmatpush1.msra.mxu0 %v192
    %1974 = vmatprep.subr.mxu0 %v197
    %1975 = vmatpush1.msra.mxu0 %v196
    %1976 = vmatprep.subr.mxu0 %v201
    %1977 = vmatpush1.msra.mxu0 %v200
    %1978 = vmatprep.subr.mxu0 %v205
    %1979 = vmatpush1.msra.mxu0 %v204
    %1980 = vmatprep.subr.mxu0 %v209
    %1981 = vmatpush1.msra.mxu0 %v208
    %1982 = vmatprep.subr.mxu0 %v213
    %1983 = vmatpush1.msra.mxu0 %v212
    %1984 = vmatprep.subr.mxu0 %v217
    %1985 = vmatpush1.msra.mxu0 %v216
    %1986 = vmatprep.subr.mxu0 %v221
    %1987 = vmatpush1.msra.mxu0 %v220
    %1988 = vmatprep.subr.mxu0 %v225
    %1989 = vmatpush1.msra.mxu0 %v224
    %1990 = vmatprep.subr.mxu0 %v229
    %1991 = vmatpush1.msra.mxu0 %v228
    %1992 = vmatprep.subr.mxu0 %v233
    %1993 = vmatpush1.msra.mxu0 %v232
    %1994 = vmatprep.subr.mxu0 %v237
    %1995 = vmatpush1.msra.mxu0 %v236
    %1996 = vmatprep.subr.mxu0 %v241
    %1997 = vmatpush1.msra.mxu0 %v240
    %1998 = vmatprep.subr.mxu0 %v245
    %1999 = vmatpush1.msra.mxu0 %v244
    %2000 = vmatprep.subr.mxu0 0.0
    %2001 = vmatpush1.msra.mxu0 0.0
    %2002 = vmatprep.subr.mxu0 0.0
    %2003 = vmatpush1.msra.mxu0 0.0
    %2004 = vmatprep.subr.mxu0 0.0
    %2005 = vmatpush1.msra.mxu0 0.0
    %2006 = vmatprep.subr.mxu0 0.0
    %2007 = vmatpush1.msra.mxu0 0.0
    %2008 = vmatprep.subr.mxu0 0.0
    %2009 = vmatpush1.msra.mxu0 0.0
    %2010 = vmatprep.subr.mxu0 0.0
    %2011 = vmatpush1.msra.mxu0 0.0
    %2012 = vmatprep.subr.mxu0 0.0
    %2013 = vmatpush1.msra.mxu0 0.0
    %2014 = vmatprep.subr.mxu0 0.0
    %2015 = vmatpush1.msra.mxu0 0.0
    %2016 = vmatprep.subr.mxu0 0.0
    %2017 = vmatpush1.msra.mxu0 0.0
    %2018 = vmatprep.subr.mxu0 0.0
    %2019 = vmatpush1.msra.mxu0 0.0
    %2020 = vmatprep.subr.mxu0 0.0
    %2021 = vmatpush1.msra.mxu0 0.0
    %2022 = vmatprep.subr.mxu0 0.0
    %2023 = vmatpush1.msra.mxu0 0.0
    %2024 = vmatprep.subr.mxu0 0.0
    %2025 = vmatpush1.msra.mxu0 0.0
    %2026 = vmatprep.subr.mxu0 0.0
    %2027 = vmatpush1.msra.mxu0 0.0
    %2028 = vmatprep.subr.mxu0 0.0
    %2029 = vmatpush1.msra.mxu0 0.0
    %2030 = vmatprep.subr.mxu0 0.0
    %2031 = vmatpush1.msra.mxu0 0.0
    %2032 = vmatprep.mubr.f32.mxu0 0.0
    %2033 = vmatmul.mubr.f32.gmra.mrb[0].mxu0 %v1896
    %v2034 = vpop.f32.mrb[0].mxu0
    %v2035 = vadd.f32 0.0, %v2034
    %v2036 = vpop.f32.mrb[0].mxu0
    %v2037 = vadd.f32 0.0, %v2036
    %2038 = vdwg.mxu0
    %v2039 = vadd.f32 %v1652, %v1964
    %v2040 = vadd.f32 %v1654, %v1966
    %v2041 = vadd.f32 %v1723, %v2035
    %v2042 = vadd.f32 %v1725, %v2037
    %v2043 = vxor.u32 %v2039, 2147483648
    %v2044 = vxor.u32 %v2040, 2147483648
    %v2045 = vxor.u32 %v2042, 2147483648
    %v2046 = vmul.f32 %v2043, 1.442695
    %v2047 = vpow.pop %v2046
    %v2048 = vmul.f32 %v2044, 1.442695
    %v2049 = vpow.pop %v2048
    %v2050 = vmul.f32 %v2045, 1.442695
    %v2051 = vpow.pop %v2050
    %v2052 = vadd.f32 %v2047, 1.0
    %v2053 = vadd.f32 %v2049, 1.0
    %v2054 = vadd.f32 %v2051, 1.0
    %v2055 = vrcp.pop %v2052
    %v2056 = vmul.f32 1.0, %v2055
    %v2057 = vrcp.pop %v2053
    %v2058 = vmul.f32 1.0, %v2057
    %v2059 = vrcp.pop %v2054
    %v2060 = vmul.f32 1.0, %v2059
    %v2061 = vtanh.pop %v2041
    %v2062 = vmul.f32 %v2058, %v1582
    %v2063 = vmul.f32 %v2056, %v2061
    %v2064 = vadd.f32 %v2062, %v2063
    %v2065 = vtanh.pop %v2064
    %v2066 = vmul.f32 %v2060, %v2065
    %2067 = vmatprep.subr.mxu0 %v247
    %2068 = vmatpush1.msra.mxu0 %v246
    %2069 = vmatprep.subr.mxu0 %v251
    %2070 = vmatpush1.msra.mxu0 %v250
    %2071 = vmatprep.subr.mxu0 %v255
    %2072 = vmatpush1.msra.mxu0 %v254
    %2073 = vmatprep.subr.mxu0 %v259
    %2074 = vmatpush1.msra.mxu0 %v258
    %2075 = vmatprep.subr.mxu0 %v263
    %2076 = vmatpush1.msra.mxu0 %v262
    %2077 = vmatprep.subr.mxu0 %v267
    %2078 = vmatpush1.msra.mxu0 %v266
    %2079 = vmatprep.subr.mxu0 %v271
    %2080 = vmatpush1.msra.mxu0 %v270
    %2081 = vmatprep.subr.mxu0 %v275
    %2082 = vmatpush1.msra.mxu0 %v274
    %2083 = vmatprep.subr.mxu0 %v279
    %2084 = vmatpush1.msra.mxu0 %v278
    %2085 = vmatprep.subr.mxu0 %v283
    %2086 = vmatpush1.msra.mxu0 %v282
    %2087 = vmatprep.subr.mxu0 %v287
    %2088 = vmatpush1.msra.mxu0 %v286
    %2089 = vmatprep.subr.mxu0 %v291
    %2090 = vmatpush1.msra.mxu0 %v290
    %2091 = vmatprep.subr.mxu0 %v295
    %2092 = vmatpush1.msra.mxu0 %v294
    %2093 = vmatprep.subr.mxu0 %v299
    %2094 = vmatpush1.msra.mxu0 %v298
    %2095 = vmatprep.subr.mxu0 %v303
    %2096 = vmatpush1.msra.mxu0 %v302
    %2097 = vmatprep.subr.mxu0 %v307
    %2098 = vmatpush1.msra.mxu0 %v306
    %2099 = vmatprep.subr.mxu0 0.0
    %2100 = vmatpush1.msra.mxu0 0.0
    %2101 = vmatprep.subr.mxu0 0.0
    %2102 = vmatpush1.msra.mxu0 0.0
    %2103 = vmatprep.subr.mxu0 0.0
    %2104 = vmatpush1.msra.mxu0 0.0
    %2105 = vmatprep.subr.mxu0 0.0
    %2106 = vmatpush1.msra.mxu0 0.0
    %2107 = vmatprep.subr.mxu0 0.0
    %2108 = vmatpush1.msra.mxu0 0.0
    %2109 = vmatprep.subr.mxu0 0.0
    %2110 = vmatpush1.msra.mxu0 0.0
    %2111 = vmatprep.subr.mxu0 0.0
    %2112 = vmatpush1.msra.mxu0 0.0
    %2113 = vmatprep.subr.mxu0 0.0
    %2114 = vmatpush1.msra.mxu0 0.0
    %2115 = vmatprep.subr.mxu0 0.0
    %2116 = vmatpush1.msra.mxu0 0.0
    %2117 = vmatprep.subr.mxu0 0.0
    %2118 = vmatpush1.msra.mxu0 0.0
    %2119 = vmatprep.subr.mxu0 0.0
    %2120 = vmatpush1.msra.mxu0 0.0
    %2121 = vmatprep.subr.mxu0 0.0
    %2122 = vmatpush1.msra.mxu0 0.0
    %2123 = vmatprep.subr.mxu0 0.0
    %2124 = vmatpush1.msra.mxu0 0.0
    %2125 = vmatprep.subr.mxu0 0.0
    %2126 = vmatpush1.msra.mxu0 0.0
    %2127 = vmatprep.subr.mxu0 0.0
    %2128 = vmatpush1.msra.mxu0 0.0
    %2129 = vmatprep.subr.mxu0 0.0
    %2130 = vmatpush1.msra.mxu0 0.0
    %2131 = vmatprep.mubr.f32.mxu0 0.0
    %2132 = vmatmul.mubr.f32.gmra.mrb[0].mxu0 %v2066
    %v2133 = vpop.f32.mrb[0].mxu0
    %v2134 = vadd.f32 %v604, %v2133
    %v2135 = vpop.f32.mrb[0].mxu0
    %v2136 = vadd.f32 %v608, %v2135
    %2137 = vdwg.mxu0
    %2138 = vmatprep.subr.mxu0 %v249
    %2139 = vmatpush1.msra.mxu0 %v248
    %2140 = vmatprep.subr.mxu0 %v253
    %2141 = vmatpush1.msra.mxu0 %v252
    %2142 = vmatprep.subr.mxu0 %v257
    %2143 = vmatpush1.msra.mxu0 %v256
    %2144 = vmatprep.subr.mxu0 %v261
    %2145 = vmatpush1.msra.mxu0 %v260
    %2146 = vmatprep.subr.mxu0 %v265
    %2147 = vmatpush1.msra.mxu0 %v264
    %2148 = vmatprep.subr.mxu0 %v269
    %2149 = vmatpush1.msra.mxu0 %v268
    %2150 = vmatprep.subr.mxu0 %v273
    %2151 = vmatpush1.msra.mxu0 %v272
    %2152 = vmatprep.subr.mxu0 %v277
    %2153 = vmatpush1.msra.mxu0 %v276
    %2154 = vmatprep.subr.mxu0 %v281
    %2155 = vmatpush1.msra.mxu0 %v280
    %2156 = vmatprep.subr.mxu0 %v285
    %2157 = vmatpush1.msra.mxu0 %v284
    %2158 = vmatprep.subr.mxu0 %v289
    %2159 = vmatpush1.msra.mxu0 %v288
    %2160 = vmatprep.subr.mxu0 %v293
    %2161 = vmatpush1.msra.mxu0 %v292
    %2162 = vmatprep.subr.mxu0 %v297
    %2163 = vmatpush1.msra.mxu0 %v296
    %2164 = vmatprep.subr.mxu0 %v301
    %2165 = vmatpush1.msra.mxu0 %v300
    %2166 = vmatprep.subr.mxu0 %v305
    %2167 = vmatpush1.msra.mxu0 %v304
    %2168 = vmatprep.subr.mxu0 %v309
    %2169 = vmatpush1.msra.mxu0 %v308
    %2170 = vmatprep.subr.mxu0 0.0
    %2171 = vmatpush1.msra.mxu0 0.0
    %2172 = vmatprep.subr.mxu0 0.0
    %2173 = vmatpush1.msra.mxu0 0.0
    %2174 = vmatprep.subr.mxu0 0.0
    %2175 = vmatpush1.msra.mxu0 0.0
    %2176 = vmatprep.subr.mxu0 0.0
    %2177 = vmatpush1.msra.mxu0 0.0
    %2178 = vmatprep.subr.mxu0 0.0
    %2179 = vmatpush1.msra.mxu0 0.0
    %2180 = vmatprep.subr.mxu0 0.0
    %2181 = vmatpush1.msra.mxu0 0.0
    %2182 = vmatprep.subr.mxu0 0.0
    %2183 = vmatpush1.msra.mxu0 0.0
    %2184 = vmatprep.subr.mxu0 0.0
    %2185 = vmatpush1.msra.mxu0 0.0
    %2186 = vmatprep.subr.mxu0 0.0
    %2187 = vmatpush1.msra.mxu0 0.0
    %2188 = vmatprep.subr.mxu0 0.0
    %2189 = vmatpush1.msra.mxu0 0.0
    %2190 = vmatprep.subr.mxu0 0.0
    %2191 = vmatpush1.msra.mxu0 0.0
    %2192 = vmatprep.subr.mxu0 0.0
    %2193 = vmatpush1.msra.mxu0 0.0
    %2194 = vmatprep.subr.mxu0 0.0
    %2195 = vmatpush1.msra.mxu0 0.0
    %2196 = vmatprep.subr.mxu0 0.0
    %2197 = vmatpush1.msra.mxu0 0.0
    %2198 = vmatprep.subr.mxu0 0.0
    %2199 = vmatpush1.msra.mxu0 0.0
    %2200 = vmatprep.subr.mxu0 0.0
    %2201 = vmatpush1.msra.mxu0 0.0
    %2202 = vmatprep.mubr.f32.mxu0 0.0
    %2203 = vmatmul.mubr.f32.gmra.mrb[0].mxu0 %v2066
    %v2204 = vpop.f32.mrb[0].mxu0
    %v2205 = vadd.f32 %v612, %v2204
    %v2206 = vpop.f32.mrb[0].mxu0
    %v2207 = vadd.f32 %v616, %v2206
    %2208 = vdwg.mxu0
    %2209 = vmatprep.subr.mxu0 %v119
    %2210 = vmatpush1.msra.mxu0 %v118
    %2211 = vmatprep.subr.mxu0 %v123
    %2212 = vmatpush1.msra.mxu0 %v122
    %2213 = vmatprep.subr.mxu0 %v127
    %2214 = vmatpush1.msra.mxu0 %v126
    %2215 = vmatprep.subr.mxu0 %v131
    %2216 = vmatpush1.msra.mxu0 %v130
    %2217 = vmatprep.subr.mxu0 %v135
    %2218 = vmatpush1.msra.mxu0 %v134
    %2219 = vmatprep.subr.mxu0 %v139
    %2220 = vmatpush1.msra.mxu0 %v138
    %2221 = vmatprep.subr.mxu0 %v143
    %2222 = vmatpush1.msra.mxu0 %v142
    %2223 = vmatprep.subr.mxu0 %v147
    %2224 = vmatpush1.msra.mxu0 %v146
    %2225 = vmatprep.subr.mxu0 %v151
    %2226 = vmatpush1.msra.mxu0 %v150
    %2227 = vmatprep.subr.mxu0 %v155
    %2228 = vmatpush1.msra.mxu0 %v154
    %2229 = vmatprep.subr.mxu0 %v159
    %2230 = vmatpush1.msra.mxu0 %v158
    %2231 = vmatprep.subr.mxu0 %v163
    %2232 = vmatpush1.msra.mxu0 %v162
    %2233 = vmatprep.subr.mxu0 %v167
    %2234 = vmatpush1.msra.mxu0 %v166
    %2235 = vmatprep.subr.mxu0 %v171
    %2236 = vmatpush1.msra.mxu0 %v170
    %2237 = vmatprep.subr.mxu0 %v175
    %2238 = vmatpush1.msra.mxu0 %v174
    %2239 = vmatprep.subr.mxu0 %v179
    %2240 = vmatpush1.msra.mxu0 %v178
    %2241 = vmatprep.subr.mxu0 0.0
    %2242 = vmatpush1.msra.mxu0 0.0
    %2243 = vmatprep.subr.mxu0 0.0
    %2244 = vmatpush1.msra.mxu0 0.0
    %2245 = vmatprep.subr.mxu0 0.0
    %2246 = vmatpush1.msra.mxu0 0.0
    %2247 = vmatprep.subr.mxu0 0.0
    %2248 = vmatpush1.msra.mxu0 0.0
    %2249 = vmatprep.subr.mxu0 0.0
    %2250 = vmatpush1.msra.mxu0 0.0
    %2251 = vmatprep.subr.mxu0 0.0
    %2252 = vmatpush1.msra.mxu0 0.0
    %2253 = vmatprep.subr.mxu0 0.0
    %2254 = vmatpush1.msra.mxu0 0.0
    %2255 = vmatprep.subr.mxu0 0.0
    %2256 = vmatpush1.msra.mxu0 0.0
    %2257 = vmatprep.subr.mxu0 0.0
    %2258 = vmatpush1.msra.mxu0 0.0
    %2259 = vmatprep.subr.mxu0 0.0
    %2260 = vmatpush1.msra.mxu0 0.0
    %2261 = vmatprep.subr.mxu0 0.0
    %2262 = vmatpush1.msra.mxu0 0.0
    %2263 = vmatprep.subr.mxu0 0.0
    %2264 = vmatpush1.msra.mxu0 0.0
    %2265 = vmatprep.subr.mxu0 0.0
    %2266 = vmatpush1.msra.mxu0 0.0
    %2267 = vmatprep.subr.mxu0 0.0
    %2268 = vmatpush1.msra.mxu0 0.0
    %2269 = vmatprep.subr.mxu0 0.0
    %2270 = vmatpush1.msra.mxu0 0.0
    %2271 = vmatprep.subr.mxu0 0.0
    %2272 = vmatpush1.msra.mxu0 0.0
    %2273 = vmatprep.mubr.f32.mxu0 0.0
    %2274 = vmatmul.mubr.f32.gmra.mrb[0].mxu0 %v1896
    %v2275 = vpop.f32.mrb[0].mxu0
    %v2276 = vadd.f32 0.0, %v2275
    %v2277 = vpop.f32.mrb[0].mxu0
    %v2278 = vadd.f32 0.0, %v2277
    %2279 = vdwg.mxu0
    %2280 = vmatprep.subr.mxu0 %v121
    %2281 = vmatpush1.msra.mxu0 %v120
    %2282 = vmatprep.subr.mxu0 %v125
    %2283 = vmatpush1.msra.mxu0 %v124
    %2284 = vmatprep.subr.mxu0 %v129
    %2285 = vmatpush1.msra.mxu0 %v128
    %2286 = vmatprep.subr.mxu0 %v133
    %2287 = vmatpush1.msra.mxu0 %v132
    %2288 = vmatprep.subr.mxu0 %v137
    %2289 = vmatpush1.msra.mxu0 %v136
    %2290 = vmatprep.subr.mxu0 %v141
    %2291 = vmatpush1.msra.mxu0 %v140
    %2292 = vmatprep.subr.mxu0 %v145
    %2293 = vmatpush1.msra.mxu0 %v144
    %2294 = vmatprep.subr.mxu0 %v149
    %2295 = vmatpush1.msra.mxu0 %v148
    %2296 = vmatprep.subr.mxu0 %v153
    %2297 = vmatpush1.msra.mxu0 %v152
    %2298 = vmatprep.subr.mxu0 %v157
    %2299 = vmatpush1.msra.mxu0 %v156
    %2300 = vmatprep.subr.mxu0 %v161
    %2301 = vmatpush1.msra.mxu0 %v160
    %2302 = vmatprep.subr.mxu0 %v165
    %2303 = vmatpush1.msra.mxu0 %v164
    %2304 = vmatprep.subr.mxu0 %v169
    %2305 = vmatpush1.msra.mxu0 %v168
    %2306 = vmatprep.subr.mxu0 %v173
    %2307 = vmatpush1.msra.mxu0 %v172
    %2308 = vmatprep.subr.mxu0 %v177
    %2309 = vmatpush1.msra.mxu0 %v176
    %2310 = vmatprep.subr.mxu0 %v181
    %2311 = vmatpush1.msra.mxu0 %v180
    %2312 = vmatprep.subr.mxu0 0.0
    %2313 = vmatpush1.msra.mxu0 0.0
    %2314 = vmatprep.subr.mxu0 0.0
    %2315 = vmatpush1.msra.mxu0 0.0
    %2316 = vmatprep.subr.mxu0 0.0
    %2317 = vmatpush1.msra.mxu0 0.0
    %2318 = vmatprep.subr.mxu0 0.0
    %2319 = vmatpush1.msra.mxu0 0.0
    %2320 = vmatprep.subr.mxu0 0.0
    %2321 = vmatpush1.msra.mxu0 0.0
    %2322 = vmatprep.subr.mxu0 0.0
    %2323 = vmatpush1.msra.mxu0 0.0
    %2324 = vmatprep.subr.mxu0 0.0
    %2325 = vmatpush1.msra.mxu0 0.0
    %2326 = vmatprep.subr.mxu0 0.0
    %2327 = vmatpush1.msra.mxu0 0.0
    %2328 = vmatprep.subr.mxu0 0.0
    %2329 = vmatpush1.msra.mxu0 0.0
    %2330 = vmatprep.subr.mxu0 0.0
    %2331 = vmatpush1.msra.mxu0 0.0
    %2332 = vmatprep.subr.mxu0 0.0
    %2333 = vmatpush1.msra.mxu0 0.0
    %2334 = vmatprep.subr.mxu0 0.0
    %2335 = vmatpush1.msra.mxu0 0.0
    %2336 = vmatprep.subr.mxu0 0.0
    %2337 = vmatpush1.msra.mxu0 0.0
    %2338 = vmatprep.subr.mxu0 0.0
    %2339 = vmatpush1.msra.mxu0 0.0
    %2340 = vmatprep.subr.mxu0 0.0
    %2341 = vmatpush1.msra.mxu0 0.0
    %2342 = vmatprep.subr.mxu0 0.0
    %2343 = vmatpush1.msra.mxu0 0.0
    %2344 = vmatprep.mubr.f32.mxu0 0.0
    %2345 = vmatmul.mubr.f32.gmra.mrb[0].mxu0 %v1896
    %v2346 = vpop.f32.mrb[0].mxu0
    %v2347 = vadd.f32 0.0, %v2346
    %v2348 = vpop.f32.mrb[0].mxu0
    %v2349 = vadd.f32 0.0, %v2348
    %2350 = vdwg.mxu0
    %v2351 = vadd.f32 %v458, %v2276
    %v2352 = vadd.f32 %v460, %v2278
    %v2353 = vadd.f32 %v571, %v2347
    %v2354 = vadd.f32 %v573, %v2349
    %v2355 = vxor.u32 %v2351, 2147483648
    %v2356 = vxor.u32 %v2352, 2147483648
    %v2357 = vxor.u32 %v2354, 2147483648
    %v2358 = vmul.f32 %v2355, 1.442695
    %v2359 = vpow.pop %v2358
    %v2360 = vmul.f32 %v2356, 1.442695
    %v2361 = vpow.pop %v2360
    %v2362 = vmul.f32 %v2357, 1.442695
    %v2363 = vpow.pop %v2362
    %v2364 = vadd.f32 %v2359, 1.0
    %v2365 = vadd.f32 %v2361, 1.0
    %v2366 = vadd.f32 %v2363, 1.0
    %v2367 = vrcp.pop %v2364
    %v2368 = vmul.f32 1.0, %v2367
    %v2369 = vrcp.pop %v2365
    %v2370 = vmul.f32 1.0, %v2369
    %v2371 = vrcp.pop %v2366
    %v2372 = vmul.f32 1.0, %v2371
    %v2373 = vtanh.pop %v2353
    %v2374 = vmul.f32 %v2370, %v1894
    %v2375 = vmul.f32 %v2368, %v2373
    %v2376 = vadd.f32 %v2374, %v2375
    %v2377 = vtanh.pop %v2376
    %v2378 = vmul.f32 %v2372, %v2377
    %2379 = vmatprep.subr.mxu0 %v183
    %2380 = vmatpush1.msra.mxu0 %v182
    %2381 = vmatprep.subr.mxu0 %v187
    %2382 = vmatpush1.msra.mxu0 %v186
    %2383 = vmatprep.subr.mxu0 %v191
    %2384 = vmatpush1.msra.mxu0 %v190
    %2385 = vmatprep.subr.mxu0 %v195
    %2386 = vmatpush1.msra.mxu0 %v194
    %2387 = vmatprep.subr.mxu0 %v199
    %2388 = vmatpush1.msra.mxu0 %v198
    %2389 = vmatprep.subr.mxu0 %v203
    %2390 = vmatpush1.msra.mxu0 %v202
    %2391 = vmatprep.subr.mxu0 %v207
    %2392 = vmatpush1.msra.mxu0 %v206
    %2393 = vmatprep.subr.mxu0 %v211
    %2394 = vmatpush1.msra.mxu0 %v210
    %2395 = vmatprep.subr.mxu0 %v215
    %2396 = vmatpush1.msra.mxu0 %v214
    %2397 = vmatprep.subr.mxu0 %v219
    %2398 = vmatpush1.msra.mxu0 %v218
    %2399 = vmatprep.subr.mxu0 %v223
    %2400 = vmatpush1.msra.mxu0 %v222
    %2401 = vmatprep.subr.mxu0 %v227
    %2402 = vmatpush1.msra.mxu0 %v226
    %2403 = vmatprep.subr.mxu0 %v231
    %2404 = vmatpush1.msra.mxu0 %v230
    %2405 = vmatprep.subr.mxu0 %v235
    %2406 = vmatpush1.msra.mxu0 %v234
    %2407 = vmatprep.subr.mxu0 %v239
    %2408 = vmatpush1.msra.mxu0 %v238
    %2409 = vmatprep.subr.mxu0 %v243
    %2410 = vmatpush1.msra.mxu0 %v242
    %2411 = vmatprep.subr.mxu0 0.0
    %2412 = vmatpush1.msra.mxu0 0.0
    %2413 = vmatprep.subr.mxu0 0.0
    %2414 = vmatpush1.msra.mxu0 0.0
    %2415 = vmatprep.subr.mxu0 0.0
    %2416 = vmatpush1.msra.mxu0 0.0
    %2417 = vmatprep.subr.mxu0 0.0
    %2418 = vmatpush1.msra.mxu0 0.0
    %2419 = vmatprep.subr.mxu0 0.0
    %2420 = vmatpush1.msra.mxu0 0.0
    %2421 = vmatprep.subr.mxu0 0.0
    %2422 = vmatpush1.msra.mxu0 0.0
    %2423 = vmatprep.subr.mxu0 0.0
    %2424 = vmatpush1.msra.mxu0 0.0
    %2425 = vmatprep.subr.mxu0 0.0
    %2426 = vmatpush1.msra.mxu0 0.0
    %2427 = vmatprep.subr.mxu0 0.0
    %2428 = vmatpush1.msra.mxu0 0.0
    %2429 = vmatprep.subr.mxu0 0.0
    %2430 = vmatpush1.msra.mxu0 0.0
    %2431 = vmatprep.subr.mxu0 0.0
    %2432 = vmatpush1.msra.mxu0 0.0
    %2433 = vmatprep.subr.mxu0 0.0
    %2434 = vmatpush1.msra.mxu0 0.0
    %2435 = vmatprep.subr.mxu0 0.0
    %2436 = vmatpush1.msra.mxu0 0.0
    %2437 = vmatprep.subr.mxu0 0.0
    %2438 = vmatpush1.msra.mxu0 0.0
    %2439 = vmatprep.subr.mxu0 0.0
    %2440 = vmatpush1.msra.mxu0 0.0
    %2441 = vmatprep.subr.mxu0 0.0
    %2442 = vmatpush1.msra.mxu0 0.0
    %2443 = vmatprep.mubr.f32.mxu0 0.0
    %2444 = vmatmul.mubr.f32.gmra.mrb[0].mxu0 %v2378
    %v2445 = vpop.f32.mrb[0].mxu0
    %v2446 = vadd.f32 0.0, %v2445
    %v2447 = vpop.f32.mrb[0].mxu0
    %v2448 = vadd.f32 0.0, %v2447
    %2449 = vdwg.mxu0
    %2450 = vmatprep.subr.mxu0 %v185
    %2451 = vmatpush1.msra.mxu0 %v184
    %2452 = vmatprep.subr.mxu0 %v189
    %2453 = vmatpush1.msra.mxu0 %v188
    %2454 = vmatprep.subr.mxu0 %v193
    %2455 = vmatpush1.msra.mxu0 %v192
    %2456 = vmatprep.subr.mxu0 %v197
    %2457 = vmatpush1.msra.mxu0 %v196
    %2458 = vmatprep.subr.mxu0 %v201
    %2459 = vmatpush1.msra.mxu0 %v200
    %2460 = vmatprep.subr.mxu0 %v205
    %2461 = vmatpush1.msra.mxu0 %v204
    %2462 = vmatprep.subr.mxu0 %v209
    %2463 = vmatpush1.msra.mxu0 %v208
    %2464 = vmatprep.subr.mxu0 %v213
    %2465 = vmatpush1.msra.mxu0 %v212
    %2466 = vmatprep.subr.mxu0 %v217
    %2467 = vmatpush1.msra.mxu0 %v216
    %2468 = vmatprep.subr.mxu0 %v221
    %2469 = vmatpush1.msra.mxu0 %v220
    %2470 = vmatprep.subr.mxu0 %v225
    %2471 = vmatpush1.msra.mxu0 %v224
    %2472 = vmatprep.subr.mxu0 %v229
    %2473 = vmatpush1.msra.mxu0 %v228
    %2474 = vmatprep.subr.mxu0 %v233
    %2475 = vmatpush1.msra.mxu0 %v232
    %2476 = vmatprep.subr.mxu0 %v237
    %2477 = vmatpush1.msra.mxu0 %v236
    %2478 = vmatprep.subr.mxu0 %v241
    %2479 = vmatpush1.msra.mxu0 %v240
    %2480 = vmatprep.subr.mxu0 %v245
    %2481 = vmatpush1.msra.mxu0 %v244
    %2482 = vmatprep.subr.mxu0 0.0
    %2483 = vmatpush1.msra.mxu0 0.0
    %2484 = vmatprep.subr.mxu0 0.0
    %2485 = vmatpush1.msra.mxu0 0.0
    %2486 = vmatprep.subr.mxu0 0.0
    %2487 = vmatpush1.msra.mxu0 0.0
    %2488 = vmatprep.subr.mxu0 0.0
    %2489 = vmatpush1.msra.mxu0 0.0
    %2490 = vmatprep.subr.mxu0 0.0
    %2491 = vmatpush1.msra.mxu0 0.0
    %2492 = vmatprep.subr.mxu0 0.0
    %2493 = vmatpush1.msra.mxu0 0.0
    %2494 = vmatprep.subr.mxu0 0.0
    %2495 = vmatpush1.msra.mxu0 0.0
    %2496 = vmatprep.subr.mxu0 0.0
    %2497 = vmatpush1.msra.mxu0 0.0
    %2498 = vmatprep.subr.mxu0 0.0
    %2499 = vmatpush1.msra.mxu0 0.0
    %2500 = vmatprep.subr.mxu0 0.0
    %2501 = vmatpush1.msra.mxu0 0.0
    %2502 = vmatprep.subr.mxu0 0.0
    %2503 = vmatpush1.msra.mxu0 0.0
    %2504 = vmatprep.subr.mxu0 0.0
    %2505 = vmatpush1.msra.mxu0 0.0
    %2506 = vmatprep.subr.mxu0 0.0
    %2507 = vmatpush1.msra.mxu0 0.0
    %2508 = vmatprep.subr.mxu0 0.0
    %2509 = vmatpush1.msra.mxu0 0.0
    %2510 = vmatprep.subr.mxu0 0.0
    %2511 = vmatpush1.msra.mxu0 0.0
    %2512 = vmatprep.subr.mxu0 0.0
    %2513 = vmatpush1.msra.mxu0 0.0
    %2514 = vmatprep.mubr.f32.mxu0 0.0
    %2515 = vmatmul.mubr.f32.gmra.mrb[0].mxu0 %v2378
    %v2516 = vpop.f32.mrb[0].mxu0
    %v2517 = vadd.f32 0.0, %v2516
    %v2518 = vpop.f32.mrb[0].mxu0
    %v2519 = vadd.f32 0.0, %v2518
    %2520 = vdwg.mxu0
    %v2521 = vadd.f32 %v2134, %v2446
    %v2522 = vadd.f32 %v2136, %v2448
    %v2523 = vadd.f32 %v2205, %v2517
    %v2524 = vadd.f32 %v2207, %v2519
    %v2525 = vxor.u32 %v2521, 2147483648
    %v2526 = vxor.u32 %v2522, 2147483648
    %v2527 = vxor.u32 %v2524, 2147483648
    %v2528 = vmul.f32 %v2525, 1.442695
    %v2529 = vpow.pop %v2528
    %v2530 = vmul.f32 %v2526, 1.442695
    %v2531 = vpow.pop %v2530
    %v2532 = vmul.f32 %v2527, 1.442695
    %v2533 = vpow.pop %v2532
    %v2534 = vadd.f32 %v2529, 1.0
    %v2535 = vadd.f32 %v2531, 1.0
    %v2536 = vadd.f32 %v2533, 1.0
    %v2537 = vrcp.pop %v2534
    %v2538 = vmul.f32 1.0, %v2537
    %v2539 = vrcp.pop %v2535
    %v2540 = vmul.f32 1.0, %v2539
    %v2541 = vrcp.pop %v2536
    %v2542 = vmul.f32 1.0, %v2541
    %v2543 = vtanh.pop %v2523
    %v2544 = vmul.f32 %v2540, %v2064
    %v2545 = vmul.f32 %v2538, %v2543
    %v2546 = vadd.f32 %v2544, %v2545
    %v2547 = vtanh.pop %v2546
    %v2548 = vmul.f32 %v2542, %v2547
    %2549 = vmatprep.subr.mxu0 %v247
    %2550 = vmatpush1.msra.mxu0 %v246
    %2551 = vmatprep.subr.mxu0 %v251
    %2552 = vmatpush1.msra.mxu0 %v250
    %2553 = vmatprep.subr.mxu0 %v255
    %2554 = vmatpush1.msra.mxu0 %v254
    %2555 = vmatprep.subr.mxu0 %v259
    %2556 = vmatpush1.msra.mxu0 %v258
    %2557 = vmatprep.subr.mxu0 %v263
    %2558 = vmatpush1.msra.mxu0 %v262
    %2559 = vmatprep.subr.mxu0 %v267
    %2560 = vmatpush1.msra.mxu0 %v266
    %2561 = vmatprep.subr.mxu0 %v271
    %2562 = vmatpush1.msra.mxu0 %v270
    %2563 = vmatprep.subr.mxu0 %v275
    %2564 = vmatpush1.msra.mxu0 %v274
    %2565 = vmatprep.subr.mxu0 %v279
    %2566 = vmatpush1.msra.mxu0 %v278
    %2567 = vmatprep.subr.mxu0 %v283
    %2568 = vmatpush1.msra.mxu0 %v282
    %2569 = vmatprep.subr.mxu0 %v287
    %2570 = vmatpush1.msra.mxu0 %v286
    %2571 = vmatprep.subr.mxu0 %v291
    %2572 = vmatpush1.msra.mxu0 %v290
    %2573 = vmatprep.subr.mxu0 %v295
    %2574 = vmatpush1.msra.mxu0 %v294
    %2575 = vmatprep.subr.mxu0 %v299
    %2576 = vmatpush1.msra.mxu0 %v298
    %2577 = vmatprep.subr.mxu0 %v303
    %2578 = vmatpush1.msra.mxu0 %v302
    %2579 = vmatprep.subr.mxu0 %v307
    %2580 = vmatpush1.msra.mxu0 %v306
    %2581 = vmatprep.subr.mxu0 0.0
    %2582 = vmatpush1.msra.mxu0 0.0
    %2583 = vmatprep.subr.mxu0 0.0
    %2584 = vmatpush1.msra.mxu0 0.0
    %2585 = vmatprep.subr.mxu0 0.0
    %2586 = vmatpush1.msra.mxu0 0.0
    %2587 = vmatprep.subr.mxu0 0.0
    %2588 = vmatpush1.msra.mxu0 0.0
    %2589 = vmatprep.subr.mxu0 0.0
    %2590 = vmatpush1.msra.mxu0 0.0
    %2591 = vmatprep.subr.mxu0 0.0
    %2592 = vmatpush1.msra.mxu0 0.0
    %2593 = vmatprep.subr.mxu0 0.0
    %2594 = vmatpush1.msra.mxu0 0.0
    %2595 = vmatprep.subr.mxu0 0.0
    %2596 = vmatpush1.msra.mxu0 0.0
    %2597 = vmatprep.subr.mxu0 0.0
    %2598 = vmatpush1.msra.mxu0 0.0
    %2599 = vmatprep.subr.mxu0 0.0
    %2600 = vmatpush1.msra.mxu0 0.0
    %2601 = vmatprep.subr.mxu0 0.0
    %2602 = vmatpush1.msra.mxu0 0.0
    %2603 = vmatprep.subr.mxu0 0.0
    %2604 = vmatpush1.msra.mxu0 0.0
    %2605 = vmatprep.subr.mxu0 0.0
    %2606 = vmatpush1.msra.mxu0 0.0
    %2607 = vmatprep.subr.mxu0 0.0
    %2608 = vmatpush1.msra.mxu0 0.0
    %2609 = vmatprep.subr.mxu0 0.0
    %2610 = vmatpush1.msra.mxu0 0.0
    %2611 = vmatprep.subr.mxu0 0.0
    %2612 = vmatpush1.msra.mxu0 0.0
    %2613 = vmatprep.mubr.f32.mxu0 0.0
    %2614 = vmatmul.mubr.f32.gmra.mrb[0].mxu0 %v2548
    %v2615 = vpop.f32.mrb[0].mxu0
    %v2616 = vadd.f32 %v604, %v2615
    %v2617 = vpop.f32.mrb[0].mxu0
    %v2618 = vadd.f32 %v608, %v2617
    %2619 = vdwg.mxu0
    %2620 = vmatprep.subr.mxu0 %v249
    %2621 = vmatpush1.msra.mxu0 %v248
    %2622 = vmatprep.subr.mxu0 %v253
    %2623 = vmatpush1.msra.mxu0 %v252
    %2624 = vmatprep.subr.mxu0 %v257
    %2625 = vmatpush1.msra.mxu0 %v256
    %2626 = vmatprep.subr.mxu0 %v261
    %2627 = vmatpush1.msra.mxu0 %v260
    %2628 = vmatprep.subr.mxu0 %v265
    %2629 = vmatpush1.msra.mxu0 %v264
    %2630 = vmatprep.subr.mxu0 %v269
    %2631 = vmatpush1.msra.mxu0 %v268
    %2632 = vmatprep.subr.mxu0 %v273
    %2633 = vmatpush1.msra.mxu0 %v272
    %2634 = vmatprep.subr.mxu0 %v277
    %2635 = vmatpush1.msra.mxu0 %v276
    %2636 = vmatprep.subr.mxu0 %v281
    %2637 = vmatpush1.msra.mxu0 %v280
    %2638 = vmatprep.subr.mxu0 %v285
    %2639 = vmatpush1.msra.mxu0 %v284
    %2640 = vmatprep.subr.mxu0 %v289
    %2641 = vmatpush1.msra.mxu0 %v288
    %2642 = vmatprep.subr.mxu0 %v293
    %2643 = vmatpush1.msra.mxu0 %v292
    %2644 = vmatprep.subr.mxu0 %v297
    %2645 = vmatpush1.msra.mxu0 %v296
    %2646 = vmatprep.subr.mxu0 %v301
    %2647 = vmatpush1.msra.mxu0 %v300
    %2648 = vmatprep.subr.mxu0 %v305
    %2649 = vmatpush1.msra.mxu0 %v304
    %2650 = vmatprep.subr.mxu0 %v309
    %2651 = vmatpush1.msra.mxu0 %v308
    %2652 = vmatprep.subr.mxu0 0.0
    %2653 = vmatpush1.msra.mxu0 0.0
    %2654 = vmatprep.subr.mxu0 0.0
    %2655 = vmatpush1.msra.mxu0 0.0
    %2656 = vmatprep.subr.mxu0 0.0
    %2657 = vmatpush1.msra.mxu0 0.0
    %2658 = vmatprep.subr.mxu0 0.0
    %2659 = vmatpush1.msra.mxu0 0.0
    %2660 = vmatprep.subr.mxu0 0.0
    %2661 = vmatpush1.msra.mxu0 0.0
    %2662 = vmatprep.subr.mxu0 0.0
    %2663 = vmatpush1.msra.mxu0 0.0
    %2664 = vmatprep.subr.mxu0 0.0
    %2665 = vmatpush1.msra.mxu0 0.0
    %2666 = vmatprep.subr.mxu0 0.0
    %2667 = vmatpush1.msra.mxu0 0.0
    %2668 = vmatprep.subr.mxu0 0.0
    %2669 = vmatpush1.msra.mxu0 0.0
    %2670 = vmatprep.subr.mxu0 0.0
    %2671 = vmatpush1.msra.mxu0 0.0
    %2672 = vmatprep.subr.mxu0 0.0
    %2673 = vmatpush1.msra.mxu0 0.0
    %2674 = vmatprep.subr.mxu0 0.0
    %2675 = vmatpush1.msra.mxu0 0.0
    %2676 = vmatprep.subr.mxu0 0.0
    %2677 = vmatpush1.msra.mxu0 0.0
    %2678 = vmatprep.subr.mxu0 0.0
    %2679 = vmatpush1.msra.mxu0 0.0
    %2680 = vmatprep.subr.mxu0 0.0
    %2681 = vmatpush1.msra.mxu0 0.0
    %2682 = vmatprep.subr.mxu0 0.0
    %2683 = vmatpush1.msra.mxu0 0.0
    %2684 = vmatprep.mubr.f32.mxu0 0.0
    %2685 = vmatmul.mubr.f32.gmra.mrb[0].mxu0 %v2548
    %v2686 = vpop.f32.mrb[0].mxu0
    %v2687 = vadd.f32 %v612, %v2686
    %v2688 = vpop.f32.mrb[0].mxu0
    %v2689 = vadd.f32 %v616, %v2688
    %2690 = vdwg.mxu0
    %2691 = vmatprep.subr.mxu0 %v119
    %2692 = vmatpush1.msra.mxu0 %v118
    %2693 = vmatprep.subr.mxu0 %v123
    %2694 = vmatpush1.msra.mxu0 %v122
    %2695 = vmatprep.subr.mxu0 %v127
    %2696 = vmatpush1.msra.mxu0 %v126
    %2697 = vmatprep.subr.mxu0 %v131
    %2698 = vmatpush1.msra.mxu0 %v130
    %2699 = vmatprep.subr.mxu0 %v135
    %2700 = vmatpush1.msra.mxu0 %v134
    %2701 = vmatprep.subr.mxu0 %v139
    %2702 = vmatpush1.msra.mxu0 %v138
    %2703 = vmatprep.subr.mxu0 %v143
    %2704 = vmatpush1.msra.mxu0 %v142
    %2705 = vmatprep.subr.mxu0 %v147
    %2706 = vmatpush1.msra.mxu0 %v146
    %2707 = vmatprep.subr.mxu0 %v151
    %2708 = vmatpush1.msra.mxu0 %v150
    %2709 = vmatprep.subr.mxu0 %v155
    %2710 = vmatpush1.msra.mxu0 %v154
    %2711 = vmatprep.subr.mxu0 %v159
    %2712 = vmatpush1.msra.mxu0 %v158
    %2713 = vmatprep.subr.mxu0 %v163
    %2714 = vmatpush1.msra.mxu0 %v162
    %2715 = vmatprep.subr.mxu0 %v167
    %2716 = vmatpush1.msra.mxu0 %v166
    %2717 = vmatprep.subr.mxu0 %v171
    %2718 = vmatpush1.msra.mxu0 %v170
    %2719 = vmatprep.subr.mxu0 %v175
    %2720 = vmatpush1.msra.mxu0 %v174
    %2721 = vmatprep.subr.mxu0 %v179
    %2722 = vmatpush1.msra.mxu0 %v178
    %2723 = vmatprep.subr.mxu0 0.0
    %2724 = vmatpush1.msra.mxu0 0.0
    %2725 = vmatprep.subr.mxu0 0.0
    %2726 = vmatpush1.msra.mxu0 0.0
    %2727 = vmatprep.subr.mxu0 0.0
    %2728 = vmatpush1.msra.mxu0 0.0
    %2729 = vmatprep.subr.mxu0 0.0
    %2730 = vmatpush1.msra.mxu0 0.0
    %2731 = vmatprep.subr.mxu0 0.0
    %2732 = vmatpush1.msra.mxu0 0.0
    %2733 = vmatprep.subr.mxu0 0.0
    %2734 = vmatpush1.msra.mxu0 0.0
    %2735 = vmatprep.subr.mxu0 0.0
    %2736 = vmatpush1.msra.mxu0 0.0
    %2737 = vmatprep.subr.mxu0 0.0
    %2738 = vmatpush1.msra.mxu0 0.0
    %2739 = vmatprep.subr.mxu0 0.0
    %2740 = vmatpush1.msra.mxu0 0.0
    %2741 = vmatprep.subr.mxu0 0.0
    %2742 = vmatpush1.msra.mxu0 0.0
    %2743 = vmatprep.subr.mxu0 0.0
    %2744 = vmatpush1.msra.mxu0 0.0
    %2745 = vmatprep.subr.mxu0 0.0
    %2746 = vmatpush1.msra.mxu0 0.0
    %2747 = vmatprep.subr.mxu0 0.0
    %2748 = vmatpush1.msra.mxu0 0.0
    %2749 = vmatprep.subr.mxu0 0.0
    %2750 = vmatpush1.msra.mxu0 0.0
    %2751 = vmatprep.subr.mxu0 0.0
    %2752 = vmatpush1.msra.mxu0 0.0
    %2753 = vmatprep.subr.mxu0 0.0
    %2754 = vmatpush1.msra.mxu0 0.0
    %2755 = vmatprep.mubr.f32.mxu0 0.0
    %2756 = vmatmul.mubr.f32.gmra.mrb[0].mxu0 %v2378
    %v2757 = vpop.f32.mrb[0].mxu0
    %v2758 = vadd.f32 0.0, %v2757
    %v2759 = vpop.f32.mrb[0].mxu0
    %v2760 = vadd.f32 0.0, %v2759
    %2761 = vdwg.mxu0
    %2762 = vmatprep.subr.mxu0 %v121
    %2763 = vmatpush1.msra.mxu0 %v120
    %2764 = vmatprep.subr.mxu0 %v125
    %2765 = vmatpush1.msra.mxu0 %v124
    %2766 = vmatprep.subr.mxu0 %v129
    %2767 = vmatpush1.msra.mxu0 %v128
    %2768 = vmatprep.subr.mxu0 %v133
    %2769 = vmatpush1.msra.mxu0 %v132
    %2770 = vmatprep.subr.mxu0 %v137
    %2771 = vmatpush1.msra.mxu0 %v136
    %2772 = vmatprep.subr.mxu0 %v141
    %2773 = vmatpush1.msra.mxu0 %v140
    %2774 = vmatprep.subr.mxu0 %v145
    %2775 = vmatpush1.msra.mxu0 %v144
    %2776 = vmatprep.subr.mxu0 %v149
    %2777 = vmatpush1.msra.mxu0 %v148
    %2778 = vmatprep.subr.mxu0 %v153
    %2779 = vmatpush1.msra.mxu0 %v152
    %2780 = vmatprep.subr.mxu0 %v157
    %2781 = vmatpush1.msra.mxu0 %v156
    %2782 = vmatprep.subr.mxu0 %v161
    %2783 = vmatpush1.msra.mxu0 %v160
    %2784 = vmatprep.subr.mxu0 %v165
    %2785 = vmatpush1.msra.mxu0 %v164
    %2786 = vmatprep.subr.mxu0 %v169
    %2787 = vmatpush1.msra.mxu0 %v168
    %2788 = vmatprep.subr.mxu0 %v173
    %2789 = vmatpush1.msra.mxu0 %v172
    %2790 = vmatprep.subr.mxu0 %v177
    %2791 = vmatpush1.msra.mxu0 %v176
    %2792 = vmatprep.subr.mxu0 %v181
    %2793 = vmatpush1.msra.mxu0 %v180
    %2794 = vmatprep.subr.mxu0 0.0
    %2795 = vmatpush1.msra.mxu0 0.0
    %2796 = vmatprep.subr.mxu0 0.0
    %2797 = vmatpush1.msra.mxu0 0.0
    %2798 = vmatprep.subr.mxu0 0.0
    %2799 = vmatpush1.msra.mxu0 0.0
    %2800 = vmatprep.subr.mxu0 0.0
    %2801 = vmatpush1.msra.mxu0 0.0
    %2802 = vmatprep.subr.mxu0 0.0
    %2803 = vmatpush1.msra.mxu0 0.0
    %2804 = vmatprep.subr.mxu0 0.0
    %2805 = vmatpush1.msra.mxu0 0.0
    %2806 = vmatprep.subr.mxu0 0.0
    %2807 = vmatpush1.msra.mxu0 0.0
    %2808 = vmatprep.subr.mxu0 0.0
    %2809 = vmatpush1.msra.mxu0 0.0
    %2810 = vmatprep.subr.mxu0 0.0
    %2811 = vmatpush1.msra.mxu0 0.0
    %2812 = vmatprep.subr.mxu0 0.0
    %2813 = vmatpush1.msra.mxu0 0.0
    %2814 = vmatprep.subr.mxu0 0.0
    %2815 = vmatpush1.msra.mxu0 0.0
    %2816 = vmatprep.subr.mxu0 0.0
    %2817 = vmatpush1.msra.mxu0 0.0
    %2818 = vmatprep.subr.mxu0 0.0
    %2819 = vmatpush1.msra.mxu0 0.0
    %2820 = vmatprep.subr.mxu0 0.0
    %2821 = vmatpush1.msra.mxu0 0.0
    %2822 = vmatprep.subr.mxu0 0.0
    %2823 = vmatpush1.msra.mxu0 0.0
    %2824 = vmatprep.subr.mxu0 0.0
    %2825 = vmatpush1.msra.mxu0 0.0
    %2826 = vmatprep.mubr.f32.mxu0 0.0
    %2827 = vmatmul.mubr.f32.gmra.mrb[0].mxu0 %v2378
    %v2828 = vpop.f32.mrb[0].mxu0
    %v2829 = vadd.f32 0.0, %v2828
    %v2830 = vpop.f32.mrb[0].mxu0
    %v2831 = vadd.f32 0.0, %v2830
    %2832 = vdwg.mxu0
    %v2833 = vadd.f32 %v464, %v2758
    %v2834 = vadd.f32 %v466, %v2760
    %v2835 = vadd.f32 %v577, %v2829
    %v2836 = vadd.f32 %v579, %v2831
    %v2837 = vxor.u32 %v2833, 2147483648
    %v2838 = vxor.u32 %v2834, 2147483648
    %v2839 = vxor.u32 %v2836, 2147483648
    %v2840 = vmul.f32 %v2837, 1.442695
    %v2841 = vpow.pop %v2840
    %v2842 = vmul.f32 %v2838, 1.442695
    %v2843 = vpow.pop %v2842
    %v2844 = vmul.f32 %v2839, 1.442695
    %v2845 = vpow.pop %v2844
    %v2846 = vadd.f32 %v2841, 1.0
    %v2847 = vadd.f32 %v2843, 1.0
    %v2848 = vadd.f32 %v2845, 1.0
    %v2849 = vrcp.pop %v2846
    %v2850 = vmul.f32 1.0, %v2849
    %v2851 = vrcp.pop %v2847
    %v2852 = vmul.f32 1.0, %v2851
    %v2853 = vrcp.pop %v2848
    %v2854 = vmul.f32 1.0, %v2853
    %v2855 = vtanh.pop %v2835
    %v2856 = vmul.f32 %v2852, %v2376
    %v2857 = vmul.f32 %v2850, %v2855
    %v2858 = vadd.f32 %v2856, %v2857
    %v2859 = vtanh.pop %v2858
    %v2860 = vmul.f32 %v2854, %v2859
    %2861 = vmatprep.subr.mxu0 %v183
    %2862 = vmatpush1.msra.mxu0 %v182
    %2863 = vmatprep.subr.mxu0 %v187
    %2864 = vmatpush1.msra.mxu0 %v186
    %2865 = vmatprep.subr.mxu0 %v191
    %2866 = vmatpush1.msra.mxu0 %v190
    %2867 = vmatprep.subr.mxu0 %v195
    %2868 = vmatpush1.msra.mxu0 %v194
    %2869 = vmatprep.subr.mxu0 %v199
    %2870 = vmatpush1.msra.mxu0 %v198
    %2871 = vmatprep.subr.mxu0 %v203
    %2872 = vmatpush1.msra.mxu0 %v202
    %2873 = vmatprep.subr.mxu0 %v207
    %2874 = vmatpush1.msra.mxu0 %v206
    %2875 = vmatprep.subr.mxu0 %v211
    %2876 = vmatpush1.msra.mxu0 %v210
    %2877 = vmatprep.subr.mxu0 %v215
    %2878 = vmatpush1.msra.mxu0 %v214
    %2879 = vmatprep.subr.mxu0 %v219
    %2880 = vmatpush1.msra.mxu0 %v218
    %2881 = vmatprep.subr.mxu0 %v223
    %2882 = vmatpush1.msra.mxu0 %v222
    %2883 = vmatprep.subr.mxu0 %v227
    %2884 = vmatpush1.msra.mxu0 %v226
    %2885 = vmatprep.subr.mxu0 %v231
    %2886 = vmatpush1.msra.mxu0 %v230
    %2887 = vmatprep.subr.mxu0 %v235
    %2888 = vmatpush1.msra.mxu0 %v234
    %2889 = vmatprep.subr.mxu0 %v239
    %2890 = vmatpush1.msra.mxu0 %v238
    %2891 = vmatprep.subr.mxu0 %v243
    %2892 = vmatpush1.msra.mxu0 %v242
    %2893 = vmatprep.subr.mxu0 0.0
    %2894 = vmatpush1.msra.mxu0 0.0
    %2895 = vmatprep.subr.mxu0 0.0
    %2896 = vmatpush1.msra.mxu0 0.0
    %2897 = vmatprep.subr.mxu0 0.0
    %2898 = vmatpush1.msra.mxu0 0.0
    %2899 = vmatprep.subr.mxu0 0.0
    %2900 = vmatpush1.msra.mxu0 0.0
    %2901 = vmatprep.subr.mxu0 0.0
    %2902 = vmatpush1.msra.mxu0 0.0
    %2903 = vmatprep.subr.mxu0 0.0
    %2904 = vmatpush1.msra.mxu0 0.0
    %2905 = vmatprep.subr.mxu0 0.0
    %2906 = vmatpush1.msra.mxu0 0.0
    %2907 = vmatprep.subr.mxu0 0.0
    %2908 = vmatpush1.msra.mxu0 0.0
    %2909 = vmatprep.subr.mxu0 0.0
    %2910 = vmatpush1.msra.mxu0 0.0
    %2911 = vmatprep.subr.mxu0 0.0
    %2912 = vmatpush1.msra.mxu0 0.0
    %2913 = vmatprep.subr.mxu0 0.0
    %2914 = vmatpush1.msra.mxu0 0.0
    %2915 = vmatprep.subr.mxu0 0.0
    %2916 = vmatpush1.msra.mxu0 0.0
    %2917 = vmatprep.subr.mxu0 0.0
    %2918 = vmatpush1.msra.mxu0 0.0
    %2919 = vmatprep.subr.mxu0 0.0
    %2920 = vmatpush1.msra.mxu0 0.0
    %2921 = vmatprep.subr.mxu0 0.0
    %2922 = vmatpush1.msra.mxu0 0.0
    %2923 = vmatprep.subr.mxu0 0.0
    %2924 = vmatpush1.msra.mxu0 0.0
    %2925 = vmatprep.mubr.f32.mxu0 0.0
    %2926 = vmatmul.mubr.f32.gmra.mrb[0].mxu0 %v2860
    %v2927 = vpop.f32.mrb[0].mxu0
    %v2928 = vadd.f32 0.0, %v2927
    %v2929 = vpop.f32.mrb[0].mxu0
    %v2930 = vadd.f32 0.0, %v2929
    %2931 = vdwg.mxu0
    %2932 = vmatprep.subr.mxu0 %v185
    %2933 = vmatpush1.msra.mxu0 %v184
    %2934 = vmatprep.subr.mxu0 %v189
    %2935 = vmatpush1.msra.mxu0 %v188
    %2936 = vmatprep.subr.mxu0 %v193
    %2937 = vmatpush1.msra.mxu0 %v192
    %2938 = vmatprep.subr.mxu0 %v197
    %2939 = vmatpush1.msra.mxu0 %v196
    %2940 = vmatprep.subr.mxu0 %v201
    %2941 = vmatpush1.msra.mxu0 %v200
    %2942 = vmatprep.subr.mxu0 %v205
    %2943 = vmatpush1.msra.mxu0 %v204
    %2944 = vmatprep.subr.mxu0 %v209
    %2945 = vmatpush1.msra.mxu0 %v208
    %2946 = vmatprep.subr.mxu0 %v213
    %2947 = vmatpush1.msra.mxu0 %v212
    %2948 = vmatprep.subr.mxu0 %v217
    %2949 = vmatpush1.msra.mxu0 %v216
    %2950 = vmatprep.subr.mxu0 %v221
    %2951 = vmatpush1.msra.mxu0 %v220
    %2952 = vmatprep.subr.mxu0 %v225
    %2953 = vmatpush1.msra.mxu0 %v224
    %2954 = vmatprep.subr.mxu0 %v229
    %2955 = vmatpush1.msra.mxu0 %v228
    %2956 = vmatprep.subr.mxu0 %v233
    %2957 = vmatpush1.msra.mxu0 %v232
    %2958 = vmatprep.subr.mxu0 %v237
    %2959 = vmatpush1.msra.mxu0 %v236
    %2960 = vmatprep.subr.mxu0 %v241
    %2961 = vmatpush1.msra.mxu0 %v240
    %2962 = vmatprep.subr.mxu0 %v245
    %2963 = vmatpush1.msra.mxu0 %v244
    %2964 = vmatprep.subr.mxu0 0.0
    %2965 = vmatpush1.msra.mxu0 0.0
    %2966 = vmatprep.subr.mxu0 0.0
    %2967 = vmatpush1.msra.mxu0 0.0
    %2968 = vmatprep.subr.mxu0 0.0
    %2969 = vmatpush1.msra.mxu0 0.0
    %2970 = vmatprep.subr.mxu0 0.0
    %2971 = vmatpush1.msra.mxu0 0.0
    %2972 = vmatprep.subr.mxu0 0.0
    %2973 = vmatpush1.msra.mxu0 0.0
    %2974 = vmatprep.subr.mxu0 0.0
    %2975 = vmatpush1.msra.mxu0 0.0
    %2976 = vmatprep.subr.mxu0 0.0
    %2977 = vmatpush1.msra.mxu0 0.0
    %2978 = vmatprep.subr.mxu0 0.0
    %2979 = vmatpush1.msra.mxu0 0.0
    %2980 = vmatprep.subr.mxu0 0.0
    %2981 = vmatpush1.msra.mxu0 0.0
    %2982 = vmatprep.subr.mxu0 0.0
    %2983 = vmatpush1.msra.mxu0 0.0
    %2984 = vmatprep.subr.mxu0 0.0
    %2985 = vmatpush1.msra.mxu0 0.0
    %2986 = vmatprep.subr.mxu0 0.0
    %2987 = vmatpush1.msra.mxu0 0.0
    %2988 = vmatprep.subr.mxu0 0.0
    %2989 = vmatpush1.msra.mxu0 0.0
    %2990 = vmatprep.subr.mxu0 0.0
    %2991 = vmatpush1.msra.mxu0 0.0
    %2992 = vmatprep.subr.mxu0 0.0
    %2993 = vmatpush1.msra.mxu0 0.0
    %2994 = vmatprep.subr.mxu0 0.0
    %2995 = vmatpush1.msra.mxu0 0.0
    %2996 = vmatprep.mubr.f32.mxu0 0.0
    %2997 = vmatmul.mubr.f32.gmra.mrb[0].mxu0 %v2860
    %v2998 = vpop.f32.mrb[0].mxu0
    %v2999 = vadd.f32 0.0, %v2998
    %v3000 = vpop.f32.mrb[0].mxu0
    %v3001 = vadd.f32 0.0, %v3000
    %3002 = vdwg.mxu0
    %v3003 = vadd.f32 %v2616, %v2928
    %v3004 = vadd.f32 %v2618, %v2930
    %v3005 = vadd.f32 %v2687, %v2999
    %v3006 = vadd.f32 %v2689, %v3001
    %v3007 = vxor.u32 %v3003, 2147483648
    %v3008 = vxor.u32 %v3004, 2147483648
    %v3009 = vxor.u32 %v3006, 2147483648
    %v3010 = vmul.f32 %v3007, 1.442695
    %v3011 = vpow.pop %v3010
    %v3012 = vmul.f32 %v3008, 1.442695
    %v3013 = vpow.pop %v3012
    %v3014 = vmul.f32 %v3009, 1.442695
    %v3015 = vpow.pop %v3014
    %v3016 = vadd.f32 %v3011, 1.0
    %v3017 = vadd.f32 %v3013, 1.0
    %v3018 = vadd.f32 %v3015, 1.0
    %v3019 = vrcp.pop %v3016
    %v3020 = vmul.f32 1.0, %v3019
    %v3021 = vrcp.pop %v3017
    %v3022 = vmul.f32 1.0, %v3021
    %v3023 = vrcp.pop %v3018
    %v3024 = vmul.f32 1.0, %v3023
    %v3025 = vtanh.pop %v3005
    %v3026 = vmul.f32 %v3022, %v2546
    %v3027 = vmul.f32 %v3020, %v3025
    %v3028 = vadd.f32 %v3026, %v3027
    %v3029 = vtanh.pop %v3028
    %v3030 = vmul.f32 %v3024, %v3029
    %3031 = vmatprep.subr.mxu0 %v247
    %3032 = vmatpush1.msra.mxu0 %v246
    %3033 = vmatprep.subr.mxu0 %v251
    %3034 = vmatpush1.msra.mxu0 %v250
    %3035 = vmatprep.subr.mxu0 %v255
    %3036 = vmatpush1.msra.mxu0 %v254
    %3037 = vmatprep.subr.mxu0 %v259
    %3038 = vmatpush1.msra.mxu0 %v258
    %3039 = vmatprep.subr.mxu0 %v263
    %3040 = vmatpush1.msra.mxu0 %v262
    %3041 = vmatprep.subr.mxu0 %v267
    %3042 = vmatpush1.msra.mxu0 %v266
    %3043 = vmatprep.subr.mxu0 %v271
    %3044 = vmatpush1.msra.mxu0 %v270
    %3045 = vmatprep.subr.mxu0 %v275
    %3046 = vmatpush1.msra.mxu0 %v274
    %3047 = vmatprep.subr.mxu0 %v279
    %3048 = vmatpush1.msra.mxu0 %v278
    %3049 = vmatprep.subr.mxu0 %v283
    %3050 = vmatpush1.msra.mxu0 %v282
    %3051 = vmatprep.subr.mxu0 %v287
    %3052 = vmatpush1.msra.mxu0 %v286
    %3053 = vmatprep.subr.mxu0 %v291
    %3054 = vmatpush1.msra.mxu0 %v290
    %3055 = vmatprep.subr.mxu0 %v295
    %3056 = vmatpush1.msra.mxu0 %v294
    %3057 = vmatprep.subr.mxu0 %v299
    %3058 = vmatpush1.msra.mxu0 %v298
    %3059 = vmatprep.subr.mxu0 %v303
    %3060 = vmatpush1.msra.mxu0 %v302
    %3061 = vmatprep.subr.mxu0 %v307
    %3062 = vmatpush1.msra.mxu0 %v306
    %3063 = vmatprep.subr.mxu0 0.0
    %3064 = vmatpush1.msra.mxu0 0.0
    %3065 = vmatprep.subr.mxu0 0.0
    %3066 = vmatpush1.msra.mxu0 0.0
    %3067 = vmatprep.subr.mxu0 0.0
    %3068 = vmatpush1.msra.mxu0 0.0
    %3069 = vmatprep.subr.mxu0 0.0
    %3070 = vmatpush1.msra.mxu0 0.0
    %3071 = vmatprep.subr.mxu0 0.0
    %3072 = vmatpush1.msra.mxu0 0.0
    %3073 = vmatprep.subr.mxu0 0.0
    %3074 = vmatpush1.msra.mxu0 0.0
    %3075 = vmatprep.subr.mxu0 0.0
    %3076 = vmatpush1.msra.mxu0 0.0
    %3077 = vmatprep.subr.mxu0 0.0
    %3078 = vmatpush1.msra.mxu0 0.0
    %3079 = vmatprep.subr.mxu0 0.0
    %3080 = vmatpush1.msra.mxu0 0.0
    %3081 = vmatprep.subr.mxu0 0.0
    %3082 = vmatpush1.msra.mxu0 0.0
    %3083 = vmatprep.subr.mxu0 0.0
    %3084 = vmatpush1.msra.mxu0 0.0
    %3085 = vmatprep.subr.mxu0 0.0
    %3086 = vmatpush1.msra.mxu0 0.0
    %3087 = vmatprep.subr.mxu0 0.0
    %3088 = vmatpush1.msra.mxu0 0.0
    %3089 = vmatprep.subr.mxu0 0.0
    %3090 = vmatpush1.msra.mxu0 0.0
    %3091 = vmatprep.subr.mxu0 0.0
    %3092 = vmatpush1.msra.mxu0 0.0
    %3093 = vmatprep.subr.mxu0 0.0
    %3094 = vmatpush1.msra.mxu0 0.0
    %3095 = vmatprep.mubr.f32.mxu0 0.0
    %3096 = vmatmul.mubr.f32.gmra.mrb[0].mxu0 %v3030
    %v3097 = vpop.f32.mrb[0].mxu0
    %v3098 = vadd.f32 %v604, %v3097
    %v3099 = vpop.f32.mrb[0].mxu0
    %v3100 = vadd.f32 %v608, %v3099
    %3101 = vdwg.mxu0
    %3102 = vmatprep.subr.mxu0 %v249
    %3103 = vmatpush1.msra.mxu0 %v248
    %3104 = vmatprep.subr.mxu0 %v253
    %3105 = vmatpush1.msra.mxu0 %v252
    %3106 = vmatprep.subr.mxu0 %v257
    %3107 = vmatpush1.msra.mxu0 %v256
    %3108 = vmatprep.subr.mxu0 %v261
    %3109 = vmatpush1.msra.mxu0 %v260
    %3110 = vmatprep.subr.mxu0 %v265
    %3111 = vmatpush1.msra.mxu0 %v264
    %3112 = vmatprep.subr.mxu0 %v269
    %3113 = vmatpush1.msra.mxu0 %v268
    %3114 = vmatprep.subr.mxu0 %v273
    %3115 = vmatpush1.msra.mxu0 %v272
    %3116 = vmatprep.subr.mxu0 %v277
    %3117 = vmatpush1.msra.mxu0 %v276
    %3118 = vmatprep.subr.mxu0 %v281
    %3119 = vmatpush1.msra.mxu0 %v280
    %3120 = vmatprep.subr.mxu0 %v285
    %3121 = vmatpush1.msra.mxu0 %v284
    %3122 = vmatprep.subr.mxu0 %v289
    %3123 = vmatpush1.msra.mxu0 %v288
    %3124 = vmatprep.subr.mxu0 %v293
    %3125 = vmatpush1.msra.mxu0 %v292
    %3126 = vmatprep.subr.mxu0 %v297
    %3127 = vmatpush1.msra.mxu0 %v296
    %3128 = vmatprep.subr.mxu0 %v301
    %3129 = vmatpush1.msra.mxu0 %v300
    %3130 = vmatprep.subr.mxu0 %v305
    %3131 = vmatpush1.msra.mxu0 %v304
    %3132 = vmatprep.subr.mxu0 %v309
    %3133 = vmatpush1.msra.mxu0 %v308
    %3134 = vmatprep.subr.mxu0 0.0
    %3135 = vmatpush1.msra.mxu0 0.0
    %3136 = vmatprep.subr.mxu0 0.0
    %3137 = vmatpush1.msra.mxu0 0.0
    %3138 = vmatprep.subr.mxu0 0.0
    %3139 = vmatpush1.msra.mxu0 0.0
    %3140 = vmatprep.subr.mxu0 0.0
    %3141 = vmatpush1.msra.mxu0 0.0
    %3142 = vmatprep.subr.mxu0 0.0
    %3143 = vmatpush1.msra.mxu0 0.0
    %3144 = vmatprep.subr.mxu0 0.0
    %3145 = vmatpush1.msra.mxu0 0.0
    %3146 = vmatprep.subr.mxu0 0.0
    %3147 = vmatpush1.msra.mxu0 0.0
    %3148 = vmatprep.subr.mxu0 0.0
    %3149 = vmatpush1.msra.mxu0 0.0
    %3150 = vmatprep.subr.mxu0 0.0
    %3151 = vmatpush1.msra.mxu0 0.0
    %3152 = vmatprep.subr.mxu0 0.0
    %3153 = vmatpush1.msra.mxu0 0.0
    %3154 = vmatprep.subr.mxu0 0.0
    %3155 = vmatpush1.msra.mxu0 0.0
    %3156 = vmatprep.subr.mxu0 0.0
    %3157 = vmatpush1.msra.mxu0 0.0
    %3158 = vmatprep.subr.mxu0 0.0
    %3159 = vmatpush1.msra.mxu0 0.0
    %3160 = vmatprep.subr.mxu0 0.0
    %3161 = vmatpush1.msra.mxu0 0.0
    %3162 = vmatprep.subr.mxu0 0.0
    %3163 = vmatpush1.msra.mxu0 0.0
    %3164 = vmatprep.subr.mxu0 0.0
    %3165 = vmatpush1.msra.mxu0 0.0
    %3166 = vmatprep.mubr.f32.mxu0 0.0
    %3167 = vmatmul.mubr.f32.gmra.mrb[0].mxu0 %v3030
    %v3168 = vpop.f32.mrb[0].mxu0
    %v3169 = vadd.f32 %v612, %v3168
    %v3170 = vpop.f32.mrb[0].mxu0
    %v3171 = vadd.f32 %v616, %v3170
    %3172 = vdwg.mxu0
    %3173 = vmatprep.subr.mxu0 %v119
    %3174 = vmatpush1.msra.mxu0 %v118
    %3175 = vmatprep.subr.mxu0 %v123
    %3176 = vmatpush1.msra.mxu0 %v122
    %3177 = vmatprep.subr.mxu0 %v127
    %3178 = vmatpush1.msra.mxu0 %v126
    %3179 = vmatprep.subr.mxu0 %v131
    %3180 = vmatpush1.msra.mxu0 %v130
    %3181 = vmatprep.subr.mxu0 %v135
    %3182 = vmatpush1.msra.mxu0 %v134
    %3183 = vmatprep.subr.mxu0 %v139
    %3184 = vmatpush1.msra.mxu0 %v138
    %3185 = vmatprep.subr.mxu0 %v143
    %3186 = vmatpush1.msra.mxu0 %v142
    %3187 = vmatprep.subr.mxu0 %v147
    %3188 = vmatpush1.msra.mxu0 %v146
    %3189 = vmatprep.subr.mxu0 %v151
    %3190 = vmatpush1.msra.mxu0 %v150
    %3191 = vmatprep.subr.mxu0 %v155
    %3192 = vmatpush1.msra.mxu0 %v154
    %3193 = vmatprep.subr.mxu0 %v159
    %3194 = vmatpush1.msra.mxu0 %v158
    %3195 = vmatprep.subr.mxu0 %v163
    %3196 = vmatpush1.msra.mxu0 %v162
    %3197 = vmatprep.subr.mxu0 %v167
    %3198 = vmatpush1.msra.mxu0 %v166
    %3199 = vmatprep.subr.mxu0 %v171
    %3200 = vmatpush1.msra.mxu0 %v170
    %3201 = vmatprep.subr.mxu0 %v175
    %3202 = vmatpush1.msra.mxu0 %v174
    %3203 = vmatprep.subr.mxu0 %v179
    %3204 = vmatpush1.msra.mxu0 %v178
    %3205 = vmatprep.subr.mxu0 0.0
    %3206 = vmatpush1.msra.mxu0 0.0
    %3207 = vmatprep.subr.mxu0 0.0
    %3208 = vmatpush1.msra.mxu0 0.0
    %3209 = vmatprep.subr.mxu0 0.0
    %3210 = vmatpush1.msra.mxu0 0.0
    %3211 = vmatprep.subr.mxu0 0.0
    %3212 = vmatpush1.msra.mxu0 0.0
    %3213 = vmatprep.subr.mxu0 0.0
    %3214 = vmatpush1.msra.mxu0 0.0
    %3215 = vmatprep.subr.mxu0 0.0
    %3216 = vmatpush1.msra.mxu0 0.0
    %3217 = vmatprep.subr.mxu0 0.0
    %3218 = vmatpush1.msra.mxu0 0.0
    %3219 = vmatprep.subr.mxu0 0.0
    %3220 = vmatpush1.msra.mxu0 0.0
    %3221 = vmatprep.subr.mxu0 0.0
    %3222 = vmatpush1.msra.mxu0 0.0
    %3223 = vmatprep.subr.mxu0 0.0
    %3224 = vmatpush1.msra.mxu0 0.0
    %3225 = vmatprep.subr.mxu0 0.0
    %3226 = vmatpush1.msra.mxu0 0.0
    %3227 = vmatprep.subr.mxu0 0.0
    %3228 = vmatpush1.msra.mxu0 0.0
    %3229 = vmatprep.subr.mxu0 0.0
    %3230 = vmatpush1.msra.mxu0 0.0
    %3231 = vmatprep.subr.mxu0 0.0
    %3232 = vmatpush1.msra.mxu0 0.0
    %3233 = vmatprep.subr.mxu0 0.0
    %3234 = vmatpush1.msra.mxu0 0.0
    %3235 = vmatprep.subr.mxu0 0.0
    %3236 = vmatpush1.msra.mxu0 0.0
    %3237 = vmatprep.mubr.f32.mxu0 0.0
    %3238 = vmatmul.mubr.f32.gmra.mrb[0].mxu0 %v2860
    %v3239 = vpop.f32.mrb[0].mxu0
    %v3240 = vadd.f32 0.0, %v3239
    %v3241 = vpop.f32.mrb[0].mxu0
    %v3242 = vadd.f32 0.0, %v3241
    %3243 = vdwg.mxu0
    %3244 = vmatprep.subr.mxu0 %v121
    %3245 = vmatpush1.msra.mxu0 %v120
    %3246 = vmatprep.subr.mxu0 %v125
    %3247 = vmatpush1.msra.mxu0 %v124
    %3248 = vmatprep.subr.mxu0 %v129
    %3249 = vmatpush1.msra.mxu0 %v128
    %3250 = vmatprep.subr.mxu0 %v133
    %3251 = vmatpush1.msra.mxu0 %v132
    %3252 = vmatprep.subr.mxu0 %v137
    %3253 = vmatpush1.msra.mxu0 %v136
    %3254 = vmatprep.subr.mxu0 %v141
    %3255 = vmatpush1.msra.mxu0 %v140
    %3256 = vmatprep.subr.mxu0 %v145
    %3257 = vmatpush1.msra.mxu0 %v144
    %3258 = vmatprep.subr.mxu0 %v149
    %3259 = vmatpush1.msra.mxu0 %v148
    %3260 = vmatprep.subr.mxu0 %v153
    %3261 = vmatpush1.msra.mxu0 %v152
    %3262 = vmatprep.subr.mxu0 %v157
    %3263 = vmatpush1.msra.mxu0 %v156
    %3264 = vmatprep.subr.mxu0 %v161
    %3265 = vmatpush1.msra.mxu0 %v160
    %3266 = vmatprep.subr.mxu0 %v165
    %3267 = vmatpush1.msra.mxu0 %v164
    %3268 = vmatprep.subr.mxu0 %v169
    %3269 = vmatpush1.msra.mxu0 %v168
    %3270 = vmatprep.subr.mxu0 %v173
    %3271 = vmatpush1.msra.mxu0 %v172
    %3272 = vmatprep.subr.mxu0 %v177
    %3273 = vmatpush1.msra.mxu0 %v176
    %3274 = vmatprep.subr.mxu0 %v181
    %3275 = vmatpush1.msra.mxu0 %v180
    %3276 = vmatprep.subr.mxu0 0.0
    %3277 = vmatpush1.msra.mxu0 0.0
    %3278 = vmatprep.subr.mxu0 0.0
    %3279 = vmatpush1.msra.mxu0 0.0
    %3280 = vmatprep.subr.mxu0 0.0
    %3281 = vmatpush1.msra.mxu0 0.0
    %3282 = vmatprep.subr.mxu0 0.0
    %3283 = vmatpush1.msra.mxu0 0.0
    %3284 = vmatprep.subr.mxu0 0.0
    %3285 = vmatpush1.msra.mxu0 0.0
    %3286 = vmatprep.subr.mxu0 0.0
    %3287 = vmatpush1.msra.mxu0 0.0
    %3288 = vmatprep.subr.mxu0 0.0
    %3289 = vmatpush1.msra.mxu0 0.0
    %3290 = vmatprep.subr.mxu0 0.0
    %3291 = vmatpush1.msra.mxu0 0.0
    %3292 = vmatprep.subr.mxu0 0.0
    %3293 = vmatpush1.msra.mxu0 0.0
    %3294 = vmatprep.subr.mxu0 0.0
    %3295 = vmatpush1.msra.mxu0 0.0
    %3296 = vmatprep.subr.mxu0 0.0
    %3297 = vmatpush1.msra.mxu0 0.0
    %3298 = vmatprep.subr.mxu0 0.0
    %3299 = vmatpush1.msra.mxu0 0.0
    %3300 = vmatprep.subr.mxu0 0.0
    %3301 = vmatpush1.msra.mxu0 0.0
    %3302 = vmatprep.subr.mxu0 0.0
    %3303 = vmatpush1.msra.mxu0 0.0
    %3304 = vmatprep.subr.mxu0 0.0
    %3305 = vmatpush1.msra.mxu0 0.0
    %3306 = vmatprep.subr.mxu0 0.0
    %3307 = vmatpush1.msra.mxu0 0.0
    %3308 = vmatprep.mubr.f32.mxu0 0.0
    %3309 = vmatmul.mubr.f32.gmra.mrb[0].mxu0 %v2860
    %v3310 = vpop.f32.mrb[0].mxu0
    %v3311 = vadd.f32 0.0, %v3310
    %v3312 = vpop.f32.mrb[0].mxu0
    %v3313 = vadd.f32 0.0, %v3312
    %3314 = vdwg.mxu0
    %v3315 = vadd.f32 %v470, %v3240
    %v3316 = vadd.f32 %v472, %v3242
    %v3317 = vadd.f32 %v583, %v3311
    %v3318 = vadd.f32 %v585, %v3313
    %v3319 = vxor.u32 %v3315, 2147483648
    %v3320 = vxor.u32 %v3316, 2147483648
    %v3321 = vxor.u32 %v3318, 2147483648
    %v3322 = vmul.f32 %v3319, 1.442695
    %v3323 = vpow.pop %v3322
    %v3324 = vmul.f32 %v3320, 1.442695
    %v3325 = vpow.pop %v3324
    %v3326 = vmul.f32 %v3321, 1.442695
    %v3327 = vpow.pop %v3326
    %v3328 = vadd.f32 %v3323, 1.0
    %v3329 = vadd.f32 %v3325, 1.0
    %v3330 = vadd.f32 %v3327, 1.0
    %v3331 = vrcp.pop %v3328
    %v3332 = vmul.f32 1.0, %v3331
    %v3333 = vrcp.pop %v3329
    %v3334 = vmul.f32 1.0, %v3333
    %v3335 = vrcp.pop %v3330
    %v3336 = vmul.f32 1.0, %v3335
    %v3337 = vtanh.pop %v3317
    %v3338 = vmul.f32 %v3334, %v2858
    %v3339 = vmul.f32 %v3332, %v3337
    %v3340 = vadd.f32 %v3338, %v3339
    %v3341 = vtanh.pop %v3340
    %v3342 = vmul.f32 %v3336, %v3341
    %3343 = vmatprep.subr.mxu0 %v183
    %3344 = vmatpush1.msra.mxu0 %v182
    %3345 = vmatprep.subr.mxu0 %v187
    %3346 = vmatpush1.msra.mxu0 %v186
    %3347 = vmatprep.subr.mxu0 %v191
    %3348 = vmatpush1.msra.mxu0 %v190
    %3349 = vmatprep.subr.mxu0 %v195
    %3350 = vmatpush1.msra.mxu0 %v194
    %3351 = vmatprep.subr.mxu0 %v199
    %3352 = vmatpush1.msra.mxu0 %v198
    %3353 = vmatprep.subr.mxu0 %v203
    %3354 = vmatpush1.msra.mxu0 %v202
    %3355 = vmatprep.subr.mxu0 %v207
    %3356 = vmatpush1.msra.mxu0 %v206
    %3357 = vmatprep.subr.mxu0 %v211
    %3358 = vmatpush1.msra.mxu0 %v210
    %3359 = vmatprep.subr.mxu0 %v215
    %3360 = vmatpush1.msra.mxu0 %v214
    %3361 = vmatprep.subr.mxu0 %v219
    %3362 = vmatpush1.msra.mxu0 %v218
    %3363 = vmatprep.subr.mxu0 %v223
    %3364 = vmatpush1.msra.mxu0 %v222
    %3365 = vmatprep.subr.mxu0 %v227
    %3366 = vmatpush1.msra.mxu0 %v226
    %3367 = vmatprep.subr.mxu0 %v231
    %3368 = vmatpush1.msra.mxu0 %v230
    %3369 = vmatprep.subr.mxu0 %v235
    %3370 = vmatpush1.msra.mxu0 %v234
    %3371 = vmatprep.subr.mxu0 %v239
    %3372 = vmatpush1.msra.mxu0 %v238
    %3373 = vmatprep.subr.mxu0 %v243
    %3374 = vmatpush1.msra.mxu0 %v242
    %3375 = vmatprep.subr.mxu0 0.0
    %3376 = vmatpush1.msra.mxu0 0.0
    %3377 = vmatprep.subr.mxu0 0.0
    %3378 = vmatpush1.msra.mxu0 0.0
    %3379 = vmatprep.subr.mxu0 0.0
    %3380 = vmatpush1.msra.mxu0 0.0
    %3381 = vmatprep.subr.mxu0 0.0
    %3382 = vmatpush1.msra.mxu0 0.0
    %3383 = vmatprep.subr.mxu0 0.0
    %3384 = vmatpush1.msra.mxu0 0.0
    %3385 = vmatprep.subr.mxu0 0.0
    %3386 = vmatpush1.msra.mxu0 0.0
    %3387 = vmatprep.subr.mxu0 0.0
    %3388 = vmatpush1.msra.mxu0 0.0
    %3389 = vmatprep.subr.mxu0 0.0
    %3390 = vmatpush1.msra.mxu0 0.0
    %3391 = vmatprep.subr.mxu0 0.0
    %3392 = vmatpush1.msra.mxu0 0.0
    %3393 = vmatprep.subr.mxu0 0.0
    %3394 = vmatpush1.msra.mxu0 0.0
    %3395 = vmatprep.subr.mxu0 0.0
    %3396 = vmatpush1.msra.mxu0 0.0
    %3397 = vmatprep.subr.mxu0 0.0
    %3398 = vmatpush1.msra.mxu0 0.0
    %3399 = vmatprep.subr.mxu0 0.0
    %3400 = vmatpush1.msra.mxu0 0.0
    %3401 = vmatprep.subr.mxu0 0.0
    %3402 = vmatpush1.msra.mxu0 0.0
    %3403 = vmatprep.subr.mxu0 0.0
    %3404 = vmatpush1.msra.mxu0 0.0
    %3405 = vmatprep.subr.mxu0 0.0
    %3406 = vmatpush1.msra.mxu0 0.0
    %3407 = vmatprep.mubr.f32.mxu0 0.0
    %3408 = vmatmul.mubr.f32.gmra.mrb[0].mxu0 %v3342
    %v3409 = vpop.f32.mrb[0].mxu0
    %v3410 = vadd.f32 0.0, %v3409
    %v3411 = vpop.f32.mrb[0].mxu0
    %v3412 = vadd.f32 0.0, %v3411
    %3413 = vdwg.mxu0
    %3414 = vmatprep.subr.mxu0 %v185
    %3415 = vmatpush1.msra.mxu0 %v184
    %3416 = vmatprep.subr.mxu0 %v189
    %3417 = vmatpush1.msra.mxu0 %v188
    %3418 = vmatprep.subr.mxu0 %v193
    %3419 = vmatpush1.msra.mxu0 %v192
    %3420 = vmatprep.subr.mxu0 %v197
    %3421 = vmatpush1.msra.mxu0 %v196
    %3422 = vmatprep.subr.mxu0 %v201
    %3423 = vmatpush1.msra.mxu0 %v200
    %3424 = vmatprep.subr.mxu0 %v205
    %3425 = vmatpush1.msra.mxu0 %v204
    %3426 = vmatprep.subr.mxu0 %v209
    %3427 = vmatpush1.msra.mxu0 %v208
    %3428 = vmatprep.subr.mxu0 %v213
    %3429 = vmatpush1.msra.mxu0 %v212
    %3430 = vmatprep.subr.mxu0 %v217
    %3431 = vmatpush1.msra.mxu0 %v216
    %3432 = vmatprep.subr.mxu0 %v221
    %3433 = vmatpush1.msra.mxu0 %v220
    %3434 = vmatprep.subr.mxu0 %v225
    %3435 = vmatpush1.msra.mxu0 %v224
    %3436 = vmatprep.subr.mxu0 %v229
    %3437 = vmatpush1.msra.mxu0 %v228
    %3438 = vmatprep.subr.mxu0 %v233
    %3439 = vmatpush1.msra.mxu0 %v232
    %3440 = vmatprep.subr.mxu0 %v237
    %3441 = vmatpush1.msra.mxu0 %v236
    %3442 = vmatprep.subr.mxu0 %v241
    %3443 = vmatpush1.msra.mxu0 %v240
    %3444 = vmatprep.subr.mxu0 %v245
    %3445 = vmatpush1.msra.mxu0 %v244
    %3446 = vmatprep.subr.mxu0 0.0
    %3447 = vmatpush1.msra.mxu0 0.0
    %3448 = vmatprep.subr.mxu0 0.0
    %3449 = vmatpush1.msra.mxu0 0.0
    %3450 = vmatprep.subr.mxu0 0.0
    %3451 = vmatpush1.msra.mxu0 0.0
    %3452 = vmatprep.subr.mxu0 0.0
    %3453 = vmatpush1.msra.mxu0 0.0
    %3454 = vmatprep.subr.mxu0 0.0
    %3455 = vmatpush1.msra.mxu0 0.0
    %3456 = vmatprep.subr.mxu0 0.0
    %3457 = vmatpush1.msra.mxu0 0.0
    %3458 = vmatprep.subr.mxu0 0.0
    %3459 = vmatpush1.msra.mxu0 0.0
    %3460 = vmatprep.subr.mxu0 0.0
    %3461 = vmatpush1.msra.mxu0 0.0
    %3462 = vmatprep.subr.mxu0 0.0
    %3463 = vmatpush1.msra.mxu0 0.0
    %3464 = vmatprep.subr.mxu0 0.0
    %3465 = vmatpush1.msra.mxu0 0.0
    %3466 = vmatprep.subr.mxu0 0.0
    %3467 = vmatpush1.msra.mxu0 0.0
    %3468 = vmatprep.subr.mxu0 0.0
    %3469 = vmatpush1.msra.mxu0 0.0
    %3470 = vmatprep.subr.mxu0 0.0
    %3471 = vmatpush1.msra.mxu0 0.0
    %3472 = vmatprep.subr.mxu0 0.0
    %3473 = vmatpush1.msra.mxu0 0.0
    %3474 = vmatprep.subr.mxu0 0.0
    %3475 = vmatpush1.msra.mxu0 0.0
    %3476 = vmatprep.subr.mxu0 0.0
    %3477 = vmatpush1.msra.mxu0 0.0
    %3478 = vmatprep.mubr.f32.mxu0 0.0
    %3479 = vmatmul.mubr.f32.gmra.mrb[0].mxu0 %v3342
    %v3480 = vpop.f32.mrb[0].mxu0
    %v3481 = vadd.f32 0.0, %v3480
    %v3482 = vpop.f32.mrb[0].mxu0
    %v3483 = vadd.f32 0.0, %v3482
    %3484 = vdwg.mxu0
    %v3485 = vadd.f32 %v3098, %v3410
    %v3486 = vadd.f32 %v3100, %v3412
    %v3487 = vadd.f32 %v3169, %v3481
    %v3488 = vadd.f32 %v3171, %v3483
    %v3489 = vxor.u32 %v3485, 2147483648
    %v3490 = vxor.u32 %v3486, 2147483648
    %v3491 = vxor.u32 %v3488, 2147483648
    %v3492 = vmul.f32 %v3489, 1.442695
    %v3493 = vpow.pop %v3492
    %v3494 = vmul.f32 %v3490, 1.442695
    %v3495 = vpow.pop %v3494
    %v3496 = vmul.f32 %v3491, 1.442695
    %v3497 = vpow.pop %v3496
    %v3498 = vadd.f32 %v3493, 1.0
    %v3499 = vadd.f32 %v3495, 1.0
    %v3500 = vadd.f32 %v3497, 1.0
    %v3501 = vrcp.pop %v3498
    %v3502 = vmul.f32 1.0, %v3501
    %v3503 = vrcp.pop %v3499
    %v3504 = vmul.f32 1.0, %v3503
    %v3505 = vrcp.pop %v3500
    %v3506 = vmul.f32 1.0, %v3505
    %v3507 = vtanh.pop %v3487
    %v3508 = vmul.f32 %v3504, %v3028
    %v3509 = vmul.f32 %v3502, %v3507
    %v3510 = vadd.f32 %v3508, %v3509
    %v3511 = vtanh.pop %v3510
    %v3512 = vmul.f32 %v3506, %v3511
    %3513 = vmatprep.subr.mxu0 %v247
    %3514 = vmatpush1.msra.mxu0 %v246
    %3515 = vmatprep.subr.mxu0 %v251
    %3516 = vmatpush1.msra.mxu0 %v250
    %3517 = vmatprep.subr.mxu0 %v255
    %3518 = vmatpush1.msra.mxu0 %v254
    %3519 = vmatprep.subr.mxu0 %v259
    %3520 = vmatpush1.msra.mxu0 %v258
    %3521 = vmatprep.subr.mxu0 %v263
    %3522 = vmatpush1.msra.mxu0 %v262
    %3523 = vmatprep.subr.mxu0 %v267
    %3524 = vmatpush1.msra.mxu0 %v266
    %3525 = vmatprep.subr.mxu0 %v271
    %3526 = vmatpush1.msra.mxu0 %v270
    %3527 = vmatprep.subr.mxu0 %v275
    %3528 = vmatpush1.msra.mxu0 %v274
    %3529 = vmatprep.subr.mxu0 %v279
    %3530 = vmatpush1.msra.mxu0 %v278
    %3531 = vmatprep.subr.mxu0 %v283
    %3532 = vmatpush1.msra.mxu0 %v282
    %3533 = vmatprep.subr.mxu0 %v287
    %3534 = vmatpush1.msra.mxu0 %v286
    %3535 = vmatprep.subr.mxu0 %v291
    %3536 = vmatpush1.msra.mxu0 %v290
    %3537 = vmatprep.subr.mxu0 %v295
    %3538 = vmatpush1.msra.mxu0 %v294
    %3539 = vmatprep.subr.mxu0 %v299
    %3540 = vmatpush1.msra.mxu0 %v298
    %3541 = vmatprep.subr.mxu0 %v303
    %3542 = vmatpush1.msra.mxu0 %v302
    %3543 = vmatprep.subr.mxu0 %v307
    %3544 = vmatpush1.msra.mxu0 %v306
    %3545 = vmatprep.subr.mxu0 0.0
    %3546 = vmatpush1.msra.mxu0 0.0
    %3547 = vmatprep.subr.mxu0 0.0
    %3548 = vmatpush1.msra.mxu0 0.0
    %3549 = vmatprep.subr.mxu0 0.0
    %3550 = vmatpush1.msra.mxu0 0.0
    %3551 = vmatprep.subr.mxu0 0.0
    %3552 = vmatpush1.msra.mxu0 0.0
    %3553 = vmatprep.subr.mxu0 0.0
    %3554 = vmatpush1.msra.mxu0 0.0
    %3555 = vmatprep.subr.mxu0 0.0
    %3556 = vmatpush1.msra.mxu0 0.0
    %3557 = vmatprep.subr.mxu0 0.0
    %3558 = vmatpush1.msra.mxu0 0.0
    %3559 = vmatprep.subr.mxu0 0.0
    %3560 = vmatpush1.msra.mxu0 0.0
    %3561 = vmatprep.subr.mxu0 0.0
    %3562 = vmatpush1.msra.mxu0 0.0
    %3563 = vmatprep.subr.mxu0 0.0
    %3564 = vmatpush1.msra.mxu0 0.0
    %3565 = vmatprep.subr.mxu0 0.0
    %3566 = vmatpush1.msra.mxu0 0.0
    %3567 = vmatprep.subr.mxu0 0.0
    %3568 = vmatpush1.msra.mxu0 0.0
    %3569 = vmatprep.subr.mxu0 0.0
    %3570 = vmatpush1.msra.mxu0 0.0
    %3571 = vmatprep.subr.mxu0 0.0
    %3572 = vmatpush1.msra.mxu0 0.0
    %3573 = vmatprep.subr.mxu0 0.0
    %3574 = vmatpush1.msra.mxu0 0.0
    %3575 = vmatprep.subr.mxu0 0.0
    %3576 = vmatpush1.msra.mxu0 0.0
    %3577 = vmatprep.mubr.f32.mxu0 0.0
    %3578 = vmatmul.mubr.f32.gmra.mrb[0].mxu0 %v3512
    %v3579 = vpop.f32.mrb[0].mxu0
    %v3580 = vadd.f32 %v604, %v3579
    %v3581 = vpop.f32.mrb[0].mxu0
    %v3582 = vadd.f32 %v608, %v3581
    %3583 = vdwg.mxu0
    %3584 = vmatprep.subr.mxu0 %v249
    %3585 = vmatpush1.msra.mxu0 %v248
    %3586 = vmatprep.subr.mxu0 %v253
    %3587 = vmatpush1.msra.mxu0 %v252
    %3588 = vmatprep.subr.mxu0 %v257
    %3589 = vmatpush1.msra.mxu0 %v256
    %3590 = vmatprep.subr.mxu0 %v261
    %3591 = vmatpush1.msra.mxu0 %v260
    %3592 = vmatprep.subr.mxu0 %v265
    %3593 = vmatpush1.msra.mxu0 %v264
    %3594 = vmatprep.subr.mxu0 %v269
    %3595 = vmatpush1.msra.mxu0 %v268
    %3596 = vmatprep.subr.mxu0 %v273
    %3597 = vmatpush1.msra.mxu0 %v272
    %3598 = vmatprep.subr.mxu0 %v277
    %3599 = vmatpush1.msra.mxu0 %v276
    %3600 = vmatprep.subr.mxu0 %v281
    %3601 = vmatpush1.msra.mxu0 %v280
    %3602 = vmatprep.subr.mxu0 %v285
    %3603 = vmatpush1.msra.mxu0 %v284
    %3604 = vmatprep.subr.mxu0 %v289
    %3605 = vmatpush1.msra.mxu0 %v288
    %3606 = vmatprep.subr.mxu0 %v293
    %3607 = vmatpush1.msra.mxu0 %v292
    %3608 = vmatprep.subr.mxu0 %v297
    %3609 = vmatpush1.msra.mxu0 %v296
    %3610 = vmatprep.subr.mxu0 %v301
    %3611 = vmatpush1.msra.mxu0 %v300
    %3612 = vmatprep.subr.mxu0 %v305
    %3613 = vmatpush1.msra.mxu0 %v304
    %3614 = vmatprep.subr.mxu0 %v309
    %3615 = vmatpush1.msra.mxu0 %v308
    %3616 = vmatprep.subr.mxu0 0.0
    %3617 = vmatpush1.msra.mxu0 0.0
    %3618 = vmatprep.subr.mxu0 0.0
    %3619 = vmatpush1.msra.mxu0 0.0
    %3620 = vmatprep.subr.mxu0 0.0
    %3621 = vmatpush1.msra.mxu0 0.0
    %3622 = vmatprep.subr.mxu0 0.0
    %3623 = vmatpush1.msra.mxu0 0.0
    %3624 = vmatprep.subr.mxu0 0.0
    %3625 = vmatpush1.msra.mxu0 0.0
    %3626 = vmatprep.subr.mxu0 0.0
    %3627 = vmatpush1.msra.mxu0 0.0
    %3628 = vmatprep.subr.mxu0 0.0
    %3629 = vmatpush1.msra.mxu0 0.0
    %3630 = vmatprep.subr.mxu0 0.0
    %3631 = vmatpush1.msra.mxu0 0.0
    %3632 = vmatprep.subr.mxu0 0.0
    %3633 = vmatpush1.msra.mxu0 0.0
    %3634 = vmatprep.subr.mxu0 0.0
    %3635 = vmatpush1.msra.mxu0 0.0
    %3636 = vmatprep.subr.mxu0 0.0
    %3637 = vmatpush1.msra.mxu0 0.0
    %3638 = vmatprep.subr.mxu0 0.0
    %3639 = vmatpush1.msra.mxu0 0.0
    %3640 = vmatprep.subr.mxu0 0.0
    %3641 = vmatpush1.msra.mxu0 0.0
    %3642 = vmatprep.subr.mxu0 0.0
    %3643 = vmatpush1.msra.mxu0 0.0
    %3644 = vmatprep.subr.mxu0 0.0
    %3645 = vmatpush1.msra.mxu0 0.0
    %3646 = vmatprep.subr.mxu0 0.0
    %3647 = vmatpush1.msra.mxu0 0.0
    %3648 = vmatprep.mubr.f32.mxu0 0.0
    %3649 = vmatmul.mubr.f32.gmra.mrb[0].mxu0 %v3512
    %v3650 = vpop.f32.mrb[0].mxu0
    %v3651 = vadd.f32 %v612, %v3650
    %v3652 = vpop.f32.mrb[0].mxu0
    %v3653 = vadd.f32 %v616, %v3652
    %3654 = vdwg.mxu0
    %3655 = vmatprep.subr.mxu0 %v119
    %3656 = vmatpush1.msra.mxu0 %v118
    %3657 = vmatprep.subr.mxu0 %v123
    %3658 = vmatpush1.msra.mxu0 %v122
    %3659 = vmatprep.subr.mxu0 %v127
    %3660 = vmatpush1.msra.mxu0 %v126
    %3661 = vmatprep.subr.mxu0 %v131
    %3662 = vmatpush1.msra.mxu0 %v130
    %3663 = vmatprep.subr.mxu0 %v135
    %3664 = vmatpush1.msra.mxu0 %v134
    %3665 = vmatprep.subr.mxu0 %v139
    %3666 = vmatpush1.msra.mxu0 %v138
    %3667 = vmatprep.subr.mxu0 %v143
    %3668 = vmatpush1.msra.mxu0 %v142
    %3669 = vmatprep.subr.mxu0 %v147
    %3670 = vmatpush1.msra.mxu0 %v146
    %3671 = vmatprep.subr.mxu0 %v151
    %3672 = vmatpush1.msra.mxu0 %v150
    %3673 = vmatprep.subr.mxu0 %v155
    %3674 = vmatpush1.msra.mxu0 %v154
    %3675 = vmatprep.subr.mxu0 %v159
    %3676 = vmatpush1.msra.mxu0 %v158
    %3677 = vmatprep.subr.mxu0 %v163
    %3678 = vmatpush1.msra.mxu0 %v162
    %3679 = vmatprep.subr.mxu0 %v167
    %3680 = vmatpush1.msra.mxu0 %v166
    %3681 = vmatprep.subr.mxu0 %v171
    %3682 = vmatpush1.msra.mxu0 %v170
    %3683 = vmatprep.subr.mxu0 %v175
    %3684 = vmatpush1.msra.mxu0 %v174
    %3685 = vmatprep.subr.mxu0 %v179
    %3686 = vmatpush1.msra.mxu0 %v178
    %3687 = vmatprep.subr.mxu0 0.0
    %3688 = vmatpush1.msra.mxu0 0.0
    %3689 = vmatprep.subr.mxu0 0.0
    %3690 = vmatpush1.msra.mxu0 0.0
    %3691 = vmatprep.subr.mxu0 0.0
    %3692 = vmatpush1.msra.mxu0 0.0
    %3693 = vmatprep.subr.mxu0 0.0
    %3694 = vmatpush1.msra.mxu0 0.0
    %3695 = vmatprep.subr.mxu0 0.0
    %3696 = vmatpush1.msra.mxu0 0.0
    %3697 = vmatprep.subr.mxu0 0.0
    %3698 = vmatpush1.msra.mxu0 0.0
    %3699 = vmatprep.subr.mxu0 0.0
    %3700 = vmatpush1.msra.mxu0 0.0
    %3701 = vmatprep.subr.mxu0 0.0
    %3702 = vmatpush1.msra.mxu0 0.0
    %3703 = vmatprep.subr.mxu0 0.0
    %3704 = vmatpush1.msra.mxu0 0.0
    %3705 = vmatprep.subr.mxu0 0.0
    %3706 = vmatpush1.msra.mxu0 0.0
    %3707 = vmatprep.subr.mxu0 0.0
    %3708 = vmatpush1.msra.mxu0 0.0
    %3709 = vmatprep.subr.mxu0 0.0
    %3710 = vmatpush1.msra.mxu0 0.0
    %3711 = vmatprep.subr.mxu0 0.0
    %3712 = vmatpush1.msra.mxu0 0.0
    %3713 = vmatprep.subr.mxu0 0.0
    %3714 = vmatpush1.msra.mxu0 0.0
    %3715 = vmatprep.subr.mxu0 0.0
    %3716 = vmatpush1.msra.mxu0 0.0
    %3717 = vmatprep.subr.mxu0 0.0
    %3718 = vmatpush1.msra.mxu0 0.0
    %3719 = vmatprep.mubr.f32.mxu0 0.0
    %3720 = vmatmul.mubr.f32.gmra.mrb[0].mxu0 %v3342
    %v3721 = vpop.f32.mrb[0].mxu0
    %v3722 = vadd.f32 0.0, %v3721
    %v3723 = vpop.f32.mrb[0].mxu0
    %v3724 = vadd.f32 0.0, %v3723
    %3725 = vdwg.mxu0
    %3726 = vmatprep.subr.mxu0 %v121
    %3727 = vmatpush1.msra.mxu0 %v120
    %3728 = vmatprep.subr.mxu0 %v125
    %3729 = vmatpush1.msra.mxu0 %v124
    %3730 = vmatprep.subr.mxu0 %v129
    %3731 = vmatpush1.msra.mxu0 %v128
    %3732 = vmatprep.subr.mxu0 %v133
    %3733 = vmatpush1.msra.mxu0 %v132
    %3734 = vmatprep.subr.mxu0 %v137
    %3735 = vmatpush1.msra.mxu0 %v136
    %3736 = vmatprep.subr.mxu0 %v141
    %3737 = vmatpush1.msra.mxu0 %v140
    %3738 = vmatprep.subr.mxu0 %v145
    %3739 = vmatpush1.msra.mxu0 %v144
    %3740 = vmatprep.subr.mxu0 %v149
    %3741 = vmatpush1.msra.mxu0 %v148
    %3742 = vmatprep.subr.mxu0 %v153
    %3743 = vmatpush1.msra.mxu0 %v152
    %3744 = vmatprep.subr.mxu0 %v157
    %3745 = vmatpush1.msra.mxu0 %v156
    %3746 = vmatprep.subr.mxu0 %v161
    %3747 = vmatpush1.msra.mxu0 %v160
    %3748 = vmatprep.subr.mxu0 %v165
    %3749 = vmatpush1.msra.mxu0 %v164
    %3750 = vmatprep.subr.mxu0 %v169
    %3751 = vmatpush1.msra.mxu0 %v168
    %3752 = vmatprep.subr.mxu0 %v173
    %3753 = vmatpush1.msra.mxu0 %v172
    %3754 = vmatprep.subr.mxu0 %v177
    %3755 = vmatpush1.msra.mxu0 %v176
    %3756 = vmatprep.subr.mxu0 %v181
    %3757 = vmatpush1.msra.mxu0 %v180
    %3758 = vmatprep.subr.mxu0 0.0
    %3759 = vmatpush1.msra.mxu0 0.0
    %3760 = vmatprep.subr.mxu0 0.0
    %3761 = vmatpush1.msra.mxu0 0.0
    %3762 = vmatprep.subr.mxu0 0.0
    %3763 = vmatpush1.msra.mxu0 0.0
    %3764 = vmatprep.subr.mxu0 0.0
    %3765 = vmatpush1.msra.mxu0 0.0
    %3766 = vmatprep.subr.mxu0 0.0
    %3767 = vmatpush1.msra.mxu0 0.0
    %3768 = vmatprep.subr.mxu0 0.0
    %3769 = vmatpush1.msra.mxu0 0.0
    %3770 = vmatprep.subr.mxu0 0.0
    %3771 = vmatpush1.msra.mxu0 0.0
    %3772 = vmatprep.subr.mxu0 0.0
    %3773 = vmatpush1.msra.mxu0 0.0
    %3774 = vmatprep.subr.mxu0 0.0
    %3775 = vmatpush1.msra.mxu0 0.0
    %3776 = vmatprep.subr.mxu0 0.0
    %3777 = vmatpush1.msra.mxu0 0.0
    %3778 = vmatprep.subr.mxu0 0.0
    %3779 = vmatpush1.msra.mxu0 0.0
    %3780 = vmatprep.subr.mxu0 0.0
    %3781 = vmatpush1.msra.mxu0 0.0
    %3782 = vmatprep.subr.mxu0 0.0
    %3783 = vmatpush1.msra.mxu0 0.0
    %3784 = vmatprep.subr.mxu0 0.0
    %3785 = vmatpush1.msra.mxu0 0.0
    %3786 = vmatprep.subr.mxu0 0.0
    %3787 = vmatpush1.msra.mxu0 0.0
    %3788 = vmatprep.subr.mxu0 0.0
    %3789 = vmatpush1.msra.mxu0 0.0
    %3790 = vmatprep.mubr.f32.mxu0 0.0
    %3791 = vmatmul.mubr.f32.gmra.mrb[0].mxu0 %v3342
    %v3792 = vpop.f32.mrb[0].mxu0
    %v3793 = vadd.f32 0.0, %v3792
    %v3794 = vpop.f32.mrb[0].mxu0
    %v3795 = vadd.f32 0.0, %v3794
    %3796 = vdwg.mxu0
    %v3797 = vadd.f32 %v476, %v3722
    %v3798 = vadd.f32 %v478, %v3724
    %v3799 = vadd.f32 %v589, %v3793
    %v3800 = vadd.f32 %v591, %v3795
    %v3801 = vxor.u32 %v3797, 2147483648
    %v3802 = vxor.u32 %v3798, 2147483648
    %v3803 = vxor.u32 %v3800, 2147483648
    %v3804 = vmul.f32 %v3801, 1.442695
    %v3805 = vpow.pop %v3804
    %v3806 = vmul.f32 %v3802, 1.442695
    %v3807 = vpow.pop %v3806
    %v3808 = vmul.f32 %v3803, 1.442695
    %v3809 = vpow.pop %v3808
    %v3810 = vadd.f32 %v3805, 1.0
    %v3811 = vadd.f32 %v3807, 1.0
    %v3812 = vadd.f32 %v3809, 1.0
    %v3813 = vrcp.pop %v3810
    %v3814 = vmul.f32 1.0, %v3813
    %v3815 = vrcp.pop %v3811
    %v3816 = vmul.f32 1.0, %v3815
    %v3817 = vrcp.pop %v3812
    %v3818 = vmul.f32 1.0, %v3817
    %v3819 = vtanh.pop %v3799
    %v3820 = vmul.f32 %v3816, %v3340
    %v3821 = vmul.f32 %v3814, %v3819
    %v3822 = vadd.f32 %v3820, %v3821
    %v3823 = vtanh.pop %v3822
    %v3824 = vmul.f32 %v3818, %v3823
    %3825 = vmatprep.subr.mxu0 %v183
    %3826 = vmatpush1.msra.mxu0 %v182
    %3827 = vmatprep.subr.mxu0 %v187
    %3828 = vmatpush1.msra.mxu0 %v186
    %3829 = vmatprep.subr.mxu0 %v191
    %3830 = vmatpush1.msra.mxu0 %v190
    %3831 = vmatprep.subr.mxu0 %v195
    %3832 = vmatpush1.msra.mxu0 %v194
    %3833 = vmatprep.subr.mxu0 %v199
    %3834 = vmatpush1.msra.mxu0 %v198
    %3835 = vmatprep.subr.mxu0 %v203
    %3836 = vmatpush1.msra.mxu0 %v202
    %3837 = vmatprep.subr.mxu0 %v207
    %3838 = vmatpush1.msra.mxu0 %v206
    %3839 = vmatprep.subr.mxu0 %v211
    %3840 = vmatpush1.msra.mxu0 %v210
    %3841 = vmatprep.subr.mxu0 %v215
    %3842 = vmatpush1.msra.mxu0 %v214
    %3843 = vmatprep.subr.mxu0 %v219
    %3844 = vmatpush1.msra.mxu0 %v218
    %3845 = vmatprep.subr.mxu0 %v223
    %3846 = vmatpush1.msra.mxu0 %v222
    %3847 = vmatprep.subr.mxu0 %v227
    %3848 = vmatpush1.msra.mxu0 %v226
    %3849 = vmatprep.subr.mxu0 %v231
    %3850 = vmatpush1.msra.mxu0 %v230
    %3851 = vmatprep.subr.mxu0 %v235
    %3852 = vmatpush1.msra.mxu0 %v234
    %3853 = vmatprep.subr.mxu0 %v239
    %3854 = vmatpush1.msra.mxu0 %v238
    %3855 = vmatprep.subr.mxu0 %v243
    %3856 = vmatpush1.msra.mxu0 %v242
    %3857 = vmatprep.subr.mxu0 0.0
    %3858 = vmatpush1.msra.mxu0 0.0
    %3859 = vmatprep.subr.mxu0 0.0
    %3860 = vmatpush1.msra.mxu0 0.0
    %3861 = vmatprep.subr.mxu0 0.0
    %3862 = vmatpush1.msra.mxu0 0.0
    %3863 = vmatprep.subr.mxu0 0.0
    %3864 = vmatpush1.msra.mxu0 0.0
    %3865 = vmatprep.subr.mxu0 0.0
    %3866 = vmatpush1.msra.mxu0 0.0
    %3867 = vmatprep.subr.mxu0 0.0
    %3868 = vmatpush1.msra.mxu0 0.0
    %3869 = vmatprep.subr.mxu0 0.0
    %3870 = vmatpush1.msra.mxu0 0.0
    %3871 = vmatprep.subr.mxu0 0.0
    %3872 = vmatpush1.msra.mxu0 0.0
    %3873 = vmatprep.subr.mxu0 0.0
    %3874 = vmatpush1.msra.mxu0 0.0
    %3875 = vmatprep.subr.mxu0 0.0
    %3876 = vmatpush1.msra.mxu0 0.0
    %3877 = vmatprep.subr.mxu0 0.0
    %3878 = vmatpush1.msra.mxu0 0.0
    %3879 = vmatprep.subr.mxu0 0.0
    %3880 = vmatpush1.msra.mxu0 0.0
    %3881 = vmatprep.subr.mxu0 0.0
    %3882 = vmatpush1.msra.mxu0 0.0
    %3883 = vmatprep.subr.mxu0 0.0
    %3884 = vmatpush1.msra.mxu0 0.0
    %3885 = vmatprep.subr.mxu0 0.0
    %3886 = vmatpush1.msra.mxu0 0.0
    %3887 = vmatprep.subr.mxu0 0.0
    %3888 = vmatpush1.msra.mxu0 0.0
    %3889 = vmatprep.mubr.f32.mxu0 0.0
    %3890 = vmatmul.mubr.f32.gmra.mrb[0].mxu0 %v3824
    %v3891 = vpop.f32.mrb[0].mxu0
    %v3892 = vadd.f32 0.0, %v3891
    %v3893 = vpop.f32.mrb[0].mxu0
    %v3894 = vadd.f32 0.0, %v3893
    %3895 = vdwg.mxu0
    %3896 = vmatprep.subr.mxu0 %v185
    %3897 = vmatpush1.msra.mxu0 %v184
    %3898 = vmatprep.subr.mxu0 %v189
    %3899 = vmatpush1.msra.mxu0 %v188
    %3900 = vmatprep.subr.mxu0 %v193
    %3901 = vmatpush1.msra.mxu0 %v192
    %3902 = vmatprep.subr.mxu0 %v197
    %3903 = vmatpush1.msra.mxu0 %v196
    %3904 = vmatprep.subr.mxu0 %v201
    %3905 = vmatpush1.msra.mxu0 %v200
    %3906 = vmatprep.subr.mxu0 %v205
    %3907 = vmatpush1.msra.mxu0 %v204
    %3908 = vmatprep.subr.mxu0 %v209
    %3909 = vmatpush1.msra.mxu0 %v208
    %3910 = vmatprep.subr.mxu0 %v213
    %3911 = vmatpush1.msra.mxu0 %v212
    %3912 = vmatprep.subr.mxu0 %v217
    %3913 = vmatpush1.msra.mxu0 %v216
    %3914 = vmatprep.subr.mxu0 %v221
    %3915 = vmatpush1.msra.mxu0 %v220
    %3916 = vmatprep.subr.mxu0 %v225
    %3917 = vmatpush1.msra.mxu0 %v224
    %3918 = vmatprep.subr.mxu0 %v229
    %3919 = vmatpush1.msra.mxu0 %v228
    %3920 = vmatprep.subr.mxu0 %v233
    %3921 = vmatpush1.msra.mxu0 %v232
    %3922 = vmatprep.subr.mxu0 %v237
    %3923 = vmatpush1.msra.mxu0 %v236
    %3924 = vmatprep.subr.mxu0 %v241
    %3925 = vmatpush1.msra.mxu0 %v240
    %3926 = vmatprep.subr.mxu0 %v245
    %3927 = vmatpush1.msra.mxu0 %v244
    %3928 = vmatprep.subr.mxu0 0.0
    %3929 = vmatpush1.msra.mxu0 0.0
    %3930 = vmatprep.subr.mxu0 0.0
    %3931 = vmatpush1.msra.mxu0 0.0
    %3932 = vmatprep.subr.mxu0 0.0
    %3933 = vmatpush1.msra.mxu0 0.0
    %3934 = vmatprep.subr.mxu0 0.0
    %3935 = vmatpush1.msra.mxu0 0.0
    %3936 = vmatprep.subr.mxu0 0.0
    %3937 = vmatpush1.msra.mxu0 0.0
    %3938 = vmatprep.subr.mxu0 0.0
    %3939 = vmatpush1.msra.mxu0 0.0
    %3940 = vmatprep.subr.mxu0 0.0
    %3941 = vmatpush1.msra.mxu0 0.0
    %3942 = vmatprep.subr.mxu0 0.0
    %3943 = vmatpush1.msra.mxu0 0.0
    %3944 = vmatprep.subr.mxu0 0.0
    %3945 = vmatpush1.msra.mxu0 0.0
    %3946 = vmatprep.subr.mxu0 0.0
    %3947 = vmatpush1.msra.mxu0 0.0
    %3948 = vmatprep.subr.mxu0 0.0
    %3949 = vmatpush1.msra.mxu0 0.0
    %3950 = vmatprep.subr.mxu0 0.0
    %3951 = vmatpush1.msra.mxu0 0.0
    %3952 = vmatprep.subr.mxu0 0.0
    %3953 = vmatpush1.msra.mxu0 0.0
    %3954 = vmatprep.subr.mxu0 0.0
    %3955 = vmatpush1.msra.mxu0 0.0
    %3956 = vmatprep.subr.mxu0 0.0
    %3957 = vmatpush1.msra.mxu0 0.0
    %3958 = vmatprep.subr.mxu0 0.0
    %3959 = vmatpush1.msra.mxu0 0.0
    %3960 = vmatprep.mubr.f32.mxu0 0.0
    %3961 = vmatmul.mubr.f32.gmra.mrb[0].mxu0 %v3824
    %v3962 = vpop.f32.mrb[0].mxu0
    %v3963 = vadd.f32 0.0, %v3962
    %v3964 = vpop.f32.mrb[0].mxu0
    %v3965 = vadd.f32 0.0, %v3964
    %3966 = vdwg.mxu0
    %v3967 = vadd.f32 %v3580, %v3892
    %v3968 = vadd.f32 %v3582, %v3894
    %v3969 = vadd.f32 %v3651, %v3963
    %v3970 = vadd.f32 %v3653, %v3965
    %v3971 = vxor.u32 %v3967, 2147483648
    %v3972 = vxor.u32 %v3968, 2147483648
    %v3973 = vxor.u32 %v3970, 2147483648
    %v3974 = vmul.f32 %v3971, 1.442695
    %v3975 = vpow.pop %v3974
    %v3976 = vmul.f32 %v3972, 1.442695
    %v3977 = vpow.pop %v3976
    %v3978 = vmul.f32 %v3973, 1.442695
    %v3979 = vpow.pop %v3978
    %v3980 = vadd.f32 %v3975, 1.0
    %v3981 = vadd.f32 %v3977, 1.0
    %v3982 = vadd.f32 %v3979, 1.0
    %v3983 = vrcp.pop %v3980
    %v3984 = vmul.f32 1.0, %v3983
    %v3985 = vrcp.pop %v3981
    %v3986 = vmul.f32 1.0, %v3985
    %v3987 = vrcp.pop %v3982
    %v3988 = vmul.f32 1.0, %v3987
    %v3989 = vtanh.pop %v3969
    %v3990 = vmul.f32 %v3986, %v3510
    %v3991 = vmul.f32 %v3984, %v3989
    %v3992 = vadd.f32 %v3990, %v3991
    %v3993 = vtanh.pop %v3992
    %v3994 = vmul.f32 %v3988, %v3993
    %3995 = vmatprep.subr.mxu0 %v247
    %3996 = vmatpush1.msra.mxu0 %v246
    %3997 = vmatprep.subr.mxu0 %v251
    %3998 = vmatpush1.msra.mxu0 %v250
    %3999 = vmatprep.subr.mxu0 %v255
    %4000 = vmatpush1.msra.mxu0 %v254
    %4001 = vmatprep.subr.mxu0 %v259
    %4002 = vmatpush1.msra.mxu0 %v258
    %4003 = vmatprep.subr.mxu0 %v263
    %4004 = vmatpush1.msra.mxu0 %v262
    %4005 = vmatprep.subr.mxu0 %v267
    %4006 = vmatpush1.msra.mxu0 %v266
    %4007 = vmatprep.subr.mxu0 %v271
    %4008 = vmatpush1.msra.mxu0 %v270
    %4009 = vmatprep.subr.mxu0 %v275
    %4010 = vmatpush1.msra.mxu0 %v274
    %4011 = vmatprep.subr.mxu0 %v279
    %4012 = vmatpush1.msra.mxu0 %v278
    %4013 = vmatprep.subr.mxu0 %v283
    %4014 = vmatpush1.msra.mxu0 %v282
    %4015 = vmatprep.subr.mxu0 %v287
    %4016 = vmatpush1.msra.mxu0 %v286
    %4017 = vmatprep.subr.mxu0 %v291
    %4018 = vmatpush1.msra.mxu0 %v290
    %4019 = vmatprep.subr.mxu0 %v295
    %4020 = vmatpush1.msra.mxu0 %v294
    %4021 = vmatprep.subr.mxu0 %v299
    %4022 = vmatpush1.msra.mxu0 %v298
    %4023 = vmatprep.subr.mxu0 %v303
    %4024 = vmatpush1.msra.mxu0 %v302
    %4025 = vmatprep.subr.mxu0 %v307
    %4026 = vmatpush1.msra.mxu0 %v306
    %4027 = vmatprep.subr.mxu0 0.0
    %4028 = vmatpush1.msra.mxu0 0.0
    %4029 = vmatprep.subr.mxu0 0.0
    %4030 = vmatpush1.msra.mxu0 0.0
    %4031 = vmatprep.subr.mxu0 0.0
    %4032 = vmatpush1.msra.mxu0 0.0
    %4033 = vmatprep.subr.mxu0 0.0
    %4034 = vmatpush1.msra.mxu0 0.0
    %4035 = vmatprep.subr.mxu0 0.0
    %4036 = vmatpush1.msra.mxu0 0.0
    %4037 = vmatprep.subr.mxu0 0.0
    %4038 = vmatpush1.msra.mxu0 0.0
    %4039 = vmatprep.subr.mxu0 0.0
    %4040 = vmatpush1.msra.mxu0 0.0
    %4041 = vmatprep.subr.mxu0 0.0
    %4042 = vmatpush1.msra.mxu0 0.0
    %4043 = vmatprep.subr.mxu0 0.0
    %4044 = vmatpush1.msra.mxu0 0.0
    %4045 = vmatprep.subr.mxu0 0.0
    %4046 = vmatpush1.msra.mxu0 0.0
    %4047 = vmatprep.subr.mxu0 0.0
    %4048 = vmatpush1.msra.mxu0 0.0
    %4049 = vmatprep.subr.mxu0 0.0
    %4050 = vmatpush1.msra.mxu0 0.0
    %4051 = vmatprep.subr.mxu0 0.0
    %4052 = vmatpush1.msra.mxu0 0.0
    %4053 = vmatprep.subr.mxu0 0.0
    %4054 = vmatpush1.msra.mxu0 0.0
    %4055 = vmatprep.subr.mxu0 0.0
    %4056 = vmatpush1.msra.mxu0 0.0
    %4057 = vmatprep.subr.mxu0 0.0
    %4058 = vmatpush1.msra.mxu0 0.0
    %4059 = vmatprep.mubr.f32.mxu0 0.0
    %4060 = vmatmul.mubr.f32.gmra.mrb[0].mxu0 %v3994
    %v4061 = vpop.f32.mrb[0].mxu0
    %v4062 = vadd.f32 %v604, %v4061
    %v4063 = vpop.f32.mrb[0].mxu0
    %v4064 = vadd.f32 %v608, %v4063
    %4065 = vdwg.mxu0
    %4066 = vmatprep.subr.mxu0 %v249
    %4067 = vmatpush1.msra.mxu0 %v248
    %4068 = vmatprep.subr.mxu0 %v253
    %4069 = vmatpush1.msra.mxu0 %v252
    %4070 = vmatprep.subr.mxu0 %v257
    %4071 = vmatpush1.msra.mxu0 %v256
    %4072 = vmatprep.subr.mxu0 %v261
    %4073 = vmatpush1.msra.mxu0 %v260
    %4074 = vmatprep.subr.mxu0 %v265
    %4075 = vmatpush1.msra.mxu0 %v264
    %4076 = vmatprep.subr.mxu0 %v269
    %4077 = vmatpush1.msra.mxu0 %v268
    %4078 = vmatprep.subr.mxu0 %v273
    %4079 = vmatpush1.msra.mxu0 %v272
    %4080 = vmatprep.subr.mxu0 %v277
    %4081 = vmatpush1.msra.mxu0 %v276
    %4082 = vmatprep.subr.mxu0 %v281
    %4083 = vmatpush1.msra.mxu0 %v280
    %4084 = vmatprep.subr.mxu0 %v285
    %4085 = vmatpush1.msra.mxu0 %v284
    %4086 = vmatprep.subr.mxu0 %v289
    %4087 = vmatpush1.msra.mxu0 %v288
    %4088 = vmatprep.subr.mxu0 %v293
    %4089 = vmatpush1.msra.mxu0 %v292
    %4090 = vmatprep.subr.mxu0 %v297
    %4091 = vmatpush1.msra.mxu0 %v296
    %4092 = vmatprep.subr.mxu0 %v301
    %4093 = vmatpush1.msra.mxu0 %v300
    %4094 = vmatprep.subr.mxu0 %v305
    %4095 = vmatpush1.msra.mxu0 %v304
    %4096 = vmatprep.subr.mxu0 %v309
    %4097 = vmatpush1.msra.mxu0 %v308
    %4098 = vmatprep.subr.mxu0 0.0
    %4099 = vmatpush1.msra.mxu0 0.0
    %4100 = vmatprep.subr.mxu0 0.0
    %4101 = vmatpush1.msra.mxu0 0.0
    %4102 = vmatprep.subr.mxu0 0.0
    %4103 = vmatpush1.msra.mxu0 0.0
    %4104 = vmatprep.subr.mxu0 0.0
    %4105 = vmatpush1.msra.mxu0 0.0
    %4106 = vmatprep.subr.mxu0 0.0
    %4107 = vmatpush1.msra.mxu0 0.0
    %4108 = vmatprep.subr.mxu0 0.0
    %4109 = vmatpush1.msra.mxu0 0.0
    %4110 = vmatprep.subr.mxu0 0.0
    %4111 = vmatpush1.msra.mxu0 0.0
    %4112 = vmatprep.subr.mxu0 0.0
    %4113 = vmatpush1.msra.mxu0 0.0
    %4114 = vmatprep.subr.mxu0 0.0
    %4115 = vmatpush1.msra.mxu0 0.0
    %4116 = vmatprep.subr.mxu0 0.0
    %4117 = vmatpush1.msra.mxu0 0.0
    %4118 = vmatprep.subr.mxu0 0.0
    %4119 = vmatpush1.msra.mxu0 0.0
    %4120 = vmatprep.subr.mxu0 0.0
    %4121 = vmatpush1.msra.mxu0 0.0
    %4122 = vmatprep.subr.mxu0 0.0
    %4123 = vmatpush1.msra.mxu0 0.0
    %4124 = vmatprep.subr.mxu0 0.0
    %4125 = vmatpush1.msra.mxu0 0.0
    %4126 = vmatprep.subr.mxu0 0.0
    %4127 = vmatpush1.msra.mxu0 0.0
    %4128 = vmatprep.subr.mxu0 0.0
    %4129 = vmatpush1.msra.mxu0 0.0
    %4130 = vmatprep.mubr.f32.mxu0 0.0
    %4131 = vmatmul.mubr.f32.gmra.mrb[0].mxu0 %v3994
    %v4132 = vpop.f32.mrb[0].mxu0
    %v4133 = vadd.f32 %v612, %v4132
    %v4134 = vpop.f32.mrb[0].mxu0
    %v4135 = vadd.f32 %v616, %v4134
    %4136 = vdwg.mxu0
    %4137 = vmatprep.subr.mxu0 %v119
    %4138 = vmatpush1.msra.mxu0 %v118
    %4139 = vmatprep.subr.mxu0 %v123
    %4140 = vmatpush1.msra.mxu0 %v122
    %4141 = vmatprep.subr.mxu0 %v127
    %4142 = vmatpush1.msra.mxu0 %v126
    %4143 = vmatprep.subr.mxu0 %v131
    %4144 = vmatpush1.msra.mxu0 %v130
    %4145 = vmatprep.subr.mxu0 %v135
    %4146 = vmatpush1.msra.mxu0 %v134
    %4147 = vmatprep.subr.mxu0 %v139
    %4148 = vmatpush1.msra.mxu0 %v138
    %4149 = vmatprep.subr.mxu0 %v143
    %4150 = vmatpush1.msra.mxu0 %v142
    %4151 = vmatprep.subr.mxu0 %v147
    %4152 = vmatpush1.msra.mxu0 %v146
    %4153 = vmatprep.subr.mxu0 %v151
    %4154 = vmatpush1.msra.mxu0 %v150
    %4155 = vmatprep.subr.mxu0 %v155
    %4156 = vmatpush1.msra.mxu0 %v154
    %4157 = vmatprep.subr.mxu0 %v159
    %4158 = vmatpush1.msra.mxu0 %v158
    %4159 = vmatprep.subr.mxu0 %v163
    %4160 = vmatpush1.msra.mxu0 %v162
    %4161 = vmatprep.subr.mxu0 %v167
    %4162 = vmatpush1.msra.mxu0 %v166
    %4163 = vmatprep.subr.mxu0 %v171
    %4164 = vmatpush1.msra.mxu0 %v170
    %4165 = vmatprep.subr.mxu0 %v175
    %4166 = vmatpush1.msra.mxu0 %v174
    %4167 = vmatprep.subr.mxu0 %v179
    %4168 = vmatpush1.msra.mxu0 %v178
    %4169 = vmatprep.subr.mxu0 0.0
    %4170 = vmatpush1.msra.mxu0 0.0
    %4171 = vmatprep.subr.mxu0 0.0
    %4172 = vmatpush1.msra.mxu0 0.0
    %4173 = vmatprep.subr.mxu0 0.0
    %4174 = vmatpush1.msra.mxu0 0.0
    %4175 = vmatprep.subr.mxu0 0.0
    %4176 = vmatpush1.msra.mxu0 0.0
    %4177 = vmatprep.subr.mxu0 0.0
    %4178 = vmatpush1.msra.mxu0 0.0
    %4179 = vmatprep.subr.mxu0 0.0
    %4180 = vmatpush1.msra.mxu0 0.0
    %4181 = vmatprep.subr.mxu0 0.0
    %4182 = vmatpush1.msra.mxu0 0.0
    %4183 = vmatprep.subr.mxu0 0.0
    %4184 = vmatpush1.msra.mxu0 0.0
    %4185 = vmatprep.subr.mxu0 0.0
    %4186 = vmatpush1.msra.mxu0 0.0
    %4187 = vmatprep.subr.mxu0 0.0
    %4188 = vmatpush1.msra.mxu0 0.0
    %4189 = vmatprep.subr.mxu0 0.0
    %4190 = vmatpush1.msra.mxu0 0.0
    %4191 = vmatprep.subr.mxu0 0.0
    %4192 = vmatpush1.msra.mxu0 0.0
    %4193 = vmatprep.subr.mxu0 0.0
    %4194 = vmatpush1.msra.mxu0 0.0
    %4195 = vmatprep.subr.mxu0 0.0
    %4196 = vmatpush1.msra.mxu0 0.0
    %4197 = vmatprep.subr.mxu0 0.0
    %4198 = vmatpush1.msra.mxu0 0.0
    %4199 = vmatprep.subr.mxu0 0.0
    %4200 = vmatpush1.msra.mxu0 0.0
    %4201 = vmatprep.mubr.f32.mxu0 0.0
    %4202 = vmatmul.mubr.f32.gmra.mrb[0].mxu0 %v3824
    %v4203 = vpop.f32.mrb[0].mxu0
    %v4204 = vadd.f32 0.0, %v4203
    %v4205 = vpop.f32.mrb[0].mxu0
    %v4206 = vadd.f32 0.0, %v4205
    %4207 = vdwg.mxu0
    %4208 = vmatprep.subr.mxu0 %v121
    %4209 = vmatpush1.msra.mxu0 %v120
    %4210 = vmatprep.subr.mxu0 %v125
    %4211 = vmatpush1.msra.mxu0 %v124
    %4212 = vmatprep.subr.mxu0 %v129
    %4213 = vmatpush1.msra.mxu0 %v128
    %4214 = vmatprep.subr.mxu0 %v133
    %4215 = vmatpush1.msra.mxu0 %v132
    %4216 = vmatprep.subr.mxu0 %v137
    %4217 = vmatpush1.msra.mxu0 %v136
    %4218 = vmatprep.subr.mxu0 %v141
    %4219 = vmatpush1.msra.mxu0 %v140
    %4220 = vmatprep.subr.mxu0 %v145
    %4221 = vmatpush1.msra.mxu0 %v144
    %4222 = vmatprep.subr.mxu0 %v149
    %4223 = vmatpush1.msra.mxu0 %v148
    %4224 = vmatprep.subr.mxu0 %v153
    %4225 = vmatpush1.msra.mxu0 %v152
    %4226 = vmatprep.subr.mxu0 %v157
    %4227 = vmatpush1.msra.mxu0 %v156
    %4228 = vmatprep.subr.mxu0 %v161
    %4229 = vmatpush1.msra.mxu0 %v160
    %4230 = vmatprep.subr.mxu0 %v165
    %4231 = vmatpush1.msra.mxu0 %v164
    %4232 = vmatprep.subr.mxu0 %v169
    %4233 = vmatpush1.msra.mxu0 %v168
    %4234 = vmatprep.subr.mxu0 %v173
    %4235 = vmatpush1.msra.mxu0 %v172
    %4236 = vmatprep.subr.mxu0 %v177
    %4237 = vmatpush1.msra.mxu0 %v176
    %4238 = vmatprep.subr.mxu0 %v181
    %4239 = vmatpush1.msra.mxu0 %v180
    %4240 = vmatprep.subr.mxu0 0.0
    %4241 = vmatpush1.msra.mxu0 0.0
    %4242 = vmatprep.subr.mxu0 0.0
    %4243 = vmatpush1.msra.mxu0 0.0
    %4244 = vmatprep.subr.mxu0 0.0
    %4245 = vmatpush1.msra.mxu0 0.0
    %4246 = vmatprep.subr.mxu0 0.0
    %4247 = vmatpush1.msra.mxu0 0.0
    %4248 = vmatprep.subr.mxu0 0.0
    %4249 = vmatpush1.msra.mxu0 0.0
    %4250 = vmatprep.subr.mxu0 0.0
    %4251 = vmatpush1.msra.mxu0 0.0
    %4252 = vmatprep.subr.mxu0 0.0
    %4253 = vmatpush1.msra.mxu0 0.0
    %4254 = vmatprep.subr.mxu0 0.0
    %4255 = vmatpush1.msra.mxu0 0.0
    %4256 = vmatprep.subr.mxu0 0.0
    %4257 = vmatpush1.msra.mxu0 0.0
    %4258 = vmatprep.subr.mxu0 0.0
    %4259 = vmatpush1.msra.mxu0 0.0
    %4260 = vmatprep.subr.mxu0 0.0
    %4261 = vmatpush1.msra.mxu0 0.0
    %4262 = vmatprep.subr.mxu0 0.0
    %4263 = vmatpush1.msra.mxu0 0.0
    %4264 = vmatprep.subr.mxu0 0.0
    %4265 = vmatpush1.msra.mxu0 0.0
    %4266 = vmatprep.subr.mxu0 0.0
    %4267 = vmatpush1.msra.mxu0 0.0
    %4268 = vmatprep.subr.mxu0 0.0
    %4269 = vmatpush1.msra.mxu0 0.0
    %4270 = vmatprep.subr.mxu0 0.0
    %4271 = vmatpush1.msra.mxu0 0.0
    %4272 = vmatprep.mubr.f32.mxu0 0.0
    %4273 = vmatmul.mubr.f32.gmra.mrb[0].mxu0 %v3824
    %v4274 = vpop.f32.mrb[0].mxu0
    %v4275 = vadd.f32 0.0, %v4274
    %v4276 = vpop.f32.mrb[0].mxu0
    %v4277 = vadd.f32 0.0, %v4276
    %4278 = vdwg.mxu0
    %v4279 = vadd.f32 %v482, %v4204
    %v4280 = vadd.f32 %v484, %v4206
    %v4281 = vadd.f32 %v595, %v4275
    %v4282 = vadd.f32 %v597, %v4277
    %v4283 = vxor.u32 %v4279, 2147483648
    %v4284 = vxor.u32 %v4280, 2147483648
    %v4285 = vxor.u32 %v4282, 2147483648
    %v4286 = vmul.f32 %v4283, 1.442695
    %v4287 = vpow.pop %v4286
    %v4288 = vmul.f32 %v4284, 1.442695
    %v4289 = vpow.pop %v4288
    %v4290 = vmul.f32 %v4285, 1.442695
    %v4291 = vpow.pop %v4290
    %v4292 = vadd.f32 %v4287, 1.0
    %v4293 = vadd.f32 %v4289, 1.0
    %v4294 = vadd.f32 %v4291, 1.0
    %v4295 = vrcp.pop %v4292
    %v4296 = vmul.f32 1.0, %v4295
    %v4297 = vrcp.pop %v4293
    %v4298 = vmul.f32 1.0, %v4297
    %v4299 = vrcp.pop %v4294
    %v4300 = vmul.f32 1.0, %v4299
    %v4301 = vtanh.pop %v4281
    %v4302 = vmul.f32 %v4298, %v3822
    %v4303 = vmul.f32 %v4296, %v4301
    %v4304 = vadd.f32 %v4302, %v4303
    %v4305 = vtanh.pop %v4304
    %v4306 = vmul.f32 %v4300, %v4305
    %4307 = vmatprep.subr.mxu0 %v183
    %4308 = vmatpush1.msra.mxu0 %v182
    %4309 = vmatprep.subr.mxu0 %v187
    %4310 = vmatpush1.msra.mxu0 %v186
    %4311 = vmatprep.subr.mxu0 %v191
    %4312 = vmatpush1.msra.mxu0 %v190
    %4313 = vmatprep.subr.mxu0 %v195
    %4314 = vmatpush1.msra.mxu0 %v194
    %4315 = vmatprep.subr.mxu0 %v199
    %4316 = vmatpush1.msra.mxu0 %v198
    %4317 = vmatprep.subr.mxu0 %v203
    %4318 = vmatpush1.msra.mxu0 %v202
    %4319 = vmatprep.subr.mxu0 %v207
    %4320 = vmatpush1.msra.mxu0 %v206
    %4321 = vmatprep.subr.mxu0 %v211
    %4322 = vmatpush1.msra.mxu0 %v210
    %4323 = vmatprep.subr.mxu0 %v215
    %4324 = vmatpush1.msra.mxu0 %v214
    %4325 = vmatprep.subr.mxu0 %v219
    %4326 = vmatpush1.msra.mxu0 %v218
    %4327 = vmatprep.subr.mxu0 %v223
    %4328 = vmatpush1.msra.mxu0 %v222
    %4329 = vmatprep.subr.mxu0 %v227
    %4330 = vmatpush1.msra.mxu0 %v226
    %4331 = vmatprep.subr.mxu0 %v231
    %4332 = vmatpush1.msra.mxu0 %v230
    %4333 = vmatprep.subr.mxu0 %v235
    %4334 = vmatpush1.msra.mxu0 %v234
    %4335 = vmatprep.subr.mxu0 %v239
    %4336 = vmatpush1.msra.mxu0 %v238
    %4337 = vmatprep.subr.mxu0 %v243
    %4338 = vmatpush1.msra.mxu0 %v242
    %4339 = vmatprep.subr.mxu0 0.0
    %4340 = vmatpush1.msra.mxu0 0.0
    %4341 = vmatprep.subr.mxu0 0.0
    %4342 = vmatpush1.msra.mxu0 0.0
    %4343 = vmatprep.subr.mxu0 0.0
    %4344 = vmatpush1.msra.mxu0 0.0
    %4345 = vmatprep.subr.mxu0 0.0
    %4346 = vmatpush1.msra.mxu0 0.0
    %4347 = vmatprep.subr.mxu0 0.0
    %4348 = vmatpush1.msra.mxu0 0.0
    %4349 = vmatprep.subr.mxu0 0.0
    %4350 = vmatpush1.msra.mxu0 0.0
    %4351 = vmatprep.subr.mxu0 0.0
    %4352 = vmatpush1.msra.mxu0 0.0
    %4353 = vmatprep.subr.mxu0 0.0
    %4354 = vmatpush1.msra.mxu0 0.0
    %4355 = vmatprep.subr.mxu0 0.0
    %4356 = vmatpush1.msra.mxu0 0.0
    %4357 = vmatprep.subr.mxu0 0.0
    %4358 = vmatpush1.msra.mxu0 0.0
    %4359 = vmatprep.subr.mxu0 0.0
    %4360 = vmatpush1.msra.mxu0 0.0
    %4361 = vmatprep.subr.mxu0 0.0
    %4362 = vmatpush1.msra.mxu0 0.0
    %4363 = vmatprep.subr.mxu0 0.0
    %4364 = vmatpush1.msra.mxu0 0.0
    %4365 = vmatprep.subr.mxu0 0.0
    %4366 = vmatpush1.msra.mxu0 0.0
    %4367 = vmatprep.subr.mxu0 0.0
    %4368 = vmatpush1.msra.mxu0 0.0
    %4369 = vmatprep.subr.mxu0 0.0
    %4370 = vmatpush1.msra.mxu0 0.0
    %4371 = vmatprep.mubr.f32.mxu0 0.0
    %4372 = vmatmul.mubr.f32.gmra.mrb[0].mxu0 %v4306
    %v4373 = vpop.f32.mrb[0].mxu0
    %v4374 = vadd.f32 0.0, %v4373
    %v4375 = vpop.f32.mrb[0].mxu0
    %v4376 = vadd.f32 0.0, %v4375
    %4377 = vdwg.mxu0
    %4378 = vmatprep.subr.mxu0 %v185
    %4379 = vmatpush1.msra.mxu0 %v184
    %4380 = vmatprep.subr.mxu0 %v189
    %4381 = vmatpush1.msra.mxu0 %v188
    %4382 = vmatprep.subr.mxu0 %v193
    %4383 = vmatpush1.msra.mxu0 %v192
    %4384 = vmatprep.subr.mxu0 %v197
    %4385 = vmatpush1.msra.mxu0 %v196
    %4386 = vmatprep.subr.mxu0 %v201
    %4387 = vmatpush1.msra.mxu0 %v200
    %4388 = vmatprep.subr.mxu0 %v205
    %4389 = vmatpush1.msra.mxu0 %v204
    %4390 = vmatprep.subr.mxu0 %v209
    %4391 = vmatpush1.msra.mxu0 %v208
    %4392 = vmatprep.subr.mxu0 %v213
    %4393 = vmatpush1.msra.mxu0 %v212
    %4394 = vmatprep.subr.mxu0 %v217
    %4395 = vmatpush1.msra.mxu0 %v216
    %4396 = vmatprep.subr.mxu0 %v221
    %4397 = vmatpush1.msra.mxu0 %v220
    %4398 = vmatprep.subr.mxu0 %v225
    %4399 = vmatpush1.msra.mxu0 %v224
    %4400 = vmatprep.subr.mxu0 %v229
    %4401 = vmatpush1.msra.mxu0 %v228
    %4402 = vmatprep.subr.mxu0 %v233
    %4403 = vmatpush1.msra.mxu0 %v232
    %4404 = vmatprep.subr.mxu0 %v237
    %4405 = vmatpush1.msra.mxu0 %v236
    %4406 = vmatprep.subr.mxu0 %v241
    %4407 = vmatpush1.msra.mxu0 %v240
    %4408 = vmatprep.subr.mxu0 %v245
    %4409 = vmatpush1.msra.mxu0 %v244
    %4410 = vmatprep.subr.mxu0 0.0
    %4411 = vmatpush1.msra.mxu0 0.0
    %4412 = vmatprep.subr.mxu0 0.0
    %4413 = vmatpush1.msra.mxu0 0.0
    %4414 = vmatprep.subr.mxu0 0.0
    %4415 = vmatpush1.msra.mxu0 0.0
    %4416 = vmatprep.subr.mxu0 0.0
    %4417 = vmatpush1.msra.mxu0 0.0
    %4418 = vmatprep.subr.mxu0 0.0
    %4419 = vmatpush1.msra.mxu0 0.0
    %4420 = vmatprep.subr.mxu0 0.0
    %4421 = vmatpush1.msra.mxu0 0.0
    %4422 = vmatprep.subr.mxu0 0.0
    %4423 = vmatpush1.msra.mxu0 0.0
    %4424 = vmatprep.subr.mxu0 0.0
    %4425 = vmatpush1.msra.mxu0 0.0
    %4426 = vmatprep.subr.mxu0 0.0
    %4427 = vmatpush1.msra.mxu0 0.0
    %4428 = vmatprep.subr.mxu0 0.0
    %4429 = vmatpush1.msra.mxu0 0.0
    %4430 = vmatprep.subr.mxu0 0.0
    %4431 = vmatpush1.msra.mxu0 0.0
    %4432 = vmatprep.subr.mxu0 0.0
    %4433 = vmatpush1.msra.mxu0 0.0
    %4434 = vmatprep.subr.mxu0 0.0
    %4435 = vmatpush1.msra.mxu0 0.0
    %4436 = vmatprep.subr.mxu0 0.0
    %4437 = vmatpush1.msra.mxu0 0.0
    %4438 = vmatprep.subr.mxu0 0.0
    %4439 = vmatpush1.msra.mxu0 0.0
    %4440 = vmatprep.subr.mxu0 0.0
    %4441 = vmatpush1.msra.mxu0 0.0
    %4442 = vmatprep.mubr.f32.mxu0 0.0
    %4443 = vmatmul.mubr.f32.gmra.mrb[0].mxu0 %v4306
    %v4444 = vpop.f32.mrb[0].mxu0
    %v4445 = vadd.f32 0.0, %v4444
    %v4446 = vpop.f32.mrb[0].mxu0
    %v4447 = vadd.f32 0.0, %v4446
    %4448 = vdwg.mxu0
    %v4449 = vadd.f32 %v4062, %v4374
    %v4450 = vadd.f32 %v4064, %v4376
    %v4451 = vadd.f32 %v4133, %v4445
    %v4452 = vadd.f32 %v4135, %v4447
    %v4453 = vxor.u32 %v4449, 2147483648
    %v4454 = vxor.u32 %v4450, 2147483648
    %v4455 = vxor.u32 %v4452, 2147483648
    %v4456 = vmul.f32 %v4453, 1.442695
    %v4457 = vpow.pop %v4456
    %v4458 = vmul.f32 %v4454, 1.442695
    %v4459 = vpow.pop %v4458
    %v4460 = vmul.f32 %v4455, 1.442695
    %v4461 = vpow.pop %v4460
    %v4462 = vadd.f32 %v4457, 1.0
    %v4463 = vadd.f32 %v4459, 1.0
    %v4464 = vadd.f32 %v4461, 1.0
    %v4465 = vrcp.pop %v4462
    %v4466 = vmul.f32 1.0, %v4465
    %v4467 = vrcp.pop %v4463
    %v4468 = vmul.f32 1.0, %v4467
    %v4469 = vrcp.pop %v4464
    %v4470 = vmul.f32 1.0, %v4469
    %v4471 = vtanh.pop %v4451
    %v4472 = vmul.f32 %v4468, %v3992
    %v4473 = vmul.f32 %v4466, %v4471
    %v4474 = vadd.f32 %v4472, %v4473
    %v4475 = vtanh.pop %v4474
    %v4476 = vmul.f32 %v4470, %v4475
    %4477 = vst [vmem:[#allocation14] sm:$0xff] %v4476
    // Predicated region
    $region58: #{tpu_custom_call.1} parent=1 // pred_check
      _
    $region59: #{tpu_custom_call.1} parent=1 // pred_check_branch
      %4479 = sbr.rel (0) target = $region61
    $region60: #{tpu_custom_call.1} parent=1 // pred_region
      %s4481 = ssub.s32 128, 128
      %4482 = vsyncadd [#allocation4], %s4481
      %s4484 = sshll.u32 [#allocation14], 4
      %s4485 = int_to_ptr.vmem [resolvable:$true] %s4484
      %4487 = dma.vmem_to_hbm [thread:$0]  %s4485, 128, %s7, [#allocation4]
    $region61: #{tpu_custom_call.1} parent=1 // pred_fallthru
      _
    // Predicated region
    $region62: #{tpu_custom_call.1} parent=1 // pred_check
      _
    $region63: #{tpu_custom_call.1} parent=1 // pred_check_branch
      %4489 = sbr.rel (0) target = $region65
    $region64: #{tpu_custom_call.1} parent=1 // pred_region
      %4490 = dma.done [#allocation4], 128
    $region65: #{tpu_custom_call.1} parent=1 // pred_fallthru
      _
    %4491 = vsyncpa [#allocation3], 1
    %4492 = vsyncpa [#allocation6], 1
    %4493 = vsyncpa [#allocation9], 1
    %4494 = vsyncpa [#allocation12], 1
    %4495 = vsyncpa [#allocation4], 1

</llo_original>
